<compile_context>
chip_gen: v7x
topology: tpu7x:2x2x1
jax: 0.10.0
libtpu: 0.0.40
codegen_flags: <defaults>
</compile_context>

<pallas_src>
import math

import jax
import jax.numpy as jnp
from jax.experimental import pallas as pl
from jax.experimental.pallas import tpu as pltpu


# ---------------------------------------------------------------------------
# Kernel: one grid step = (one block of batch elements) x (one head).
# Grid = (b_s // block_b, h), head axis innermost ("arbitrary" reduction axis).
# ---------------------------------------------------------------------------
def _rpe_head_kernel(q_ref, k_ref, v_ref, aw_ref,
                     wq_ref, bq_ref, wk_ref, bk_ref, wv_ref, bv_ref,
                     wgq_ref, bgq_ref, wo_ref, bo_ref,
                     out_ref, acc_ref):
    f32, bf16 = jnp.float32, jnp.bfloat16
    hh = pl.program_id(1)                    # head index (inner grid axis)
    bb, nq, nk, d_k = aw_ref.shape           # aw block: (block_b, nq, nk, d_k)
    d_v = wv_ref.shape[1]

    @pl.when(hh == 0)
    def _init():
        acc_ref[...] = jnp.zeros_like(acc_ref)

    xq = q_ref[...]                          # (bb*nq, d_model) bf16
    xk = k_ref[...]                          # (bb*nk, d_model) bf16
    xv = v_ref[...]                          # (bb*nk, d_model) bf16

    # This head's projections (per-head weight slices arrive via BlockSpec).
    # The 1/sqrt(d_k) attention scale is pre-folded into wq/bq host-side.
    qh = jnp.dot(xq, wq_ref[...], preferred_element_type=f32) + bq_ref[...]
    gq = jnp.dot(xq, wgq_ref[...], preferred_element_type=f32) + bgq_ref[...]
    kh = jnp.dot(xk, wk_ref[...], preferred_element_type=f32) + bk_ref[...]
    vh = jnp.dot(xv, wv_ref[...], preferred_element_type=f32) + bv_ref[...]

    qh3 = qh.reshape(bb, nq, d_k).astype(bf16)
    kh3 = kh.reshape(bb, nk, d_k).astype(bf16)
    vh3 = vh.reshape(bb, nk, d_v).astype(bf16)

    # Scaled logits, batched over the packed batch dim (scale pre-folded).
    s = jnp.einsum('bqd,bkd->bqk', qh3, kh3, preferred_element_type=f32)

    # Geometric (relative-position) bias:
    #   bias[b,q,k] = sum_d attention_weights[b,h,q,k,d] * gq[b,h,q,d]
    # attention_weights arrives in its native (..., nk, d_k) layout as bf16;
    # the d_k reduction is over the lane axis (XLU), no host permute needed.
    # TODO(synk): on v6e/v7x the multiply could run packed-bf16 on the VPU.
    gq3 = gq.reshape(bb, nq, d_k)
    bias = jnp.sum(aw_ref[...].astype(f32) * gq3[:, :, None, :], axis=-1)
    s = s + bias

    # TODO(synk): attention_mask (masked_fill with -1e9) branch not
    # implemented — this matches forward(..., attention_mask=None).

    # Numerically-stable softmax over keys; denominator via EUP approx recip.
    m = jnp.max(s, axis=-1, keepdims=True)
    e = jnp.exp(s - m)
    p = e * pl.reciprocal(jnp.sum(e, axis=-1, keepdims=True), approx=True)

    pv = jnp.einsum('bqk,bkv->bqv', p.astype(bf16), vh3,
                    preferred_element_type=f32)            # (bb, nq, d_v)

    # Fold this head's block-row of W_o straight into the VMEM accumulator.
    acc_ref[...] += jnp.dot(pv.reshape(bb * nq, d_v).astype(bf16), wo_ref[...],
                            preferred_element_type=f32)

    @pl.when(hh == pl.num_programs(1) - 1)
    def _finalize():
        out_ref[...] = (acc_ref[...] + bo_ref[...]).astype(out_ref.dtype)


# ---------------------------------------------------------------------------
# VMEM-aware batch-block selection.
# ---------------------------------------------------------------------------
def _round_up(x, m):
    return ((x + m - 1) // m) * m


def _vmem_step_bytes(block_b, nq, nk, d_k, d_v, d_model):
    """Rough per-step VMEM footprint: double-buffered pipeline blocks plus the
    single-buffered accumulator, with the lane dim padded to 128."""
    lane = lambda n: _round_up(n, 128)
    sub = lambda n: _round_up(n, 16)
    bf, f4 = 2, 4
    aw_blk = block_b * nq * sub(nk) * lane(d_k) * bf         # one head's aw slab
    q_blk = sub(block_b * nq) * lane(d_model) * bf
    kv_blk = 2 * sub(block_b * nk) * lane(d_model) * bf
    out_blk = sub(block_b * nq) * lane(d_model) * f4
    w_blk = (3 * sub(d_model) * lane(d_k) + sub(d_model) * lane(d_v)
             + sub(d_v) * lane(d_model)) * bf                 # wq/wk/wgq/wv/wo
    b_blk = 5 * 16 * lane(max(d_k, d_v, d_model)) * f4        # biases (padded)
    acc = sub(block_b * nq) * lane(d_model) * f4              # scratch (single)
    return 2 * (aw_blk + q_blk + kv_blk + out_blk + w_blk + b_blk) + acc


def _pick_block_b(b_s, nq, nk, d_k, d_v, d_model, *, vmem_budget_bytes=24 << 20):
    divisors = [d for d in range(1, b_s + 1) if b_s % d == 0]
    fits = [d for d in divisors
            if _vmem_step_bytes(d, nq, nk, d_k, d_v, d_model) <= vmem_budget_bytes]
    if not fits:
        return 1
    # Prefer >=2 batch grid steps so the "parallel" axis can feed both v7x TCs.
    multi = [d for d in fits if b_s // d >= 2]
    pool = multi if multi else fits
    aligned = [d for d in pool if (d * nq) % 8 == 0 and (d * nk) % 8 == 0]
    pool = aligned if aligned else pool
    return max(pool)


# ---------------------------------------------------------------------------
# Host wrapper.
# ---------------------------------------------------------------------------
def rpe_attention(queries, keys, values, attention_weights, params,
                  *, h, d_k, d_v, block_b=None):
    b_s, nq, d_model = queries.shape
    nk = keys.shape[1]
    wq, bq, wk, bk, wv, bv, wgq, bgq, wo, bo = params

    bf16, f32 = jnp.bfloat16, jnp.float32

    # Batch/seq packed, bf16 MXU operands (f32 accumulation happens in-kernel).
    q_in = queries.reshape(b_s * nq, d_model).astype(bf16)
    k_in = keys.reshape(b_s * nk, d_model).astype(bf16)
    v_in = values.reshape(b_s * nk, d_model).astype(bf16)

    # attention_weights: native (b_s, h, nq, nk, d_k) layout, bf16 on the wire —
    # no host-side permute (extra HBM pass) and half the DMA bytes.
    aw = attention_weights.astype(bf16)

    # Per-head weight/bias slabs so each head grid step DMAs only its slice.
    scale = 1.0 / math.sqrt(d_k)

    def per_head_w(w, n):    # (d_model, h*n) -> (h, d_model, n)
        return jnp.transpose(w.reshape(d_model, h, n), (1, 0, 2))

    def per_head_b(b, n):    # (1, h*n) -> (h, 1, n)
        return jnp.transpose(b.reshape(1, h, n), (1, 0, 2))

    wq_h = per_head_w(wq * scale, d_k).astype(bf16)
    bq_h = per_head_b(bq * scale, d_k).astype(f32)
    wk_h = per_head_w(wk, d_k).astype(bf16)
    bk_h = per_head_b(bk, d_k).astype(f32)
    wv_h = per_head_w(wv, d_v).astype(bf16)
    bv_h = per_head_b(bv, d_v).astype(f32)
    wgq_h = per_head_w(wgq, d_k).astype(bf16)
    bgq_h = per_head_b(bgq, d_k).astype(f32)
    wo_h = wo.reshape(h, d_v, d_model).astype(bf16)
    bo_f = bo.astype(f32)                                   # (1, d_model)

    if block_b is None:
        block_b = _pick_block_b(b_s, nq, nk, d_k, d_v, d_model)
    assert b_s % block_b == 0

    grid = (b_s // block_b, h)

    # Constant-index specs (q/k/v/out across the head axis) stay VMEM-resident;
    # per-head specs (aw, weights) stream head-by-head.
    in_specs = [
        pl.BlockSpec((block_b * nq, d_model), lambda b, hh: (b, 0)),     # queries
        pl.BlockSpec((block_b * nk, d_model), lambda b, hh: (b, 0)),     # keys
        pl.BlockSpec((block_b * nk, d_model), lambda b, hh: (b, 0)),     # values
        pl.BlockSpec((block_b, None, nq, nk, d_k),
                     lambda b, hh: (b, hh, 0, 0, 0)),                    # RPE weights
        pl.BlockSpec((None, d_model, d_k), lambda b, hh: (hh, 0, 0)),    # wq (scaled)
        pl.BlockSpec((None, 1, d_k), lambda b, hh: (hh, 0, 0)),          # bq (scaled)
        pl.BlockSpec((None, d_model, d_k), lambda b, hh: (hh, 0, 0)),    # wk
        pl.BlockSpec((None, 1, d_k), lambda b, hh: (hh, 0, 0)),          # bk
        pl.BlockSpec((None, d_model, d_v), lambda b, hh: (hh, 0, 0)),    # wv
        pl.BlockSpec((None, 1, d_v), lambda b, hh: (hh, 0, 0)),          # bv
        pl.BlockSpec((None, d_model, d_k), lambda b, hh: (hh, 0, 0)),    # wgq
        pl.BlockSpec((None, 1, d_k), lambda b, hh: (hh, 0, 0)),          # bgq
        pl.BlockSpec((None, d_v, d_model), lambda b, hh: (hh, 0, 0)),    # wo
        pl.BlockSpec((1, d_model), lambda b, hh: (0, 0)),                # bo
    ]
    out_spec = pl.BlockSpec((block_b * nq, d_model), lambda b, hh: (b, 0))

    # Advisory cost estimate (bytes dominated by attention_weights).
    flops = 2 * (2 * b_s * nq * d_model * h * d_k       # q, gq projections
                 + b_s * nk * d_model * h * d_k          # k projection
                 + b_s * nk * d_model * h * d_v          # v projection
                 + 2 * b_s * h * nq * nk * d_k           # logits + geometric bias
                 + b_s * h * nq * nk * d_v               # att @ v
                 + b_s * nq * h * d_v * d_model)         # output projection
    bytes_accessed = int(q_in.size * 2 + k_in.size * 2 + v_in.size * 2
                         + aw.size * 2
                         + (wq.size + wk.size + wv.size + wgq.size + wo.size) * 2
                         + b_s * nq * d_model * 4)
    cost = pl.CostEstimate(flops=int(flops),
                           transcendentals=int(b_s * h * nq * nk),
                           bytes_accessed=bytes_accessed)

    out_flat = pl.pallas_call(
        _rpe_head_kernel,
        out_shape=jax.ShapeDtypeStruct((b_s * nq, d_model), jnp.float32),
        grid_spec=pltpu.PrefetchScalarGridSpec(
            num_scalar_prefetch=0,
            grid=grid,
            in_specs=in_specs,
            out_specs=out_spec,
            scratch_shapes=[pltpu.VMEM((block_b * nq, d_model), jnp.float32)],
        ),
        compiler_params=pltpu.CompilerParams(
            dimension_semantics=("parallel", "arbitrary"),
            # 48 MiB is safe on every generation (v7x has 64 MiB physical) and
            # above the 16/32 MiB scoped defaults on v5e/v6e.
            vmem_limit_bytes=48 << 20),
        cost_estimate=cost,
    )(q_in, k_in, v_in, aw,
      wq_h, bq_h, wk_h, bk_h, wv_h, bv_h, wgq_h, bgq_h, wo_h, bo_f)

    return out_flat.reshape(b_s, nq, d_model)


# ---------------------------------------------------------------------------
# Parameter init (matches the PyTorch module) and pure-JAX reference.
# ---------------------------------------------------------------------------
def xavier_uniform(key, in_features, out_features):
    """torch.nn.init.xavier_uniform_ on a (out, in) Linear weight, returned
    pre-transposed as (in, out) so the kernel computes x @ W."""
    bound = math.sqrt(6.0 / (in_features + out_features))
    return jax.random.uniform(key, (in_features, out_features),
                              dtype=jnp.float32, minval=-bound, maxval=bound)


def init_params(key, d_model, d_k, d_v, h):
    kq, kk, kv, kg, ko = jax.random.split(key, 5)
    wq = xavier_uniform(kq, d_model, h * d_k)
    wk = xavier_uniform(kk, d_model, h * d_k)
    wv = xavier_uniform(kv, d_model, h * d_v)
    wgq = xavier_uniform(kg, d_model, h * d_k)
    wo = xavier_uniform(ko, h * d_v, d_model)
    z = lambda n: jnp.zeros((1, n), jnp.float32)   # biases init to 0 (as in module)
    return (wq, z(h * d_k), wk, z(h * d_k), wv, z(h * d_v),
            wgq, z(h * d_k), wo, z(d_model))


def reference(queries, keys, values, attention_weights, params, *, h, d_k, d_v):
    """Pure-JAX f32 reference mirroring the PyTorch forward (attention_mask=None)."""
    wq, bq, wk, bk, wv, bv, wgq, bgq, wo, bo = params
    b_s, nq, _ = queries.shape
    nk = keys.shape[1]
    q = jnp.transpose((queries @ wq + bq).reshape(b_s, nq, h, d_k), (0, 2, 1, 3))
    k = jnp.transpose((keys @ wk + bk).reshape(b_s, nk, h, d_k), (0, 2, 3, 1))
    v = jnp.transpose((values @ wv + bv).reshape(b_s, nk, h, d_v), (0, 2, 1, 3))
    att = jnp.matmul(q, k) / math.sqrt(d_k)
    gq = jnp.transpose((queries @ wgq + bgq).reshape(b_s, nq, h, d_k),
                       (0, 2, 1, 3))[..., None]
    geometric_bias = jnp.matmul(attention_weights, gq)[..., 0]
    att = jax.nn.softmax(att + geometric_bias, axis=-1)
    out = jnp.transpose(jnp.matmul(att, v), (0, 2, 1, 3)).reshape(b_s, nq, h * d_v)
    return out @ wo + bo


if __name__ == "__main__":
    # Small shapes; d_model a multiple of 128 keeps the output store lane-dense.
    d_model, d_k, d_v, h = 128, 32, 32, 4
    b_s, nq, nk = 8, 16, 16

    key = jax.random.PRNGKey(0)
    kp, k1, k2, k3, k4 = jax.random.split(key, 5)
    params = init_params(kp, d_model, d_k, d_v, h)

    queries = jax.random.normal(k1, (b_s, nq, d_model), jnp.float32)
    keys = jax.random.normal(k2, (b_s, nk, d_model), jnp.float32)
    values = jax.random.normal(k3, (b_s, nk, d_model), jnp.float32)
    # RPE / geometric attention weights: (b_s, h, nq, nk, d_k), as required by
    # torch.matmul(attention_weights, gq.unsqueeze(-1)) in the module's forward.
    attention_weights = jax.random.normal(k4, (b_s, h, nq, nk, d_k), jnp.float32)

    out = rpe_attention(queries, keys, values, attention_weights, params,
                        h=h, d_k=d_k, d_v=d_v)
    jax.block_until_ready(out)

    out_ref = reference(queries, keys, values, attention_weights, params,
                        h=h, d_k=d_k, d_v=d_v)

    # bf16 MXU operands, bf16 attention_weights and approx-reciprocal softmax
    # => tolerance re-baselined against the pure-f32 reference.
    err = float(jnp.max(jnp.abs(out - out_ref)))
    ref_mag = float(jnp.max(jnp.abs(out_ref)))
    assert err <= 6e-2 * ref_mag + 1.5e-1, (err, ref_mag)

    print("KERNEL_OK")
</pallas_src>

<mosaic_0001>
module attributes {stable_mosaic.version = 11 : i64} {
  func.func @_rpe_head_kernel(%arg0: i32, %arg1: i32, %arg2: memref<64x128xbf16, #tpu.memory_space<vmem>>, %arg3: memref<64x128xbf16, #tpu.memory_space<vmem>>, %arg4: memref<64x128xbf16, #tpu.memory_space<vmem>>, %arg5: memref<4x1x16x16x32xbf16, #tpu.memory_space<vmem>>, %arg6: memref<1x128x32xbf16, #tpu.memory_space<vmem>>, %arg7: memref<1x1x32xf32, #tpu.memory_space<vmem>>, %arg8: memref<1x128x32xbf16, #tpu.memory_space<vmem>>, %arg9: memref<1x1x32xf32, #tpu.memory_space<vmem>>, %arg10: memref<1x128x32xbf16, #tpu.memory_space<vmem>>, %arg11: memref<1x1x32xf32, #tpu.memory_space<vmem>>, %arg12: memref<1x128x32xbf16, #tpu.memory_space<vmem>>, %arg13: memref<1x1x32xf32, #tpu.memory_space<vmem>>, %arg14: memref<1x32x128xbf16, #tpu.memory_space<vmem>>, %arg15: memref<1x128xf32, #tpu.memory_space<vmem>>, %arg16: memref<64x128xf32, #tpu.memory_space<vmem>>, %arg17: memref<64x128xf32, #tpu.memory_space<vmem>>) attributes {dimension_semantics = [#tpu.dimension_semantics<parallel>, #tpu.dimension_semantics<arbitrary>], iteration_bounds = array<i64: 2, 4>, scalar_prefetch = 0 : i64, scratch_operands = 1 : i64, tpu.core_type = #tpu.core_type<tc>, window_params = [{transform_indices = @transform_0, window_bounds = array<i64: 64, 128>}, {transform_indices = @transform_1, window_bounds = array<i64: 64, 128>}, {transform_indices = @transform_2, window_bounds = array<i64: 64, 128>}, {transform_indices = @transform_3, window_bounds = array<i64: 4, 1, 16, 16, 32>}, {transform_indices = @transform_4, window_bounds = array<i64: 1, 128, 32>}, {transform_indices = @transform_5, window_bounds = array<i64: 1, 1, 32>}, {transform_indices = @transform_6, window_bounds = array<i64: 1, 128, 32>}, {transform_indices = @transform_7, window_bounds = array<i64: 1, 1, 32>}, {transform_indices = @transform_8, window_bounds = array<i64: 1, 128, 32>}, {transform_indices = @transform_9, window_bounds = array<i64: 1, 1, 32>}, {transform_indices = @transform_10, window_bounds = array<i64: 1, 128, 32>}, {transform_indices = @transform_11, window_bounds = array<i64: 1, 1, 32>}, {transform_indices = @transform_12, window_bounds = array<i64: 1, 32, 128>}, {pipeline_mode = #tpu.pipeline_mode<synchronous>, transform_indices = @transform_13, window_bounds = array<i64: 1, 128>}, {transform_indices = @transform_14, window_bounds = array<i64: 64, 128>}]} {
    %c0_i32 = arith.constant 0 : i32
    %0 = arith.cmpi eq, %arg1, %c0_i32 : i32
    %1 = arith.extui %0 : i1 to i32
    %c0_i32_0 = arith.constant 0 : i32
    %2 = arith.cmpi ne, %1, %c0_i32_0 : i32
    scf.if %2 {
      %cst_52 = arith.constant 0.000000e+00 : f32
      %73 = vector.broadcast %cst_52 : f32 to vector<64x128xf32>
      %c0_53 = arith.constant 0 : index
      %c0_54 = arith.constant 0 : index
      %74 = vector.load %arg17[%c0_53, %c0_54] : memref<64x128xf32, #tpu.memory_space<vmem>>, vector<64x128xf32>
      tpu.vector_store %arg17[%c0_53, %c0_54], %73 {strides = array<i32>} : memref<64x128xf32, #tpu.memory_space<vmem>>, vector<64x128xf32>,
    } else {
    }
    %c0 = arith.constant 0 : index
    %c0_1 = arith.constant 0 : index
    %3 = vector.load %arg2[%c0, %c0_1] : memref<64x128xbf16, #tpu.memory_space<vmem>>, vector<64x128xbf16>
    %c0_2 = arith.constant 0 : index
    %c0_3 = arith.constant 0 : index
    %4 = vector.load %arg3[%c0_2, %c0_3] : memref<64x128xbf16, #tpu.memory_space<vmem>>, vector<64x128xbf16>
    %c0_4 = arith.constant 0 : index
    %c0_5 = arith.constant 0 : index
    %5 = vector.load %arg4[%c0_4, %c0_5] : memref<64x128xbf16, #tpu.memory_space<vmem>>, vector<64x128xbf16>
    %c0_6 = arith.constant 0 : index
    %c0_7 = arith.constant 0 : index
    %c0_8 = arith.constant 0 : index
    %6 = vector.load %arg6[%c0_6, %c0_7, %c0_8] : memref<1x128x32xbf16, #tpu.memory_space<vmem>>, vector<1x128x32xbf16>
    %7 = vector.shape_cast %6 : vector<1x128x32xbf16> to vector<128x32xbf16>
    %cst = arith.constant dense<0.000000e+00> : vector<64x32xf32>
    %8 = tpu.matmul %3, %7, %cst {dimension_numbers = #tpu.dot_dimension_numbers<[1], [0], [0], [1], [0, 0, 1, 1], [], []>} : vector<64x128xbf16>, vector<128x32xbf16>, vector<64x32xf32> -> vector<64x32xf32>
    %c0_9 = arith.constant 0 : index
    %c0_10 = arith.constant 0 : index
    %c0_11 = arith.constant 0 : index
    %9 = vector.load %arg7[%c0_9, %c0_10, %c0_11] : memref<1x1x32xf32, #tpu.memory_space<vmem>>, vector<1x1x32xf32>
    %10 = vector.shape_cast %9 : vector<1x1x32xf32> to vector<1x32xf32>
    %11 = vector.broadcast %10 : vector<1x32xf32> to vector<64x32xf32>
    %12 = arith.addf %8, %11 : vector<64x32xf32>
    %c0_12 = arith.constant 0 : index
    %c0_13 = arith.constant 0 : index
    %c0_14 = arith.constant 0 : index
    %13 = vector.load %arg12[%c0_12, %c0_13, %c0_14] : memref<1x128x32xbf16, #tpu.memory_space<vmem>>, vector<1x128x32xbf16>
    %14 = vector.shape_cast %13 : vector<1x128x32xbf16> to vector<128x32xbf16>
    %cst_15 = arith.constant dense<0.000000e+00> : vector<64x32xf32>
    %15 = tpu.matmul %3, %14, %cst_15 {dimension_numbers = #tpu.dot_dimension_numbers<[1], [0], [0], [1], [0, 0, 1, 1], [], []>} : vector<64x128xbf16>, vector<128x32xbf16>, vector<64x32xf32> -> vector<64x32xf32>
    %c0_16 = arith.constant 0 : index
    %c0_17 = arith.constant 0 : index
    %c0_18 = arith.constant 0 : index
    %16 = vector.load %arg13[%c0_16, %c0_17, %c0_18] : memref<1x1x32xf32, #tpu.memory_space<vmem>>, vector<1x1x32xf32>
    %17 = vector.shape_cast %16 : vector<1x1x32xf32> to vector<1x32xf32>
    %18 = vector.broadcast %17 : vector<1x32xf32> to vector<64x32xf32>
    %19 = arith.addf %15, %18 : vector<64x32xf32>
    %c0_19 = arith.constant 0 : index
    %c0_20 = arith.constant 0 : index
    %c0_21 = arith.constant 0 : index
    %20 = vector.load %arg8[%c0_19, %c0_20, %c0_21] : memref<1x128x32xbf16, #tpu.memory_space<vmem>>, vector<1x128x32xbf16>
    %21 = vector.shape_cast %20 : vector<1x128x32xbf16> to vector<128x32xbf16>
    %cst_22 = arith.constant dense<0.000000e+00> : vector<64x32xf32>
    %22 = tpu.matmul %4, %21, %cst_22 {dimension_numbers = #tpu.dot_dimension_numbers<[1], [0], [0], [1], [0, 0, 1, 1], [], []>} : vector<64x128xbf16>, vector<128x32xbf16>, vector<64x32xf32> -> vector<64x32xf32>
    %c0_23 = arith.constant 0 : index
    %c0_24 = arith.constant 0 : index
    %c0_25 = arith.constant 0 : index
    %23 = vector.load %arg9[%c0_23, %c0_24, %c0_25] : memref<1x1x32xf32, #tpu.memory_space<vmem>>, vector<1x1x32xf32>
    %24 = vector.shape_cast %23 : vector<1x1x32xf32> to vector<1x32xf32>
    %25 = vector.broadcast %24 : vector<1x32xf32> to vector<64x32xf32>
    %26 = arith.addf %22, %25 : vector<64x32xf32>
    %c0_26 = arith.constant 0 : index
    %c0_27 = arith.constant 0 : index
    %c0_28 = arith.constant 0 : index
    %27 = vector.load %arg10[%c0_26, %c0_27, %c0_28] : memref<1x128x32xbf16, #tpu.memory_space<vmem>>, vector<1x128x32xbf16>
    %28 = vector.shape_cast %27 : vector<1x128x32xbf16> to vector<128x32xbf16>
    %cst_29 = arith.constant dense<0.000000e+00> : vector<64x32xf32>
    %29 = tpu.matmul %5, %28, %cst_29 {dimension_numbers = #tpu.dot_dimension_numbers<[1], [0], [0], [1], [0, 0, 1, 1], [], []>} : vector<64x128xbf16>, vector<128x32xbf16>, vector<64x32xf32> -> vector<64x32xf32>
    %c0_30 = arith.constant 0 : index
    %c0_31 = arith.constant 0 : index
    %c0_32 = arith.constant 0 : index
    %30 = vector.load %arg11[%c0_30, %c0_31, %c0_32] : memref<1x1x32xf32, #tpu.memory_space<vmem>>, vector<1x1x32xf32>
    %31 = vector.shape_cast %30 : vector<1x1x32xf32> to vector<1x32xf32>
    %32 = vector.broadcast %31 : vector<1x32xf32> to vector<64x32xf32>
    %33 = arith.addf %29, %32 : vector<64x32xf32>
    %34 = vector.shape_cast %12 : vector<64x32xf32> to vector<4x16x32xf32>
    %35 = arith.truncf %34 : vector<4x16x32xf32> to vector<4x16x32xbf16>
    %36 = vector.shape_cast %26 : vector<64x32xf32> to vector<4x16x32xf32>
    %37 = arith.truncf %36 : vector<4x16x32xf32> to vector<4x16x32xbf16>
    %38 = vector.shape_cast %33 : vector<64x32xf32> to vector<4x16x32xf32>
    %39 = arith.truncf %38 : vector<4x16x32xf32> to vector<4x16x32xbf16>
    "tpu.trace_start"() <{level = 10 : i32, message = "bqd,bkd->bqk"}> : () -> ()
    %cst_33 = arith.constant dense<0.000000e+00> : vector<4x16x16xf32>
    %40 = tpu.matmul %35, %37, %cst_33 {dimension_numbers = #tpu.dot_dimension_numbers<[2], [2], [1], [1], [0, 0, 0, 1, 1, 1], [0], [0]>} : vector<4x16x32xbf16>, vector<4x16x32xbf16>, vector<4x16x16xf32> -> vector<4x16x16xf32>
    "tpu.trace_stop"() : () -> ()
    %41 = vector.shape_cast %19 : vector<64x32xf32> to vector<4x16x32xf32>
    %c0_34 = arith.constant 0 : index
    %c0_35 = arith.constant 0 : index
    %c0_36 = arith.constant 0 : index
    %c0_37 = arith.constant 0 : index
    %c0_38 = arith.constant 0 : index
    %42 = vector.load %arg5[%c0_34, %c0_35, %c0_36, %c0_37, %c0_38] : memref<4x1x16x16x32xbf16, #tpu.memory_space<vmem>>, vector<4x1x16x16x32xbf16>
    %43 = vector.shape_cast %42 : vector<4x1x16x16x32xbf16> to vector<4x16x16x32xbf16>
    %44 = arith.extf %43 : vector<4x16x16x32xbf16> to vector<4x16x16x32xf32>
    %45 = vector.shape_cast %41 : vector<4x16x32xf32> to vector<4x16x1x32xf32>
    %46 = vector.broadcast %45 : vector<4x16x1x32xf32> to vector<4x16x16x32xf32>
    %47 = arith.mulf %44, %46 : vector<4x16x16x32xf32>
    %cst_39 = arith.constant dense<0.000000e+00> : vector<4x16x16xf32>
    %48 = vector.multi_reduction <add>, %47, %cst_39 [3] : vector<4x16x16x32xf32> to vector<4x16x16xf32>
    %49 = arith.addf %40, %48 : vector<4x16x16xf32>
    %cst_40 = arith.constant dense<0xFF800000> : vector<4x16xf32>
    %50 = vector.multi_reduction <maximumf>, %49, %cst_40 [2] : vector<4x16x16xf32> to vector<4x16xf32>
    %51 = vector.shape_cast %50 : vector<4x16xf32> to vector<4x16x1xf32>
    %52 = vector.broadcast %51 : vector<4x16x1xf32> to vector<4x16x16xf32>
    %53 = arith.subf %49, %52 : vector<4x16x16xf32>
    %54 = math.exp %53 : vector<4x16x16xf32>
    %cst_41 = arith.constant dense<0.000000e+00> : vector<4x16xf32>
    %55 = vector.multi_reduction <add>, %54, %cst_41 [2] : vector<4x16x16xf32> to vector<4x16xf32>
    %56 = vector.shape_cast %55 : vector<4x16xf32> to vector<4x16x1xf32>
    %57 = tpu.reciprocal %56 {approx = true} : vector<4x16x1xf32> -> vector<4x16x1xf32>
    %58 = vector.broadcast %57 : vector<4x16x1xf32> to vector<4x16x16xf32>
    %59 = arith.mulf %54, %58 : vector<4x16x16xf32>
    %60 = arith.truncf %59 : vector<4x16x16xf32> to vector<4x16x16xbf16>
    "tpu.trace_start"() <{level = 10 : i32, message = "bqk,bkv->bqv"}> : () -> ()
    %cst_42 = arith.constant dense<0.000000e+00> : vector<4x16x32xf32>
    %61 = tpu.matmul %60, %39, %cst_42 {dimension_numbers = #tpu.dot_dimension_numbers<[2], [1], [1], [2], [0, 0, 0, 1, 1, 2], [0], [0]>} : vector<4x16x16xbf16>, vector<4x16x32xbf16>, vector<4x16x32xf32> -> vector<4x16x32xf32>
    "tpu.trace_stop"() : () -> ()
    %c0_43 = arith.constant 0 : index
    %c0_44 = arith.constant 0 : index
    %62 = vector.load %arg17[%c0_43, %c0_44] : memref<64x128xf32, #tpu.memory_space<vmem>>, vector<64x128xf32>
    %63 = vector.shape_cast %61 : vector<4x16x32xf32> to vector<64x32xf32>
    %64 = arith.truncf %63 : vector<64x32xf32> to vector<64x32xbf16>
    %c0_45 = arith.constant 0 : index
    %c0_46 = arith.constant 0 : index
    %c0_47 = arith.constant 0 : index
    %65 = vector.load %arg14[%c0_45, %c0_46, %c0_47] : memref<1x32x128xbf16, #tpu.memory_space<vmem>>, vector<1x32x128xbf16>
    %66 = vector.shape_cast %65 : vector<1x32x128xbf16> to vector<32x128xbf16>
    %cst_48 = arith.constant dense<0.000000e+00> : vector<64x128xf32>
    %67 = tpu.matmul %64, %66, %cst_48 {dimension_numbers = #tpu.dot_dimension_numbers<[1], [0], [0], [1], [0, 0, 1, 1], [], []>} : vector<64x32xbf16>, vector<32x128xbf16>, vector<64x128xf32> -> vector<64x128xf32>
    %68 = arith.addf %62, %67 : vector<64x128xf32>
    %c0_49 = arith.constant 0 : index
    %c0_50 = arith.constant 0 : index
    %69 = vector.load %arg17[%c0_49, %c0_50] : memref<64x128xf32, #tpu.memory_space<vmem>>, vector<64x128xf32>
    tpu.vector_store %arg17[%c0_49, %c0_50], %68 {strides = array<i32>} : memref<64x128xf32, #tpu.memory_space<vmem>>, vector<64x128xf32>,
    %c3_i32 = arith.constant 3 : i32
    %70 = arith.cmpi eq, %arg1, %c3_i32 : i32
    %71 = arith.extui %70 : i1 to i32
    %c0_i32_51 = arith.constant 0 : i32
    %72 = arith.cmpi ne, %71, %c0_i32_51 : i32
    scf.if %72 {
      %c0_52 = arith.constant 0 : index
      %c0_53 = arith.constant 0 : index
      %73 = vector.load %arg17[%c0_52, %c0_53] : memref<64x128xf32, #tpu.memory_space<vmem>>, vector<64x128xf32>
      %c0_54 = arith.constant 0 : index
      %c0_55 = arith.constant 0 : index
      %74 = vector.load %arg15[%c0_54, %c0_55] : memref<1x128xf32, #tpu.memory_space<vmem>>, vector<1x128xf32>
      %75 = vector.broadcast %74 : vector<1x128xf32> to vector<64x128xf32>
      %76 = arith.addf %73, %75 : vector<64x128xf32>
      %c0_56 = arith.constant 0 : index
      %c0_57 = arith.constant 0 : index
      %77 = vector.load %arg16[%c0_56, %c0_57] : memref<64x128xf32, #tpu.memory_space<vmem>>, vector<64x128xf32>
      tpu.vector_store %arg16[%c0_56, %c0_57], %76 {strides = array<i32>} : memref<64x128xf32, #tpu.memory_space<vmem>>, vector<64x128xf32>,
    } else {
    }
    return
  }
  func.func @transform_0(%arg0: i32, %arg1: i32) -> (i32, i32) {
    %c0_i32 = arith.constant 0 : i32
    %c0_i32_0 = arith.constant 0 : i32
    return %arg0, %c0_i32 : i32, i32
  }
  func.func @transform_1(%arg0: i32, %arg1: i32) -> (i32, i32) {
    %c0_i32 = arith.constant 0 : i32
    %c0_i32_0 = arith.constant 0 : i32
    return %arg0, %c0_i32 : i32, i32
  }
  func.func @transform_2(%arg0: i32, %arg1: i32) -> (i32, i32) {
    %c0_i32 = arith.constant 0 : i32
    %c0_i32_0 = arith.constant 0 : i32
    return %arg0, %c0_i32 : i32, i32
  }
  func.func @transform_3(%arg0: i32, %arg1: i32) -> (i32, i32, i32, i32, i32) {
    %c0_i32 = arith.constant 0 : i32
    %c0_i32_0 = arith.constant 0 : i32
    %c0_i32_1 = arith.constant 0 : i32
    %c0_i32_2 = arith.constant 0 : i32
    return %arg0, %arg1, %c0_i32, %c0_i32_0, %c0_i32_1 : i32, i32, i32, i32, i32
  }
  func.func @transform_4(%arg0: i32, %arg1: i32) -> (i32, i32, i32) {
    %c0_i32 = arith.constant 0 : i32
    %c0_i32_0 = arith.constant 0 : i32
    %c0_i32_1 = arith.constant 0 : i32
    return %arg1, %c0_i32, %c0_i32_0 : i32, i32, i32
  }
  func.func @transform_5(%arg0: i32, %arg1: i32) -> (i32, i32, i32) {
    %c0_i32 = arith.constant 0 : i32
    %c0_i32_0 = arith.constant 0 : i32
    %c0_i32_1 = arith.constant 0 : i32
    return %arg1, %c0_i32, %c0_i32_0 : i32, i32, i32
  }
  func.func @transform_6(%arg0: i32, %arg1: i32) -> (i32, i32, i32) {
    %c0_i32 = arith.constant 0 : i32
    %c0_i32_0 = arith.constant 0 : i32
    %c0_i32_1 = arith.constant 0 : i32
    return %arg1, %c0_i32, %c0_i32_0 : i32, i32, i32
  }
  func.func @transform_7(%arg0: i32, %arg1: i32) -> (i32, i32, i32) {
    %c0_i32 = arith.constant 0 : i32
    %c0_i32_0 = arith.constant 0 : i32
    %c0_i32_1 = arith.constant 0 : i32
    return %arg1, %c0_i32, %c0_i32_0 : i32, i32, i32
  }
  func.func @transform_8(%arg0: i32, %arg1: i32) -> (i32, i32, i32) {
    %c0_i32 = arith.constant 0 : i32
    %c0_i32_0 = arith.constant 0 : i32
    %c0_i32_1 = arith.constant 0 : i32
    return %arg1, %c0_i32, %c0_i32_0 : i32, i32, i32
  }
  func.func @transform_9(%arg0: i32, %arg1: i32) -> (i32, i32, i32) {
    %c0_i32 = arith.constant 0 : i32
    %c0_i32_0 = arith.constant 0 : i32
    %c0_i32_1 = arith.constant 0 : i32
    return %arg1, %c0_i32, %c0_i32_0 : i32, i32, i32
  }
  func.func @transform_10(%arg0: i32, %arg1: i32) -> (i32, i32, i32) {
    %c0_i32 = arith.constant 0 : i32
    %c0_i32_0 = arith.constant 0 : i32
    %c0_i32_1 = arith.constant 0 : i32
    return %arg1, %c0_i32, %c0_i32_0 : i32, i32, i32
  }
  func.func @transform_11(%arg0: i32, %arg1: i32) -> (i32, i32, i32) {
    %c0_i32 = arith.constant 0 : i32
    %c0_i32_0 = arith.constant 0 : i32
    %c0_i32_1 = arith.constant 0 : i32
    return %arg1, %c0_i32, %c0_i32_0 : i32, i32, i32
  }
  func.func @transform_12(%arg0: i32, %arg1: i32) -> (i32, i32, i32) {
    %c0_i32 = arith.constant 0 : i32
    %c0_i32_0 = arith.constant 0 : i32
    %c0_i32_1 = arith.constant 0 : i32
    return %arg1, %c0_i32, %c0_i32_0 : i32, i32, i32
  }
  func.func @transform_13(%arg0: i32, %arg1: i32) -> (i32, i32) {
    %c0_i32 = arith.constant 0 : i32
    %c0_i32_0 = arith.constant 0 : i32
    %c0_i32_1 = arith.constant 0 : i32
    return %c0_i32, %c0_i32_0 : i32, i32
  }
  func.func @transform_14(%arg0: i32, %arg1: i32) -> (i32, i32) {
    %c0_i32 = arith.constant 0 : i32
    %c0_i32_0 = arith.constant 0 : i32
    return %arg0, %c0_i32 : i32, i32
  }
}

</mosaic_0001>

<llo_original>
// kernel: tpu_custom_call.1
$region0: #{tpu_custom_call.1}
  #allocation0 [shape = 'u32[]', space=smem, size = 0x4, offset = 0x4, fixed_abs, tag = 'smem constant byte address 0x4 - core index']
  #allocation1 [shape = 'u32[144,128]{1,0:T(1,128)}', space=vmem, size = 0x12000, scoped, tag = 'internal scratch']
  #allocation2 [shape = 'f32[64,128]{1,0:T(8,128)}', space=vmem, size = 0x8000, scoped, tag = 'scratch operand']
  #allocation21 [shape = 's32[]', space=sflag, size = 0x4, offset = 0, fixed_abs, tag = 'sflag constant byte address 0x0 - dummy sync flag']
  %s0 = inlined_call_operand.hbm [shape: bf16[128,128], index: 0, kind: input, shape index: {}]
  %s1 = inlined_call_operand.hbm [shape: bf16[128,128], index: 1, kind: input, shape index: {}]
  %s2 = inlined_call_operand.hbm [shape: bf16[128,128], index: 2, kind: input, shape index: {}]
  %s3 = inlined_call_operand.hbm [shape: bf16[8,4,16,16,32], index: 3, kind: input, shape index: {}]
  %s4 = inlined_call_operand.vmem [shape: bf16[4,128,32], index: 4, kind: input, shape index: {}]
  %s5 = inlined_call_operand.hbm [shape: f32[4,1,32], index: 5, kind: input, shape index: {}]
  %s6 = inlined_call_operand.vmem [shape: bf16[4,128,32], index: 6, kind: input, shape index: {}]
  %s7 = inlined_call_operand.hbm [shape: f32[4,1,32], index: 7, kind: input, shape index: {}]
  %s8 = inlined_call_operand.vmem [shape: bf16[4,128,32], index: 8, kind: input, shape index: {}]
  %s9 = inlined_call_operand.hbm [shape: f32[4,1,32], index: 9, kind: input, shape index: {}]
  %s10 = inlined_call_operand.vmem [shape: bf16[4,128,32], index: 10, kind: input, shape index: {}]
  %s11 = inlined_call_operand.hbm [shape: f32[4,1,32], index: 11, kind: input, shape index: {}]
  %s12 = inlined_call_operand.hbm [shape: bf16[4,32,128], index: 12, kind: input, shape index: {}]
  %s13 = inlined_call_operand.hbm [shape: f32[1,128], index: 13, kind: input, shape index: {}]
  %s14 = inlined_call_operand.hbm [shape: f32[128,128], index: 14, kind: output, shape index: {}]
  %s15 = sld [smem:[#allocation0]]
  $region137: #{tpu_custom_call.1} parent=0
    _
  %s17 = ssub.s32 1, %s15
  %s18 = scalar_select 0, %s17, %s15
  $region1: #{tpu_custom_call.1} parent=0
    #allocation3 [shape = 'u8[32768]{0}', space=vmem, size = 0x8000, scoped, tag = 'input window, operand 0']
    #allocation4 [shape = 's32[2]{0}', space=sflag, size = 0x8, scoped, tag = 'scoped memory for tpu_custom_call.1']
    #allocation5 [shape = 's32[2]{0}', space=sflag, size = 0x8, scoped, tag = 'scoped memory for tpu_custom_call.1']
    #allocation6 [shape = 'u8[32768]{0}', space=vmem, size = 0x8000, scoped, tag = 'input window, operand 1']
    #allocation7 [shape = 's32[2]{0}', space=sflag, size = 0x8, scoped, tag = 'scoped memory for tpu_custom_call.1']
    #allocation8 [shape = 'u8[32768]{0}', space=vmem, size = 0x8000, scoped, tag = 'input window, operand 2']
    #allocation9 [shape = 'u8[524288]{0}', space=vmem, size = 0x80000, scoped, tag = 'input window, operand 3']
    #allocation10 [shape = 's32[2]{0}', space=sflag, size = 0x8, scoped, tag = 'scoped memory for tpu_custom_call.1']
    #allocation11 [shape = 'u8[1024]{0}', space=vmem, size = 0x400, scoped, tag = 'input window, operand 5']
    #allocation12 [shape = 'u8[1024]{0}', space=vmem, size = 0x400, scoped, tag = 'input window, operand 7']
    #allocation13 [shape = 's32[2]{0}', space=sflag, size = 0x8, scoped, tag = 'scoped memory for tpu_custom_call.1']
    #allocation14 [shape = 'u8[1024]{0}', space=vmem, size = 0x400, scoped, tag = 'input window, operand 9']
    #allocation15 [shape = 'u8[1024]{0}', space=vmem, size = 0x400, scoped, tag = 'input window, operand 11']
    #allocation16 [shape = 's32[2]{0}', space=sflag, size = 0x8, scoped, tag = 'scoped memory for tpu_custom_call.1']
    #allocation17 [shape = 'u8[16384]{0}', space=vmem, size = 0x4000, scoped, tag = 'input window, operand 12']
    #allocation18 [shape = 'u8[512]{0}', space=vmem, size = 0x400, scoped, tag = 'input window, operand 13, single buffered']
    #allocation19 [shape = 's32[1]{0}', space=sflag, size = 0x4, scoped, tag = 'scoped memory for tpu_custom_call.1']
    #allocation20 [shape = 'u8[65536]{0}', space=vmem, size = 0x10000, scoped, tag = 'output window, operand 0']
    %19 = vsyncpa [#allocation4], 0
    %s20 = scalar_lea.sflag [#allocation4], 1
    %21 = vsyncpa %s20, 0
    %22 = vsyncpa [#allocation7], 0
    %s23 = scalar_lea.sflag [#allocation7], 1
    %24 = vsyncpa %s23, 0
    %25 = vsyncpa [#allocation10], 0
    %s26 = scalar_lea.sflag [#allocation10], 1
    %27 = vsyncpa %s26, 0
    %28 = vsyncpa [#allocation13], 0
    %s29 = scalar_lea.sflag [#allocation13], 1
    %30 = vsyncpa %s29, 0
    %31 = vsyncpa [#allocation16], 0
    %s32 = scalar_lea.sflag [#allocation16], 1
    %33 = vsyncpa %s32, 0
    %34 = vsyncpa [#allocation19], 0
    %35 = vsyncpa [#allocation5], 0
    %s36 = scalar_lea.sflag [#allocation5], 1
    %37 = vsyncpa %s36, 0
    loop: start=0, step=1, limit=10
    $region2: #{tpu_custom_call.1} parent=1 // loop_pre_header
      _
    $region3: #{tpu_custom_call.1} parent=1 // loop_header
      %s39 = sphi 0, %s43
      %p40 = scmp.ge.s32.totalorder %s39, 10
      %s46 = sphi 0, %s58
      %s47 = sphi 0, %s54
      %s48 = sphi 0, %s46
      %s49 = sphi 0, %s47
      %s50 = sphi 0, %s48
      %s51 = sphi 0, %s49
      %s61 = sphi 0, %s63
      %s64 = sphi 0, %s61
      %s65 = sphi 0, %s64
      %s81 = sphi 0, %s65
      %s87 = sphi 0, %s89
      %s90 = sphi 0, %s87
      %s91 = sphi 0, %s90
      %s107 = sphi 0, %s91
      %s113 = sphi 0, %s115
      %s116 = sphi 0, %s113
      %s117 = sphi 0, %s116
      %s133 = sphi 0, %s117
      %s141 = sphi 0, %s143
      %s144 = sphi 0, %s141
      %s145 = sphi 0, %s144
      %s161 = sphi 0, %s145
      %s167 = sphi 0, %s169
      %s170 = sphi 0, %s167
      %s171 = sphi 0, %s170
      %s187 = sphi 0, %s171
      %s193 = sphi 0, %s195
      %s196 = sphi 0, %s193
      %s197 = sphi 0, %s196
      %s213 = sphi 0, %s197
      %s219 = sphi 0, %s221
      %s222 = sphi 0, %s219
      %s223 = sphi 0, %s222
      %s239 = sphi 0, %s223
      %s245 = sphi 0, %s247
      %s248 = sphi 0, %s245
      %s249 = sphi 0, %s248
      %s265 = sphi 0, %s249
      %s271 = sphi 0, %s273
      %s274 = sphi 0, %s271
      %s275 = sphi 0, %s274
      %s291 = sphi 0, %s275
      %s297 = sphi 0, %s299
      %s300 = sphi 0, %s297
      %s301 = sphi 0, %s300
      %s317 = sphi 0, %s301
      %s323 = sphi 0, %s325
      %s326 = sphi 0, %s323
      %s327 = sphi 0, %s326
      %s343 = sphi 0, %s327
      %s349 = sphi 0, %s351
      %s352 = sphi 0, %s349
      %s353 = sphi 0, %s352
      %s369 = sphi 0, %s353
      %s375 = sphi 0, %s377
      %s378 = sphi 0, %s375
      %s379 = sphi 0, %s378
      %s395 = sphi 0, %s379
      %s399 = sphi 0, %s399
      %s401 = sphi 0, %s399
      %s402 = sphi 0, %s401
      %s416 = sphi 0, %s402
      %s422 = sphi 0, %s424
      %s425 = sphi 0, %s422
      %s426 = sphi 0, %s425
      %s442 = sphi 0, %s426
    $region4: #{tpu_custom_call.1} parent=1 // loop_header_branch
      %42 = sbr.rel (%p40) target = $region8
    $region5: #{tpu_custom_call.1} parent=1 // loop_body
      %s44 = ssub.s32 %s39, 1
      %s45 = ssub.s32 %s39, 2
      %s52 = sadd.s32 1, %s47
      %p53 = scmp.ge.s32.totalorder %s52, 4
      %s54 = scalar_select %p53, 0, %s52
      %s55 = sadd.s32 1, %s46
      %s56 = scalar_select %p53, %s55, %s46
      %p57 = scmp.ge.s32.totalorder %s56, 2
      %s58 = scalar_select %p57, 0, %s56
      %s59 = ssub.s32 %s46, %s58
      %p60 = scmp.eq.s32.totalorder %s59, 0
      %s62 = sadd.s32 %s61, 1
      %s63 = scalar_select %p60, %s61, %s62
      %p66 = pneg %p60
      %p67 = scmp.eq.s32.totalorder %s39, 7
      %p68 = por %p66, %p67
      %p69 = scmp.ne.s32.totalorder %s61, %s64
      %p70 = scmp.eq.s32.totalorder %s39, 0
      %p71 = por %p69, %p70
      %p72 = scmp.ne.s32.totalorder %s61, %s64
      %p73 = scmp.eq.s32.totalorder %s44, 7
      %p74 = por %p72, %p73
      %p75 = scmp.ne.s32.totalorder %s64, %s65
      %p76 = scmp.eq.s32.totalorder %s44, 0
      %p77 = por %p75, %p76
      %p78 = scmp.ne.s32.totalorder %s64, %s65
      %p79 = scmp.eq.s32.totalorder %s45, 7
      %p80 = por %p78, %p79
      %p82 = scmp.ne.s32.totalorder %s65, %s81
      %p83 = scmp.eq.s32.totalorder %s45, 0
      %p84 = por %p82, %p83
      %s85 = ssub.s32 %s46, %s58
      %p86 = scmp.eq.s32.totalorder %s85, 0
      %s88 = sadd.s32 %s87, 1
      %s89 = scalar_select %p86, %s87, %s88
      %p92 = pneg %p86
      %p93 = scmp.eq.s32.totalorder %s39, 7
      %p94 = por %p92, %p93
      %p95 = scmp.ne.s32.totalorder %s87, %s90
      %p96 = scmp.eq.s32.totalorder %s39, 0
      %p97 = por %p95, %p96
      %p98 = scmp.ne.s32.totalorder %s87, %s90
      %p99 = scmp.eq.s32.totalorder %s44, 7
      %p100 = por %p98, %p99
      %p101 = scmp.ne.s32.totalorder %s90, %s91
      %p102 = scmp.eq.s32.totalorder %s44, 0
      %p103 = por %p101, %p102
      %p104 = scmp.ne.s32.totalorder %s90, %s91
      %p105 = scmp.eq.s32.totalorder %s45, 7
      %p106 = por %p104, %p105
      %p108 = scmp.ne.s32.totalorder %s91, %s107
      %p109 = scmp.eq.s32.totalorder %s45, 0
      %p110 = por %p108, %p109
      %s111 = ssub.s32 %s46, %s58
      %p112 = scmp.eq.s32.totalorder %s111, 0
      %s114 = sadd.s32 %s113, 1
      %s115 = scalar_select %p112, %s113, %s114
      %p118 = pneg %p112
      %p119 = scmp.eq.s32.totalorder %s39, 7
      %p120 = por %p118, %p119
      %p121 = scmp.ne.s32.totalorder %s113, %s116
      %p122 = scmp.eq.s32.totalorder %s39, 0
      %p123 = por %p121, %p122
      %p124 = scmp.ne.s32.totalorder %s113, %s116
      %p125 = scmp.eq.s32.totalorder %s44, 7
      %p126 = por %p124, %p125
      %p127 = scmp.ne.s32.totalorder %s116, %s117
      %p128 = scmp.eq.s32.totalorder %s44, 0
      %p129 = por %p127, %p128
      %p130 = scmp.ne.s32.totalorder %s116, %s117
      %p131 = scmp.eq.s32.totalorder %s45, 7
      %p132 = por %p130, %p131
      %p134 = scmp.ne.s32.totalorder %s117, %s133
      %p135 = scmp.eq.s32.totalorder %s45, 0
      %p136 = por %p134, %p135
      %s137 = ssub.s32 %s46, %s58
      %s138 = ssub.s32 %s47, %s54
      %s139 = sor.u32 %s137, %s138
      %p140 = scmp.eq.s32.totalorder %s139, 0
      %s142 = sadd.s32 %s141, 1
      %s143 = scalar_select %p140, %s141, %s142
      %p146 = pneg %p140
      %p147 = scmp.eq.s32.totalorder %s39, 7
      %p148 = por %p146, %p147
      %p149 = scmp.ne.s32.totalorder %s141, %s144
      %p150 = scmp.eq.s32.totalorder %s39, 0
      %p151 = por %p149, %p150
      %p152 = scmp.ne.s32.totalorder %s141, %s144
      %p153 = scmp.eq.s32.totalorder %s44, 7
      %p154 = por %p152, %p153
      %p155 = scmp.ne.s32.totalorder %s144, %s145
      %p156 = scmp.eq.s32.totalorder %s44, 0
      %p157 = por %p155, %p156
      %p158 = scmp.ne.s32.totalorder %s144, %s145
      %p159 = scmp.eq.s32.totalorder %s45, 7
      %p160 = por %p158, %p159
      %p162 = scmp.ne.s32.totalorder %s145, %s161
      %p163 = scmp.eq.s32.totalorder %s45, 0
      %p164 = por %p162, %p163
      %s165 = ssub.s32 %s47, %s54
      %p166 = scmp.eq.s32.totalorder %s165, 0
      %s168 = sadd.s32 %s167, 1
      %s169 = scalar_select %p166, %s167, %s168
      %p172 = pneg %p166
      %p173 = scmp.eq.s32.totalorder %s39, 7
      %p174 = por %p172, %p173
      %p175 = scmp.ne.s32.totalorder %s167, %s170
      %p176 = scmp.eq.s32.totalorder %s39, 0
      %p177 = por %p175, %p176
      %p178 = scmp.ne.s32.totalorder %s167, %s170
      %p179 = scmp.eq.s32.totalorder %s44, 7
      %p180 = por %p178, %p179
      %p181 = scmp.ne.s32.totalorder %s170, %s171
      %p182 = scmp.eq.s32.totalorder %s44, 0
      %p183 = por %p181, %p182
      %p184 = scmp.ne.s32.totalorder %s170, %s171
      %p185 = scmp.eq.s32.totalorder %s45, 7
      %p186 = por %p184, %p185
      %p188 = scmp.ne.s32.totalorder %s171, %s187
      %p189 = scmp.eq.s32.totalorder %s45, 0
      %p190 = por %p188, %p189
      %s191 = ssub.s32 %s47, %s54
      %p192 = scmp.eq.s32.totalorder %s191, 0
      %s194 = sadd.s32 %s193, 1
      %s195 = scalar_select %p192, %s193, %s194
      %p198 = pneg %p192
      %p199 = scmp.eq.s32.totalorder %s39, 7
      %p200 = por %p198, %p199
      %p201 = scmp.ne.s32.totalorder %s193, %s196
      %p202 = scmp.eq.s32.totalorder %s39, 0
      %p203 = por %p201, %p202
      %p204 = scmp.ne.s32.totalorder %s193, %s196
      %p205 = scmp.eq.s32.totalorder %s44, 7
      %p206 = por %p204, %p205
      %p207 = scmp.ne.s32.totalorder %s196, %s197
      %p208 = scmp.eq.s32.totalorder %s44, 0
      %p209 = por %p207, %p208
      %p210 = scmp.ne.s32.totalorder %s196, %s197
      %p211 = scmp.eq.s32.totalorder %s45, 7
      %p212 = por %p210, %p211
      %p214 = scmp.ne.s32.totalorder %s197, %s213
      %p215 = scmp.eq.s32.totalorder %s45, 0
      %p216 = por %p214, %p215
      %s217 = ssub.s32 %s47, %s54
      %p218 = scmp.eq.s32.totalorder %s217, 0
      %s220 = sadd.s32 %s219, 1
      %s221 = scalar_select %p218, %s219, %s220
      %p224 = pneg %p218
      %p225 = scmp.eq.s32.totalorder %s39, 7
      %p226 = por %p224, %p225
      %p227 = scmp.ne.s32.totalorder %s219, %s222
      %p228 = scmp.eq.s32.totalorder %s39, 0
      %p229 = por %p227, %p228
      %p230 = scmp.ne.s32.totalorder %s219, %s222
      %p231 = scmp.eq.s32.totalorder %s44, 7
      %p232 = por %p230, %p231
      %p233 = scmp.ne.s32.totalorder %s222, %s223
      %p234 = scmp.eq.s32.totalorder %s44, 0
      %p235 = por %p233, %p234
      %p236 = scmp.ne.s32.totalorder %s222, %s223
      %p237 = scmp.eq.s32.totalorder %s45, 7
      %p238 = por %p236, %p237
      %p240 = scmp.ne.s32.totalorder %s223, %s239
      %p241 = scmp.eq.s32.totalorder %s45, 0
      %p242 = por %p240, %p241
      %s243 = ssub.s32 %s47, %s54
      %p244 = scmp.eq.s32.totalorder %s243, 0
      %s246 = sadd.s32 %s245, 1
      %s247 = scalar_select %p244, %s245, %s246
      %p250 = pneg %p244
      %p251 = scmp.eq.s32.totalorder %s39, 7
      %p252 = por %p250, %p251
      %p253 = scmp.ne.s32.totalorder %s245, %s248
      %p254 = scmp.eq.s32.totalorder %s39, 0
      %p255 = por %p253, %p254
      %p256 = scmp.ne.s32.totalorder %s245, %s248
      %p257 = scmp.eq.s32.totalorder %s44, 7
      %p258 = por %p256, %p257
      %p259 = scmp.ne.s32.totalorder %s248, %s249
      %p260 = scmp.eq.s32.totalorder %s44, 0
      %p261 = por %p259, %p260
      %p262 = scmp.ne.s32.totalorder %s248, %s249
      %p263 = scmp.eq.s32.totalorder %s45, 7
      %p264 = por %p262, %p263
      %p266 = scmp.ne.s32.totalorder %s249, %s265
      %p267 = scmp.eq.s32.totalorder %s45, 0
      %p268 = por %p266, %p267
      %s269 = ssub.s32 %s47, %s54
      %p270 = scmp.eq.s32.totalorder %s269, 0
      %s272 = sadd.s32 %s271, 1
      %s273 = scalar_select %p270, %s271, %s272
      %p276 = pneg %p270
      %p277 = scmp.eq.s32.totalorder %s39, 7
      %p278 = por %p276, %p277
      %p279 = scmp.ne.s32.totalorder %s271, %s274
      %p280 = scmp.eq.s32.totalorder %s39, 0
      %p281 = por %p279, %p280
      %p282 = scmp.ne.s32.totalorder %s271, %s274
      %p283 = scmp.eq.s32.totalorder %s44, 7
      %p284 = por %p282, %p283
      %p285 = scmp.ne.s32.totalorder %s274, %s275
      %p286 = scmp.eq.s32.totalorder %s44, 0
      %p287 = por %p285, %p286
      %p288 = scmp.ne.s32.totalorder %s274, %s275
      %p289 = scmp.eq.s32.totalorder %s45, 7
      %p290 = por %p288, %p289
      %p292 = scmp.ne.s32.totalorder %s275, %s291
      %p293 = scmp.eq.s32.totalorder %s45, 0
      %p294 = por %p292, %p293
      %s295 = ssub.s32 %s47, %s54
      %p296 = scmp.eq.s32.totalorder %s295, 0
      %s298 = sadd.s32 %s297, 1
      %s299 = scalar_select %p296, %s297, %s298
      %p302 = pneg %p296
      %p303 = scmp.eq.s32.totalorder %s39, 7
      %p304 = por %p302, %p303
      %p305 = scmp.ne.s32.totalorder %s297, %s300
      %p306 = scmp.eq.s32.totalorder %s39, 0
      %p307 = por %p305, %p306
      %p308 = scmp.ne.s32.totalorder %s297, %s300
      %p309 = scmp.eq.s32.totalorder %s44, 7
      %p310 = por %p308, %p309
      %p311 = scmp.ne.s32.totalorder %s300, %s301
      %p312 = scmp.eq.s32.totalorder %s44, 0
      %p313 = por %p311, %p312
      %p314 = scmp.ne.s32.totalorder %s300, %s301
      %p315 = scmp.eq.s32.totalorder %s45, 7
      %p316 = por %p314, %p315
      %p318 = scmp.ne.s32.totalorder %s301, %s317
      %p319 = scmp.eq.s32.totalorder %s45, 0
      %p320 = por %p318, %p319
      %s321 = ssub.s32 %s47, %s54
      %p322 = scmp.eq.s32.totalorder %s321, 0
      %s324 = sadd.s32 %s323, 1
      %s325 = scalar_select %p322, %s323, %s324
      %p328 = pneg %p322
      %p329 = scmp.eq.s32.totalorder %s39, 7
      %p330 = por %p328, %p329
      %p331 = scmp.ne.s32.totalorder %s323, %s326
      %p332 = scmp.eq.s32.totalorder %s39, 0
      %p333 = por %p331, %p332
      %p334 = scmp.ne.s32.totalorder %s323, %s326
      %p335 = scmp.eq.s32.totalorder %s44, 7
      %p336 = por %p334, %p335
      %p337 = scmp.ne.s32.totalorder %s326, %s327
      %p338 = scmp.eq.s32.totalorder %s44, 0
      %p339 = por %p337, %p338
      %p340 = scmp.ne.s32.totalorder %s326, %s327
      %p341 = scmp.eq.s32.totalorder %s45, 7
      %p342 = por %p340, %p341
      %p344 = scmp.ne.s32.totalorder %s327, %s343
      %p345 = scmp.eq.s32.totalorder %s45, 0
      %p346 = por %p344, %p345
      %s347 = ssub.s32 %s47, %s54
      %p348 = scmp.eq.s32.totalorder %s347, 0
      %s350 = sadd.s32 %s349, 1
      %s351 = scalar_select %p348, %s349, %s350
      %p354 = pneg %p348
      %p355 = scmp.eq.s32.totalorder %s39, 7
      %p356 = por %p354, %p355
      %p357 = scmp.ne.s32.totalorder %s349, %s352
      %p358 = scmp.eq.s32.totalorder %s39, 0
      %p359 = por %p357, %p358
      %p360 = scmp.ne.s32.totalorder %s349, %s352
      %p361 = scmp.eq.s32.totalorder %s44, 7
      %p362 = por %p360, %p361
      %p363 = scmp.ne.s32.totalorder %s352, %s353
      %p364 = scmp.eq.s32.totalorder %s44, 0
      %p365 = por %p363, %p364
      %p366 = scmp.ne.s32.totalorder %s352, %s353
      %p367 = scmp.eq.s32.totalorder %s45, 7
      %p368 = por %p366, %p367
      %p370 = scmp.ne.s32.totalorder %s353, %s369
      %p371 = scmp.eq.s32.totalorder %s45, 0
      %p372 = por %p370, %p371
      %s373 = ssub.s32 %s47, %s54
      %p374 = scmp.eq.s32.totalorder %s373, 0
      %s376 = sadd.s32 %s375, 1
      %s377 = scalar_select %p374, %s375, %s376
      %p380 = pneg %p374
      %p381 = scmp.eq.s32.totalorder %s39, 7
      %p382 = por %p380, %p381
      %p383 = scmp.ne.s32.totalorder %s375, %s378
      %p384 = scmp.eq.s32.totalorder %s39, 0
      %p385 = por %p383, %p384
      %p386 = scmp.ne.s32.totalorder %s375, %s378
      %p387 = scmp.eq.s32.totalorder %s44, 7
      %p388 = por %p386, %p387
      %p389 = scmp.ne.s32.totalorder %s378, %s379
      %p390 = scmp.eq.s32.totalorder %s44, 0
      %p391 = por %p389, %p390
      %p392 = scmp.ne.s32.totalorder %s378, %s379
      %p393 = scmp.eq.s32.totalorder %s45, 7
      %p394 = por %p392, %p393
      %p396 = scmp.ne.s32.totalorder %s379, %s395
      %p397 = scmp.eq.s32.totalorder %s45, 0
      %p398 = por %p396, %p397
      %s400 = sadd.s32 %s399, 1
      %p403 = scmp.eq.s32.totalorder %s39, 7
      %p404 = scmp.ne.s32.totalorder %s399, %s401
      %p405 = scmp.eq.s32.totalorder %s39, 0
      %p406 = por %p404, %p405
      %p407 = scmp.ne.s32.totalorder %s399, %s401
      %p408 = scmp.eq.s32.totalorder %s44, 7
      %p409 = por %p407, %p408
      %p410 = scmp.ne.s32.totalorder %s401, %s402
      %p411 = scmp.eq.s32.totalorder %s44, 0
      %p412 = por %p410, %p411
      %p413 = scmp.ne.s32.totalorder %s401, %s402
      %p414 = scmp.eq.s32.totalorder %s45, 7
      %p415 = por %p413, %p414
      %p417 = scmp.ne.s32.totalorder %s402, %s416
      %p418 = scmp.eq.s32.totalorder %s45, 0
      %p419 = por %p417, %p418
      %s420 = ssub.s32 %s46, %s58
      %p421 = scmp.eq.s32.totalorder %s420, 0
      %s423 = sadd.s32 %s422, 1
      %s424 = scalar_select %p421, %s422, %s423
      %p427 = pneg %p421
      %p428 = scmp.eq.s32.totalorder %s39, 7
      %p429 = por %p427, %p428
      %p430 = scmp.ne.s32.totalorder %s422, %s425
      %p431 = scmp.eq.s32.totalorder %s39, 0
      %p432 = por %p430, %p431
      %p433 = scmp.ne.s32.totalorder %s422, %s425
      %p434 = scmp.eq.s32.totalorder %s44, 7
      %p435 = por %p433, %p434
      %p436 = scmp.ne.s32.totalorder %s425, %s426
      %p437 = scmp.eq.s32.totalorder %s44, 0
      %p438 = por %p436, %p437
      %p439 = scmp.ne.s32.totalorder %s425, %s426
      %p440 = scmp.eq.s32.totalorder %s45, 7
      %p441 = por %p439, %p440
      %p443 = scmp.ne.s32.totalorder %s426, %s442
      %p444 = scmp.eq.s32.totalorder %s45, 0
      %p445 = por %p443, %p444
      %p446 = scmp.le.s32.totalorder 1, %s39
      %p447 = scmp.lt.s32.totalorder %s39, 9
      %p448 = pnand %p446, %p447
      %p449 = pneg %p448
      // Predicated region
      $region9: #{tpu_custom_call.1} parent=5 // pred_check
        _
      $region10: #{tpu_custom_call.1} parent=5 // pred_check_branch
        %451 = sbr.rel (%p448) target = $region12
      $region11: #{tpu_custom_call.1} parent=5 // pred_region
        %s452 = ssub.s32 %s39, 1
        // Predicated region
        $region13: #{tpu_custom_call.1} parent=11 // pred_check
          %p453 = pneg %p412
        $region14: #{tpu_custom_call.1} parent=11 // pred_check_branch
          %455 = sbr.rel (%p453) target = $region16
        $region15: #{tpu_custom_call.1} parent=11 // pred_region
          %s457 = ssub.s32 16, 16
          %458 = vsyncadd [#allocation19], %s457
          %s460 = sshll.u32 [#allocation18], 4
          %s461 = int_to_ptr.vmem [resolvable:$true] %s460
          %463 = dma.hbm_to_vmem [thread:$0]  %s13, 16, %s461, [#allocation19]
        $region16: #{tpu_custom_call.1} parent=11 // pred_fallthru
          _
      $region12: #{tpu_custom_call.1} parent=5 // pred_fallthru
        _
      %p464 = scmp.lt.s32.totalorder %s39, 8
      // Predicated region
      $region17: #{tpu_custom_call.1} parent=5 // pred_check
        %p465 = pneg %p464
      $region18: #{tpu_custom_call.1} parent=5 // pred_check_branch
        %467 = sbr.rel (%p465) target = $region20
      $region19: #{tpu_custom_call.1} parent=5 // pred_region
        // Predicated region
        $region21: #{tpu_custom_call.1} parent=19 // pred_check
          %p468 = pneg %p71
        $region22: #{tpu_custom_call.1} parent=19 // pred_check_branch
          %470 = sbr.rel (%p468) target = $region24
        $region23: #{tpu_custom_call.1} parent=19 // pred_region
          %s471 = sand.u32 %s61, 1
          %s472 = scalar_lea.sflag [#allocation4], %s471
          %s473 = sand.u32 %s61, 1
          %s474 = smul.addr %s473, 32
          %s475 = scalar_lea.vmem [#allocation3], %s474
          %s476 = smul.u32 8, %s46
          %s478 = ssub.s32 512, 512
          %479 = vsyncadd %s472, %s478
          %s480 = smul.addr %s476, 64
          %s481 = scalar_lea.hbm %s0, %s480
          %s482 = sshll.u32 %s475, 4
          %s483 = int_to_ptr.vmem [resolvable:$true] %s482
          %488 = dma.hbm_to_vmem [thread:$0]  %s481, 512, %s483, %s472, 64, 64, 4
        $region24: #{tpu_custom_call.1} parent=19 // pred_fallthru
          _
        // Predicated region
        $region25: #{tpu_custom_call.1} parent=19 // pred_check
          %p489 = pneg %p97
        $region26: #{tpu_custom_call.1} parent=19 // pred_check_branch
          %491 = sbr.rel (%p489) target = $region28
        $region27: #{tpu_custom_call.1} parent=19 // pred_region
          %s492 = sand.u32 %s39, 1
          %s493 = scalar_lea.sflag [#allocation7], %s492
          %s494 = sand.u32 %s87, 1
          %s495 = smul.addr %s494, 32
          %s496 = scalar_lea.vmem [#allocation6], %s495
          %s497 = smul.u32 8, %s46
          %s499 = ssub.s32 512, 512
          %500 = vsyncadd %s493, %s499
          %s501 = smul.addr %s497, 64
          %s502 = scalar_lea.hbm %s1, %s501
          %s503 = sshll.u32 %s496, 4
          %s504 = int_to_ptr.vmem [resolvable:$true] %s503
          %509 = dma.hbm_to_vmem [thread:$0]  %s502, 512, %s504, %s493, 64, 64, 4
        $region28: #{tpu_custom_call.1} parent=19 // pred_fallthru
          _
        // Predicated region
        $region29: #{tpu_custom_call.1} parent=19 // pred_check
          %p510 = pneg %p123
        $region30: #{tpu_custom_call.1} parent=19 // pred_check_branch
          %512 = sbr.rel (%p510) target = $region32
        $region31: #{tpu_custom_call.1} parent=19 // pred_region
          %s513 = sand.u32 %s39, 1
          %s514 = scalar_lea.sflag [#allocation7], %s513
          %s515 = sand.u32 %s113, 1
          %s516 = smul.addr %s515, 32
          %s517 = scalar_lea.vmem [#allocation8], %s516
          %s518 = smul.u32 8, %s46
          %s520 = ssub.s32 512, 512
          %521 = vsyncadd %s514, %s520
          %s522 = smul.addr %s518, 64
          %s523 = scalar_lea.hbm %s2, %s522
          %s524 = sshll.u32 %s517, 4
          %s525 = int_to_ptr.vmem [resolvable:$true] %s524
          %530 = dma.hbm_to_vmem [thread:$0]  %s523, 512, %s525, %s514, 64, 64, 4
        $region32: #{tpu_custom_call.1} parent=19 // pred_fallthru
          _
        // Predicated region
        $region33: #{tpu_custom_call.1} parent=19 // pred_check
          %p531 = pneg %p151
        $region34: #{tpu_custom_call.1} parent=19 // pred_check_branch
          %533 = sbr.rel (%p531) target = $region36
        $region35: #{tpu_custom_call.1} parent=19 // pred_region
          #allocation22 [shape = 'u32[6]{0}', space=smem, size = 0x18, scoped, tag = 'DMA stride descriptor']
          %s534 = sand.u32 %s39, 1
          %s535 = scalar_lea.sflag [#allocation10], %s534
          %s536 = sand.u32 %s141, 1
          %s537 = smul.addr %s536, 512
          %s538 = scalar_lea.vmem [#allocation9], %s537
          %s539 = smul.u32 4, %s46
          %s541 = ssub.s32 8192, 8192
          %542 = vsyncadd %s535, %s541
          %s543 = smul.addr %s47, 32
          %s544 = smul.addr %s539, 128
          %s545 = sadd.s32 %s543, %s544
          %s546 = smul.addr %s545, 64
          %s547 = scalar_lea.hbm %s3, %s546
          %s549 = sshll.u32 1, 14
          %s550 = sxor.u32 4294967295, %s549
          %s552 = sld [smem:[#allocation0]]
          %s553 = sadd.s32 2, %s552
          %s555 = sshll.u32 7, 26
          %s556 = sxor.u32 4294967295, %s555
          %s557 = sand.u32 0, %s556
          %s558 = sshll.u32 %s553, 26
          %s559 = sor.u32 %s557, %s558
          %s560 = sshll.u32 %s538, 4
          %s561 = int_to_ptr.vmem [resolvable:$true] %s560
          %567 = sst [smem:[#allocation22]] 8192
          %s568 = scalar_lea.smem [#allocation22], 1
          %569 = sst [smem:[%s568]] 2048
          %s570 = scalar_lea.smem [#allocation22], 2
          %571 = sst [smem:[%s570]] 32
          %s572 = scalar_lea.smem [#allocation22], 3
          %573 = sst [smem:[%s572]] 64
          %s574 = scalar_lea.smem [#allocation22], 4
          %575 = sst [smem:[%s574]] 64
          %s576 = scalar_lea.smem [#allocation22], 5
          %577 = sst [smem:[%s576]] 4
          %579 = dma.general %s547, 8192, %s561, %s535, [#allocation21], [#allocation22], %s559, 0
        $region36: #{tpu_custom_call.1} parent=19 // pred_fallthru
          _
        // Predicated region
        $region37: #{tpu_custom_call.1} parent=19 // pred_check
          %p580 = pneg %p177
        $region38: #{tpu_custom_call.1} parent=19 // pred_check_branch
          %582 = sbr.rel (%p580) target = $region40
        $region39: #{tpu_custom_call.1} parent=19 // pred_region
          %p583 = scmp.lt.s32.totalorder %s47, 3
          %s584 = scalar_select %p583, %s47, 3
          %s585 = smul.addr %s584, 16
          %s586 = smul.addr %s585, 4
          %s587 = scalar_lea.vmem %s4, %s586
        $region40: #{tpu_custom_call.1} parent=19 // pred_fallthru
          _
        // Predicated region
        $region41: #{tpu_custom_call.1} parent=19 // pred_check
          %p588 = pneg %p203
        $region42: #{tpu_custom_call.1} parent=19 // pred_check_branch
          %590 = sbr.rel (%p588) target = $region44
        $region43: #{tpu_custom_call.1} parent=19 // pred_region
          %s591 = sand.u32 %s39, 1
          %s592 = scalar_lea.sflag [#allocation10], %s591
          %s593 = sand.u32 %s193, 1
          %s594 = scalar_lea.vmem [#allocation11], %s593
          %s596 = ssub.s32 16, 16
          %597 = vsyncadd %s592, %s596
          %s598 = smul.addr %s47, 16
          %s599 = scalar_lea.hbm %s5, %s598
          %s601 = sshll.u32 %s594, 4
          %s602 = int_to_ptr.vmem [resolvable:$true] %s601
          %604 = dma.hbm_to_vmem [thread:$0]  %s599, 16, %s602, %s592
        $region44: #{tpu_custom_call.1} parent=19 // pred_fallthru
          _
        // Predicated region
        $region45: #{tpu_custom_call.1} parent=19 // pred_check
          %p605 = pneg %p229
        $region46: #{tpu_custom_call.1} parent=19 // pred_check_branch
          %607 = sbr.rel (%p605) target = $region48
        $region47: #{tpu_custom_call.1} parent=19 // pred_region
          %p608 = scmp.lt.s32.totalorder %s47, 3
          %s609 = scalar_select %p608, %s47, 3
          %s610 = smul.addr %s609, 16
          %s611 = smul.addr %s610, 4
          %s612 = scalar_lea.vmem %s6, %s611
        $region48: #{tpu_custom_call.1} parent=19 // pred_fallthru
          _
        // Predicated region
        $region49: #{tpu_custom_call.1} parent=19 // pred_check
          %p613 = pneg %p255
        $region50: #{tpu_custom_call.1} parent=19 // pred_check_branch
          %615 = sbr.rel (%p613) target = $region52
        $region51: #{tpu_custom_call.1} parent=19 // pred_region
          %s616 = sand.u32 %s39, 1
          %s617 = scalar_lea.sflag [#allocation13], %s616
          %s618 = sand.u32 %s245, 1
          %s619 = scalar_lea.vmem [#allocation12], %s618
          %s621 = ssub.s32 16, 16
          %622 = vsyncadd %s617, %s621
          %s623 = smul.addr %s47, 16
          %s624 = scalar_lea.hbm %s7, %s623
          %s626 = sshll.u32 %s619, 4
          %s627 = int_to_ptr.vmem [resolvable:$true] %s626
          %629 = dma.hbm_to_vmem [thread:$0]  %s624, 16, %s627, %s617
        $region52: #{tpu_custom_call.1} parent=19 // pred_fallthru
          _
        // Predicated region
        $region53: #{tpu_custom_call.1} parent=19 // pred_check
          %p630 = pneg %p281
        $region54: #{tpu_custom_call.1} parent=19 // pred_check_branch
          %632 = sbr.rel (%p630) target = $region56
        $region55: #{tpu_custom_call.1} parent=19 // pred_region
          %p633 = scmp.lt.s32.totalorder %s47, 3
          %s634 = scalar_select %p633, %s47, 3
          %s635 = smul.addr %s634, 16
          %s636 = smul.addr %s635, 4
          %s637 = scalar_lea.vmem %s8, %s636
        $region56: #{tpu_custom_call.1} parent=19 // pred_fallthru
          _
        // Predicated region
        $region57: #{tpu_custom_call.1} parent=19 // pred_check
          %p638 = pneg %p307
        $region58: #{tpu_custom_call.1} parent=19 // pred_check_branch
          %640 = sbr.rel (%p638) target = $region60
        $region59: #{tpu_custom_call.1} parent=19 // pred_region
          %s641 = sand.u32 %s39, 1
          %s642 = scalar_lea.sflag [#allocation13], %s641
          %s643 = sand.u32 %s297, 1
          %s644 = scalar_lea.vmem [#allocation14], %s643
          %s646 = ssub.s32 16, 16
          %647 = vsyncadd %s642, %s646
          %s648 = smul.addr %s47, 16
          %s649 = scalar_lea.hbm %s9, %s648
          %s651 = sshll.u32 %s644, 4
          %s652 = int_to_ptr.vmem [resolvable:$true] %s651
          %654 = dma.hbm_to_vmem [thread:$0]  %s649, 16, %s652, %s642
        $region60: #{tpu_custom_call.1} parent=19 // pred_fallthru
          _
        // Predicated region
        $region61: #{tpu_custom_call.1} parent=19 // pred_check
          %p655 = pneg %p333
        $region62: #{tpu_custom_call.1} parent=19 // pred_check_branch
          %657 = sbr.rel (%p655) target = $region64
        $region63: #{tpu_custom_call.1} parent=19 // pred_region
          %p658 = scmp.lt.s32.totalorder %s47, 3
          %s659 = scalar_select %p658, %s47, 3
          %s660 = smul.addr %s659, 16
          %s661 = smul.addr %s660, 4
          %s662 = scalar_lea.vmem %s10, %s661
        $region64: #{tpu_custom_call.1} parent=19 // pred_fallthru
          _
        // Predicated region
        $region65: #{tpu_custom_call.1} parent=19 // pred_check
          %p663 = pneg %p359
        $region66: #{tpu_custom_call.1} parent=19 // pred_check_branch
          %665 = sbr.rel (%p663) target = $region68
        $region67: #{tpu_custom_call.1} parent=19 // pred_region
          %s666 = sand.u32 %s39, 1
          %s667 = scalar_lea.sflag [#allocation16], %s666
          %s668 = sand.u32 %s349, 1
          %s669 = scalar_lea.vmem [#allocation15], %s668
          %s671 = ssub.s32 16, 16
          %672 = vsyncadd %s667, %s671
          %s673 = smul.addr %s47, 16
          %s674 = scalar_lea.hbm %s11, %s673
          %s676 = sshll.u32 %s669, 4
          %s677 = int_to_ptr.vmem [resolvable:$true] %s676
          %679 = dma.hbm_to_vmem [thread:$0]  %s674, 16, %s677, %s667
        $region68: #{tpu_custom_call.1} parent=19 // pred_fallthru
          _
        // Predicated region
        $region69: #{tpu_custom_call.1} parent=19 // pred_check
          %p680 = pneg %p385
        $region70: #{tpu_custom_call.1} parent=19 // pred_check_branch
          %682 = sbr.rel (%p680) target = $region72
        $region71: #{tpu_custom_call.1} parent=19 // pred_region
          %s683 = sand.u32 %s39, 1
          %s684 = scalar_lea.sflag [#allocation16], %s683
          %s685 = sand.u32 %s375, 1
          %s686 = smul.addr %s685, 16
          %s687 = scalar_lea.vmem [#allocation17], %s686
          %s689 = ssub.s32 256, 256
          %690 = vsyncadd %s684, %s689
          %s691 = smul.addr %s47, 4
          %s692 = smul.addr %s691, 64
          %s693 = scalar_lea.hbm %s12, %s692
          %s694 = sshll.u32 %s687, 4
          %s695 = int_to_ptr.vmem [resolvable:$true] %s694
          %700 = dma.hbm_to_vmem [thread:$0]  %s693, 256, %s695, %s684, 64, 64, 4
        $region72: #{tpu_custom_call.1} parent=19 // pred_fallthru
          _
      $region20: #{tpu_custom_call.1} parent=5 // pred_fallthru
        _
      %p701 = scmp.le.s32.totalorder 1, %s39
      %p702 = scmp.lt.s32.totalorder %s39, 9
      %p703 = pnand %p701, %p702
      %p704 = pneg %p703
      // Predicated region
      $region73: #{tpu_custom_call.1} parent=5 // pred_check
        _
      $region74: #{tpu_custom_call.1} parent=5 // pred_check_branch
        %706 = sbr.rel (%p703) target = $region76
      $region75: #{tpu_custom_call.1} parent=5 // pred_region
        %s707 = ssub.s32 %s39, 1
        %s708 = sand.u32 %s64, 1
        %s709 = scalar_lea.sflag [#allocation4], %s708
        %s710 = sand.u32 %s64, 1
        %s711 = smul.addr %s710, 32
        %s712 = scalar_lea.vmem [#allocation3], %s711
        // Predicated region
        $region77: #{tpu_custom_call.1} parent=75 // pred_check
          %p713 = pneg %p77
        $region78: #{tpu_custom_call.1} parent=75 // pred_check_branch
          %715 = sbr.rel (%p713) target = $region80
        $region79: #{tpu_custom_call.1} parent=75 // pred_region
          %716 = dma.done %s709, 512
        $region80: #{tpu_custom_call.1} parent=75 // pred_fallthru
          _
        %s717 = sand.u32 %s44, 1
        %s718 = scalar_lea.sflag [#allocation7], %s717
        %s719 = sand.u32 %s90, 1
        %s720 = smul.addr %s719, 32
        %s721 = scalar_lea.vmem [#allocation6], %s720
        // Predicated region
        $region81: #{tpu_custom_call.1} parent=75 // pred_check
          %p722 = pneg %p103
        $region82: #{tpu_custom_call.1} parent=75 // pred_check_branch
          %724 = sbr.rel (%p722) target = $region84
        $region83: #{tpu_custom_call.1} parent=75 // pred_region
          %725 = dma.done %s718, 512
        $region84: #{tpu_custom_call.1} parent=75 // pred_fallthru
          _
        %s726 = sand.u32 %s44, 1
        %s727 = scalar_lea.sflag [#allocation7], %s726
        %s728 = sand.u32 %s116, 1
        %s729 = smul.addr %s728, 32
        %s730 = scalar_lea.vmem [#allocation8], %s729
        // Predicated region
        $region85: #{tpu_custom_call.1} parent=75 // pred_check
          %p731 = pneg %p129
        $region86: #{tpu_custom_call.1} parent=75 // pred_check_branch
          %733 = sbr.rel (%p731) target = $region88
        $region87: #{tpu_custom_call.1} parent=75 // pred_region
          %734 = dma.done %s727, 512
        $region88: #{tpu_custom_call.1} parent=75 // pred_fallthru
          _
        %s735 = sand.u32 %s44, 1
        %s736 = scalar_lea.sflag [#allocation10], %s735
        %s737 = sand.u32 %s144, 1
        %s738 = smul.addr %s737, 512
        %s739 = scalar_lea.vmem [#allocation9], %s738
        // Predicated region
        $region89: #{tpu_custom_call.1} parent=75 // pred_check
          %p740 = pneg %p157
        $region90: #{tpu_custom_call.1} parent=75 // pred_check_branch
          %742 = sbr.rel (%p740) target = $region92
        $region91: #{tpu_custom_call.1} parent=75 // pred_region
          %743 = dma.done %s736, 8192
        $region92: #{tpu_custom_call.1} parent=75 // pred_fallthru
          _
        %s744 = sand.u32 %s44, 1
        %s745 = scalar_lea.sflag [#allocation10], %s744
        %s746 = sand.u32 %s196, 1
        %s747 = scalar_lea.vmem [#allocation11], %s746
        // Predicated region
        $region93: #{tpu_custom_call.1} parent=75 // pred_check
          %p748 = pneg %p209
        $region94: #{tpu_custom_call.1} parent=75 // pred_check_branch
          %750 = sbr.rel (%p748) target = $region96
        $region95: #{tpu_custom_call.1} parent=75 // pred_region
          %751 = dma.done %s745, 16
        $region96: #{tpu_custom_call.1} parent=75 // pred_fallthru
          _
        %s752 = sand.u32 %s44, 1
        %s753 = scalar_lea.sflag [#allocation13], %s752
        %s754 = sand.u32 %s248, 1
        %s755 = scalar_lea.vmem [#allocation12], %s754
        // Predicated region
        $region97: #{tpu_custom_call.1} parent=75 // pred_check
          %p756 = pneg %p261
        $region98: #{tpu_custom_call.1} parent=75 // pred_check_branch
          %758 = sbr.rel (%p756) target = $region100
        $region99: #{tpu_custom_call.1} parent=75 // pred_region
          %759 = dma.done %s753, 16
        $region100: #{tpu_custom_call.1} parent=75 // pred_fallthru
          _
        %s760 = sand.u32 %s44, 1
        %s761 = scalar_lea.sflag [#allocation13], %s760
        %s762 = sand.u32 %s300, 1
        %s763 = scalar_lea.vmem [#allocation14], %s762
        // Predicated region
        $region101: #{tpu_custom_call.1} parent=75 // pred_check
          %p764 = pneg %p313
        $region102: #{tpu_custom_call.1} parent=75 // pred_check_branch
          %766 = sbr.rel (%p764) target = $region104
        $region103: #{tpu_custom_call.1} parent=75 // pred_region
          %767 = dma.done %s761, 16
        $region104: #{tpu_custom_call.1} parent=75 // pred_fallthru
          _
        %s768 = sand.u32 %s44, 1
        %s769 = scalar_lea.sflag [#allocation16], %s768
        %s770 = sand.u32 %s352, 1
        %s771 = scalar_lea.vmem [#allocation15], %s770
        // Predicated region
        $region105: #{tpu_custom_call.1} parent=75 // pred_check
          %p772 = pneg %p365
        $region106: #{tpu_custom_call.1} parent=75 // pred_check_branch
          %774 = sbr.rel (%p772) target = $region108
        $region107: #{tpu_custom_call.1} parent=75 // pred_region
          %775 = dma.done %s769, 16
        $region108: #{tpu_custom_call.1} parent=75 // pred_fallthru
          _
        %s776 = sand.u32 %s44, 1
        %s777 = scalar_lea.sflag [#allocation16], %s776
        %s778 = sand.u32 %s378, 1
        %s779 = smul.addr %s778, 16
        %s780 = scalar_lea.vmem [#allocation17], %s779
        // Predicated region
        $region109: #{tpu_custom_call.1} parent=75 // pred_check
          %p781 = pneg %p391
        $region110: #{tpu_custom_call.1} parent=75 // pred_check_branch
          %783 = sbr.rel (%p781) target = $region112
        $region111: #{tpu_custom_call.1} parent=75 // pred_region
          %784 = dma.done %s777, 256
        $region112: #{tpu_custom_call.1} parent=75 // pred_fallthru
          _
        // Predicated region
        $region113: #{tpu_custom_call.1} parent=75 // pred_check
          %p785 = pneg %p412
        $region114: #{tpu_custom_call.1} parent=75 // pred_check_branch
          %787 = sbr.rel (%p785) target = $region116
        $region115: #{tpu_custom_call.1} parent=75 // pred_region
          %788 = dma.done [#allocation19], 16
        $region116: #{tpu_custom_call.1} parent=75 // pred_fallthru
          _
        %s789 = sand.u32 %s64, 1
        %s790 = scalar_lea.sflag [#allocation4], %s789
        %s791 = sand.u32 %s64, 1
        %s792 = smul.addr %s791, 32
        %s793 = scalar_lea.vmem [#allocation3], %s792
        %p794 = pneg %p77
        %p795 = pneg %p74
        %s796 = sand.u32 %s44, 1
        %s797 = scalar_lea.sflag [#allocation7], %s796
        %s798 = sand.u32 %s90, 1
        %s799 = smul.addr %s798, 32
        %s800 = scalar_lea.vmem [#allocation6], %s799
        %p801 = pneg %p103
        %p802 = pneg %p100
        %s803 = sand.u32 %s44, 1
        %s804 = scalar_lea.sflag [#allocation7], %s803
        %s805 = sand.u32 %s116, 1
        %s806 = smul.addr %s805, 32
        %s807 = scalar_lea.vmem [#allocation8], %s806
        %p808 = pneg %p129
        %p809 = pneg %p126
        %s810 = sand.u32 %s44, 1
        %s811 = scalar_lea.sflag [#allocation10], %s810
        %s812 = sand.u32 %s144, 1
        %s813 = smul.addr %s812, 512
        %s814 = scalar_lea.vmem [#allocation9], %s813
        %p815 = pneg %p157
        %p816 = pneg %p154
        %p817 = scmp.lt.s32.totalorder %s49, 3
        %s818 = scalar_select %p817, %s49, 3
        %s819 = smul.addr %s818, 16
        %s820 = smul.addr %s819, 4
        %s821 = scalar_lea.vmem %s4, %s820
        %p822 = pneg %p183
        %p823 = pneg %p180
        %s824 = sand.u32 %s44, 1
        %s825 = scalar_lea.sflag [#allocation10], %s824
        %s826 = sand.u32 %s196, 1
        %s827 = scalar_lea.vmem [#allocation11], %s826
        %p828 = pneg %p209
        %p829 = pneg %p206
        %p830 = scmp.lt.s32.totalorder %s49, 3
        %s831 = scalar_select %p830, %s49, 3
        %s832 = smul.addr %s831, 16
        %s833 = smul.addr %s832, 4
        %s834 = scalar_lea.vmem %s6, %s833
        %p835 = pneg %p235
        %p836 = pneg %p232
        %s837 = sand.u32 %s44, 1
        %s838 = scalar_lea.sflag [#allocation13], %s837
        %s839 = sand.u32 %s248, 1
        %s840 = scalar_lea.vmem [#allocation12], %s839
        %p841 = pneg %p261
        %p842 = pneg %p258
        %p843 = scmp.lt.s32.totalorder %s49, 3
        %s844 = scalar_select %p843, %s49, 3
        %s845 = smul.addr %s844, 16
        %s846 = smul.addr %s845, 4
        %s847 = scalar_lea.vmem %s8, %s846
        %p848 = pneg %p287
        %p849 = pneg %p284
        %s850 = sand.u32 %s44, 1
        %s851 = scalar_lea.sflag [#allocation13], %s850
        %s852 = sand.u32 %s300, 1
        %s853 = scalar_lea.vmem [#allocation14], %s852
        %p854 = pneg %p313
        %p855 = pneg %p310
        %p856 = scmp.lt.s32.totalorder %s49, 3
        %s857 = scalar_select %p856, %s49, 3
        %s858 = smul.addr %s857, 16
        %s859 = smul.addr %s858, 4
        %s860 = scalar_lea.vmem %s10, %s859
        %p861 = pneg %p339
        %p862 = pneg %p336
        %s863 = sand.u32 %s44, 1
        %s864 = scalar_lea.sflag [#allocation16], %s863
        %s865 = sand.u32 %s352, 1
        %s866 = scalar_lea.vmem [#allocation15], %s865
        %p867 = pneg %p365
        %p868 = pneg %p362
        %s869 = sand.u32 %s44, 1
        %s870 = scalar_lea.sflag [#allocation16], %s869
        %s871 = sand.u32 %s378, 1
        %s872 = smul.addr %s871, 16
        %s873 = scalar_lea.vmem [#allocation17], %s872
        %p874 = pneg %p391
        %p875 = pneg %p388
        %p876 = pneg %p412
        %p877 = pneg %p409
        %p878 = pneg %p438
        %p879 = pneg %p435
        %s880 = sand.u32 %s425, 1
        %s881 = scalar_lea.sflag [#allocation5], %s880
        %s882 = sand.u32 %s425, 1
        %s883 = smul.addr %s882, 64
        %s884 = scalar_lea.vmem [#allocation20], %s883
        %s885 = smul.u32 8, %s48
        %s886 = smul.u32 8, %s48
        %s887 = smul.u32 8, %s48
        %s888 = smul.u32 4, %s48
        %p889 = scmp.lt.s32.totalorder %s49, 3
        %s890 = scalar_select %p889, %s49, 3
        %s891 = smul.addr %s890, 16
        %s892 = smul.addr %s891, 4
        %s893 = scalar_lea.vmem %s4, %s892
        %p894 = scmp.lt.s32.totalorder %s49, 3
        %s895 = scalar_select %p894, %s49, 3
        %s896 = smul.addr %s895, 16
        %s897 = smul.addr %s896, 4
        %s898 = scalar_lea.vmem %s6, %s897
        %p899 = scmp.lt.s32.totalorder %s49, 3
        %s900 = scalar_select %p899, %s49, 3
        %s901 = smul.addr %s900, 16
        %s902 = smul.addr %s901, 4
        %s903 = scalar_lea.vmem %s8, %s902
        %p904 = scmp.lt.s32.totalorder %s49, 3
        %s905 = scalar_select %p904, %s49, 3
        %s906 = smul.addr %s905, 16
        %s907 = smul.addr %s906, 4
        %s908 = scalar_lea.vmem %s10, %s907
        %s909 = smul.u32 8, %s48
        %p911 = scmp.eq.s32.totalorder %s49, 0
        // Predicated region
        $region117: #{tpu_custom_call.1} parent=75 // pred_check
          %p912 = pneg %p911
        $region118: #{tpu_custom_call.1} parent=75 // pred_check_branch
          %914 = sbr.rel (%p912) target = $region120
        $region119: #{tpu_custom_call.1} parent=75 // pred_region
          %915 = vst [vmem:[#allocation2] sm:$0xff] 0.0
          %916 = vst [vmem:[#allocation2 + $0x8] sm:$0xff] 0.0
          %917 = vst [vmem:[#allocation2 + $0x10] sm:$0xff] 0.0
          %918 = vst [vmem:[#allocation2 + $0x18] sm:$0xff] 0.0
          %919 = vst [vmem:[#allocation2 + $0x20] sm:$0xff] 0.0
          %920 = vst [vmem:[#allocation2 + $0x28] sm:$0xff] 0.0
          %921 = vst [vmem:[#allocation2 + $0x30] sm:$0xff] 0.0
          %922 = vst [vmem:[#allocation2 + $0x38] sm:$0xff] 0.0
        $region120: #{tpu_custom_call.1} parent=75 // pred_fallthru
          _
        %v923 = vld [vmem:[%s712] sm:$0xf]
        %v924 = vld [vmem:[%s712 + $0x4] sm:$0xf]
        %v925 = vld [vmem:[%s712 + $0x8] sm:$0xf]
        %v926 = vld [vmem:[%s712 + $0xc] sm:$0xf]
        %v927 = vld [vmem:[%s712 + $0x10] sm:$0xf]
        %v928 = vld [vmem:[%s712 + $0x14] sm:$0xf]
        %v929 = vld [vmem:[%s712 + $0x18] sm:$0xf]
        %v930 = vld [vmem:[%s712 + $0x1c] sm:$0xf]
        %v931 = vld [vmem:[%s721] sm:$0xf]
        %v932 = vld [vmem:[%s721 + $0x4] sm:$0xf]
        %v933 = vld [vmem:[%s721 + $0x8] sm:$0xf]
        %v934 = vld [vmem:[%s721 + $0xc] sm:$0xf]
        %v935 = vld [vmem:[%s721 + $0x10] sm:$0xf]
        %v936 = vld [vmem:[%s721 + $0x14] sm:$0xf]
        %v937 = vld [vmem:[%s721 + $0x18] sm:$0xf]
        %v938 = vld [vmem:[%s721 + $0x1c] sm:$0xf]
        %v939 = vld [vmem:[%s730] sm:$0xf]
        %v940 = vld [vmem:[%s730 + $0x4] sm:$0xf]
        %v941 = vld [vmem:[%s730 + $0x8] sm:$0xf]
        %v942 = vld [vmem:[%s730 + $0xc] sm:$0xf]
        %v943 = vld [vmem:[%s730 + $0x10] sm:$0xf]
        %v944 = vld [vmem:[%s730 + $0x14] sm:$0xf]
        %v945 = vld [vmem:[%s730 + $0x18] sm:$0xf]
        %v946 = vld [vmem:[%s730 + $0x1c] sm:$0xf]
        %v947 = vld [vmem:[%s893] sm:$0xf]
        %v948 = vld [vmem:[%s893 + $0x4] sm:$0xf]
        %v949 = vld [vmem:[%s893 + $0x8] sm:$0xf]
        %v950 = vld [vmem:[%s893 + $0xc] sm:$0xf]
        %v951 = vld [vmem:[%s893 + $0x10] sm:$0xf]
        %v952 = vld [vmem:[%s893 + $0x14] sm:$0xf]
        %v953 = vld [vmem:[%s893 + $0x18] sm:$0xf]
        %v954 = vld [vmem:[%s893 + $0x1c] sm:$0xf]
        %v955 = vld [vmem:[%s893 + $0x20] sm:$0xf]
        %v956 = vld [vmem:[%s893 + $0x24] sm:$0xf]
        %v957 = vld [vmem:[%s893 + $0x28] sm:$0xf]
        %v958 = vld [vmem:[%s893 + $0x2c] sm:$0xf]
        %v959 = vld [vmem:[%s893 + $0x30] sm:$0xf]
        %v960 = vld [vmem:[%s893 + $0x34] sm:$0xf]
        %v961 = vld [vmem:[%s893 + $0x38] sm:$0xf]
        %v962 = vld [vmem:[%s893 + $0x3c] sm:$0xf]
        %v963 = vld [vmem:[%s747] sm:$0x1]
        %v965 = vlaneseq
        %v966 = vshrl.u32 %v965, 7
        %v967 = vsub.s32 0, %v966
        %v968 = vrot.slane %v963, %v967
        %v978 = vunpack.c.l.b16 %v923
        %v979 = vunpack.c.l.b16 %v924
        %v980 = vunpack.c.l.b16 %v925
        %v981 = vunpack.c.l.b16 %v926
        %v982 = vunpack.c.l.b16 %v927
        %v983 = vunpack.c.l.b16 %v928
        %v984 = vunpack.c.l.b16 %v929
        %v985 = vunpack.c.l.b16 %v930
        %v986 = vpack.c.b16 %v979, %v978
        %v987 = vpack.c.b16 %v981, %v980
        %v988 = vpack.c.b16 %v983, %v982
        %v989 = vpack.c.b16 %v985, %v984
        %v1010 = vunpack.c.l.b16 %v947
        %v1011 = vunpack.c.l.b16 %v948
        %v1012 = vunpack.c.l.b16 %v949
        %v1013 = vunpack.c.l.b16 %v950
        %v1014 = vunpack.c.l.b16 %v951
        %v1015 = vunpack.c.l.b16 %v952
        %v1016 = vunpack.c.l.b16 %v953
        %v1017 = vunpack.c.l.b16 %v954
        %v1018 = vunpack.c.l.b16 %v955
        %v1019 = vunpack.c.l.b16 %v956
        %v1020 = vunpack.c.l.b16 %v957
        %v1021 = vunpack.c.l.b16 %v958
        %v1022 = vunpack.c.l.b16 %v959
        %v1023 = vunpack.c.l.b16 %v960
        %v1024 = vunpack.c.l.b16 %v961
        %v1025 = vunpack.c.l.b16 %v962
        %v1026 = vpack.c.b16 %v1011, %v1010
        %v1027 = vpack.c.b16 %v1013, %v1012
        %v1028 = vpack.c.b16 %v1015, %v1014
        %v1029 = vpack.c.b16 %v1017, %v1016
        %v1030 = vpack.c.b16 %v1019, %v1018
        %v1031 = vpack.c.b16 %v1021, %v1020
        %v1032 = vpack.c.b16 %v1023, %v1022
        %v1033 = vpack.c.b16 %v1025, %v1024
        %1042 = vmatprep.subr.bf16.mxu0 0
        %1043 = vmatpush1.bf16.msra.mxu0 %v1026
        %1044 = vmatprep.subr.bf16.mxu0 0
        %1045 = vmatpush1.bf16.msra.mxu0 %v1027
        %1046 = vmatprep.subr.bf16.mxu0 0
        %1047 = vmatpush1.bf16.msra.mxu0 %v1028
        %1048 = vmatprep.subr.bf16.mxu0 0
        %1049 = vmatpush1.bf16.msra.mxu0 %v1029
        %1050 = vmatprep.subr.bf16.mxu0 0
        %1051 = vmatpush1.bf16.msra.mxu0 %v1030
        %1052 = vmatprep.subr.bf16.mxu0 0
        %1053 = vmatpush1.bf16.msra.mxu0 %v1031
        %1054 = vmatprep.subr.bf16.mxu0 0
        %1055 = vmatpush1.bf16.msra.mxu0 %v1032
        %1056 = vmatprep.subr.bf16.mxu0 0
        %1057 = vmatpush1.bf16.msra.mxu0 %v1033
        %1058 = vmatprep.subr.bf16.mxu0 0
        %1059 = vmatpush1.bf16.msra.mxu0 0
        %1060 = vmatprep.subr.bf16.mxu0 0
        %1061 = vmatpush1.bf16.msra.mxu0 0
        %1062 = vmatprep.subr.bf16.mxu0 0
        %1063 = vmatpush1.bf16.msra.mxu0 0
        %1064 = vmatprep.subr.bf16.mxu0 0
        %1065 = vmatpush1.bf16.msra.mxu0 0
        %1066 = vmatprep.subr.bf16.mxu0 0
        %1067 = vmatpush1.bf16.msra.mxu0 0
        %1068 = vmatprep.subr.bf16.mxu0 0
        %1069 = vmatpush1.bf16.msra.mxu0 0
        %1070 = vmatprep.subr.bf16.mxu0 0
        %1071 = vmatpush1.bf16.msra.mxu0 0
        %1072 = vmatprep.subr.bf16.mxu0 0
        %1073 = vmatpush1.bf16.msra.mxu0 0
        %1074 = vmatprep.mubr.bf16.mxu0 0
        %1075 = vmatmul.mubr.bf16.gmra.mrb[0].mxu0 %v986
        %v1076 = vpop.f32.mrb[0].mxu0
        %v1077 = vadd.f32 %v968, %v1076
        %v1078 = vpop.f32.mrb[0].mxu0
        %v1079 = vpop.f32.mrb[0].mxu0
        %v1080 = vadd.f32 %v968, %v1079
        %v1081 = vpop.f32.mrb[0].mxu0
        %1082 = vmatprep.mubr.bf16.mxu0 0
        %1083 = vmatmul.mubr.bf16.gmra.mrb[0].mxu0 %v987
        %v1084 = vpop.f32.mrb[0].mxu0
        %v1085 = vadd.f32 %v968, %v1084
        %v1086 = vpop.f32.mrb[0].mxu0
        %v1087 = vpop.f32.mrb[0].mxu0
        %v1088 = vadd.f32 %v968, %v1087
        %v1089 = vpop.f32.mrb[0].mxu0
        %1090 = vmatprep.mubr.bf16.mxu0 0
        %1091 = vmatmul.mubr.bf16.gmra.mrb[0].mxu0 %v988
        %v1092 = vpop.f32.mrb[0].mxu0
        %v1093 = vadd.f32 %v968, %v1092
        %v1094 = vpop.f32.mrb[0].mxu0
        %v1095 = vpop.f32.mrb[0].mxu0
        %v1096 = vadd.f32 %v968, %v1095
        %v1097 = vpop.f32.mrb[0].mxu0
        %1098 = vmatprep.mubr.bf16.mxu0 0
        %1099 = vmatmul.mubr.bf16.gmra.mrb[0].mxu0 %v989
        %v1100 = vpop.f32.mrb[0].mxu0
        %v1101 = vadd.f32 %v968, %v1100
        %v1102 = vpop.f32.mrb[0].mxu0
        %v1103 = vpop.f32.mrb[0].mxu0
        %v1104 = vadd.f32 %v968, %v1103
        %v1105 = vpop.f32.mrb[0].mxu0
        %1106 = vdwg.mxu0
        %v1107 = vld [vmem:[%s908] sm:$0xf]
        %v1108 = vld [vmem:[%s908 + $0x4] sm:$0xf]
        %v1109 = vld [vmem:[%s908 + $0x8] sm:$0xf]
        %v1110 = vld [vmem:[%s908 + $0xc] sm:$0xf]
        %v1111 = vld [vmem:[%s908 + $0x10] sm:$0xf]
        %v1112 = vld [vmem:[%s908 + $0x14] sm:$0xf]
        %v1113 = vld [vmem:[%s908 + $0x18] sm:$0xf]
        %v1114 = vld [vmem:[%s908 + $0x1c] sm:$0xf]
        %v1115 = vld [vmem:[%s908 + $0x20] sm:$0xf]
        %v1116 = vld [vmem:[%s908 + $0x24] sm:$0xf]
        %v1117 = vld [vmem:[%s908 + $0x28] sm:$0xf]
        %v1118 = vld [vmem:[%s908 + $0x2c] sm:$0xf]
        %v1119 = vld [vmem:[%s908 + $0x30] sm:$0xf]
        %v1120 = vld [vmem:[%s908 + $0x34] sm:$0xf]
        %v1121 = vld [vmem:[%s908 + $0x38] sm:$0xf]
        %v1122 = vld [vmem:[%s908 + $0x3c] sm:$0xf]
        %v1123 = vld [vmem:[%s771] sm:$0x1]
        %v1125 = vlaneseq
        %v1126 = vshrl.u32 %v1125, 7
        %v1127 = vsub.s32 0, %v1126
        %v1128 = vrot.slane %v1123, %v1127
        %v1146 = vunpack.c.l.b16 %v1107
        %v1147 = vunpack.c.l.b16 %v1108
        %v1148 = vunpack.c.l.b16 %v1109
        %v1149 = vunpack.c.l.b16 %v1110
        %v1150 = vunpack.c.l.b16 %v1111
        %v1151 = vunpack.c.l.b16 %v1112
        %v1152 = vunpack.c.l.b16 %v1113
        %v1153 = vunpack.c.l.b16 %v1114
        %v1154 = vunpack.c.l.b16 %v1115
        %v1155 = vunpack.c.l.b16 %v1116
        %v1156 = vunpack.c.l.b16 %v1117
        %v1157 = vunpack.c.l.b16 %v1118
        %v1158 = vunpack.c.l.b16 %v1119
        %v1159 = vunpack.c.l.b16 %v1120
        %v1160 = vunpack.c.l.b16 %v1121
        %v1161 = vunpack.c.l.b16 %v1122
        %v1162 = vpack.c.b16 %v1147, %v1146
        %v1163 = vpack.c.b16 %v1149, %v1148
        %v1164 = vpack.c.b16 %v1151, %v1150
        %v1165 = vpack.c.b16 %v1153, %v1152
        %v1166 = vpack.c.b16 %v1155, %v1154
        %v1167 = vpack.c.b16 %v1157, %v1156
        %v1168 = vpack.c.b16 %v1159, %v1158
        %v1169 = vpack.c.b16 %v1161, %v1160
        %1178 = vmatprep.subr.bf16.mxu0 0
        %1179 = vmatpush1.bf16.msra.mxu0 %v1162
        %1180 = vmatprep.subr.bf16.mxu0 0
        %1181 = vmatpush1.bf16.msra.mxu0 %v1163
        %1182 = vmatprep.subr.bf16.mxu0 0
        %1183 = vmatpush1.bf16.msra.mxu0 %v1164
        %1184 = vmatprep.subr.bf16.mxu0 0
        %1185 = vmatpush1.bf16.msra.mxu0 %v1165
        %1186 = vmatprep.subr.bf16.mxu0 0
        %1187 = vmatpush1.bf16.msra.mxu0 %v1166
        %1188 = vmatprep.subr.bf16.mxu0 0
        %1189 = vmatpush1.bf16.msra.mxu0 %v1167
        %1190 = vmatprep.subr.bf16.mxu0 0
        %1191 = vmatpush1.bf16.msra.mxu0 %v1168
        %1192 = vmatprep.subr.bf16.mxu0 0
        %1193 = vmatpush1.bf16.msra.mxu0 %v1169
        %1194 = vmatprep.subr.bf16.mxu0 0
        %1195 = vmatpush1.bf16.msra.mxu0 0
        %1196 = vmatprep.subr.bf16.mxu0 0
        %1197 = vmatpush1.bf16.msra.mxu0 0
        %1198 = vmatprep.subr.bf16.mxu0 0
        %1199 = vmatpush1.bf16.msra.mxu0 0
        %1200 = vmatprep.subr.bf16.mxu0 0
        %1201 = vmatpush1.bf16.msra.mxu0 0
        %1202 = vmatprep.subr.bf16.mxu0 0
        %1203 = vmatpush1.bf16.msra.mxu0 0
        %1204 = vmatprep.subr.bf16.mxu0 0
        %1205 = vmatpush1.bf16.msra.mxu0 0
        %1206 = vmatprep.subr.bf16.mxu0 0
        %1207 = vmatpush1.bf16.msra.mxu0 0
        %1208 = vmatprep.subr.bf16.mxu0 0
        %1209 = vmatpush1.bf16.msra.mxu0 0
        %1210 = vmatprep.mubr.bf16.mxu0 0
        %1211 = vmatmul.mubr.bf16.gmra.mrb[0].mxu0 %v986
        %v1212 = vpop.f32.mrb[0].mxu0
        %v1213 = vadd.f32 %v1128, %v1212
        %v1214 = vpop.f32.mrb[0].mxu0
        %v1215 = vpop.f32.mrb[0].mxu0
        %v1216 = vadd.f32 %v1128, %v1215
        %v1217 = vpop.f32.mrb[0].mxu0
        %1218 = vmatprep.mubr.bf16.mxu0 0
        %1219 = vmatmul.mubr.bf16.gmra.mrb[0].mxu0 %v987
        %v1220 = vpop.f32.mrb[0].mxu0
        %v1221 = vadd.f32 %v1128, %v1220
        %v1222 = vpop.f32.mrb[0].mxu0
        %v1223 = vpop.f32.mrb[0].mxu0
        %v1224 = vadd.f32 %v1128, %v1223
        %v1225 = vpop.f32.mrb[0].mxu0
        %1226 = vmatprep.mubr.bf16.mxu0 0
        %1227 = vmatmul.mubr.bf16.gmra.mrb[0].mxu0 %v988
        %v1228 = vpop.f32.mrb[0].mxu0
        %v1229 = vadd.f32 %v1128, %v1228
        %v1230 = vpop.f32.mrb[0].mxu0
        %v1231 = vpop.f32.mrb[0].mxu0
        %v1232 = vadd.f32 %v1128, %v1231
        %v1233 = vpop.f32.mrb[0].mxu0
        %1234 = vmatprep.mubr.bf16.mxu0 0
        %1235 = vmatmul.mubr.bf16.gmra.mrb[0].mxu0 %v989
        %v1236 = vpop.f32.mrb[0].mxu0
        %v1237 = vadd.f32 %v1128, %v1236
        %v1238 = vpop.f32.mrb[0].mxu0
        %v1239 = vpop.f32.mrb[0].mxu0
        %v1240 = vadd.f32 %v1128, %v1239
        %v1241 = vpop.f32.mrb[0].mxu0
        %1242 = vdwg.mxu0
        %v1243 = vld [vmem:[%s898] sm:$0xf]
        %v1244 = vld [vmem:[%s898 + $0x4] sm:$0xf]
        %v1245 = vld [vmem:[%s898 + $0x8] sm:$0xf]
        %v1246 = vld [vmem:[%s898 + $0xc] sm:$0xf]
        %v1247 = vld [vmem:[%s898 + $0x10] sm:$0xf]
        %v1248 = vld [vmem:[%s898 + $0x14] sm:$0xf]
        %v1249 = vld [vmem:[%s898 + $0x18] sm:$0xf]
        %v1250 = vld [vmem:[%s898 + $0x1c] sm:$0xf]
        %v1251 = vld [vmem:[%s898 + $0x20] sm:$0xf]
        %v1252 = vld [vmem:[%s898 + $0x24] sm:$0xf]
        %v1253 = vld [vmem:[%s898 + $0x28] sm:$0xf]
        %v1254 = vld [vmem:[%s898 + $0x2c] sm:$0xf]
        %v1255 = vld [vmem:[%s898 + $0x30] sm:$0xf]
        %v1256 = vld [vmem:[%s898 + $0x34] sm:$0xf]
        %v1257 = vld [vmem:[%s898 + $0x38] sm:$0xf]
        %v1258 = vld [vmem:[%s898 + $0x3c] sm:$0xf]
        %v1259 = vld [vmem:[%s755] sm:$0x1]
        %v1261 = vlaneseq
        %v1262 = vshrl.u32 %v1261, 7
        %v1263 = vsub.s32 0, %v1262
        %v1264 = vrot.slane %v1259, %v1263
        %v1274 = vunpack.c.l.b16 %v931
        %v1275 = vunpack.c.l.b16 %v932
        %v1276 = vunpack.c.l.b16 %v933
        %v1277 = vunpack.c.l.b16 %v934
        %v1278 = vunpack.c.l.b16 %v935
        %v1279 = vunpack.c.l.b16 %v936
        %v1280 = vunpack.c.l.b16 %v937
        %v1281 = vunpack.c.l.b16 %v938
        %v1282 = vpack.c.b16 %v1275, %v1274
        %v1283 = vpack.c.b16 %v1277, %v1276
        %v1284 = vpack.c.b16 %v1279, %v1278
        %v1285 = vpack.c.b16 %v1281, %v1280
        %v1306 = vunpack.c.l.b16 %v1243
        %v1307 = vunpack.c.l.b16 %v1244
        %v1308 = vunpack.c.l.b16 %v1245
        %v1309 = vunpack.c.l.b16 %v1246
        %v1310 = vunpack.c.l.b16 %v1247
        %v1311 = vunpack.c.l.b16 %v1248
        %v1312 = vunpack.c.l.b16 %v1249
        %v1313 = vunpack.c.l.b16 %v1250
        %v1314 = vunpack.c.l.b16 %v1251
        %v1315 = vunpack.c.l.b16 %v1252
        %v1316 = vunpack.c.l.b16 %v1253
        %v1317 = vunpack.c.l.b16 %v1254
        %v1318 = vunpack.c.l.b16 %v1255
        %v1319 = vunpack.c.l.b16 %v1256
        %v1320 = vunpack.c.l.b16 %v1257
        %v1321 = vunpack.c.l.b16 %v1258
        %v1322 = vpack.c.b16 %v1307, %v1306
        %v1323 = vpack.c.b16 %v1309, %v1308
        %v1324 = vpack.c.b16 %v1311, %v1310
        %v1325 = vpack.c.b16 %v1313, %v1312
        %v1326 = vpack.c.b16 %v1315, %v1314
        %v1327 = vpack.c.b16 %v1317, %v1316
        %v1328 = vpack.c.b16 %v1319, %v1318
        %v1329 = vpack.c.b16 %v1321, %v1320
        %1338 = vmatprep.subr.bf16.mxu0 0
        %1339 = vmatpush1.bf16.msra.mxu0 %v1322
        %1340 = vmatprep.subr.bf16.mxu0 0
        %1341 = vmatpush1.bf16.msra.mxu0 %v1323
        %1342 = vmatprep.subr.bf16.mxu0 0
        %1343 = vmatpush1.bf16.msra.mxu0 %v1324
        %1344 = vmatprep.subr.bf16.mxu0 0
        %1345 = vmatpush1.bf16.msra.mxu0 %v1325
        %1346 = vmatprep.subr.bf16.mxu0 0
        %1347 = vmatpush1.bf16.msra.mxu0 %v1326
        %1348 = vmatprep.subr.bf16.mxu0 0
        %1349 = vmatpush1.bf16.msra.mxu0 %v1327
        %1350 = vmatprep.subr.bf16.mxu0 0
        %1351 = vmatpush1.bf16.msra.mxu0 %v1328
        %1352 = vmatprep.subr.bf16.mxu0 0
        %1353 = vmatpush1.bf16.msra.mxu0 %v1329
        %1354 = vmatprep.subr.bf16.mxu0 0
        %1355 = vmatpush1.bf16.msra.mxu0 0
        %1356 = vmatprep.subr.bf16.mxu0 0
        %1357 = vmatpush1.bf16.msra.mxu0 0
        %1358 = vmatprep.subr.bf16.mxu0 0
        %1359 = vmatpush1.bf16.msra.mxu0 0
        %1360 = vmatprep.subr.bf16.mxu0 0
        %1361 = vmatpush1.bf16.msra.mxu0 0
        %1362 = vmatprep.subr.bf16.mxu0 0
        %1363 = vmatpush1.bf16.msra.mxu0 0
        %1364 = vmatprep.subr.bf16.mxu0 0
        %1365 = vmatpush1.bf16.msra.mxu0 0
        %1366 = vmatprep.subr.bf16.mxu0 0
        %1367 = vmatpush1.bf16.msra.mxu0 0
        %1368 = vmatprep.subr.bf16.mxu0 0
        %1369 = vmatpush1.bf16.msra.mxu0 0
        %1370 = vmatprep.mubr.bf16.mxu0 0
        %1371 = vmatmul.mubr.bf16.gmra.mrb[0].mxu0 %v1282
        %v1372 = vpop.f32.mrb[0].mxu0
        %v1373 = vadd.f32 %v1264, %v1372
        %v1374 = vpop.f32.mrb[0].mxu0
        %v1375 = vpop.f32.mrb[0].mxu0
        %v1376 = vadd.f32 %v1264, %v1375
        %v1377 = vpop.f32.mrb[0].mxu0
        %1378 = vmatprep.mubr.bf16.mxu0 0
        %1379 = vmatmul.mubr.bf16.gmra.mrb[0].mxu0 %v1283
        %v1380 = vpop.f32.mrb[0].mxu0
        %v1381 = vadd.f32 %v1264, %v1380
        %v1382 = vpop.f32.mrb[0].mxu0
        %v1383 = vpop.f32.mrb[0].mxu0
        %v1384 = vadd.f32 %v1264, %v1383
        %v1385 = vpop.f32.mrb[0].mxu0
        %1386 = vmatprep.mubr.bf16.mxu0 0
        %1387 = vmatmul.mubr.bf16.gmra.mrb[0].mxu0 %v1284
        %v1388 = vpop.f32.mrb[0].mxu0
        %v1389 = vadd.f32 %v1264, %v1388
        %v1390 = vpop.f32.mrb[0].mxu0
        %v1391 = vpop.f32.mrb[0].mxu0
        %v1392 = vadd.f32 %v1264, %v1391
        %v1393 = vpop.f32.mrb[0].mxu0
        %1394 = vmatprep.mubr.bf16.mxu0 0
        %1395 = vmatmul.mubr.bf16.gmra.mrb[0].mxu0 %v1285
        %v1396 = vpop.f32.mrb[0].mxu0
        %v1397 = vadd.f32 %v1264, %v1396
        %v1398 = vpop.f32.mrb[0].mxu0
        %v1399 = vpop.f32.mrb[0].mxu0
        %v1400 = vadd.f32 %v1264, %v1399
        %v1401 = vpop.f32.mrb[0].mxu0
        %1402 = vdwg.mxu0
        %v1403 = vld [vmem:[%s903] sm:$0xf]
        %v1404 = vld [vmem:[%s903 + $0x4] sm:$0xf]
        %v1405 = vld [vmem:[%s903 + $0x8] sm:$0xf]
        %v1406 = vld [vmem:[%s903 + $0xc] sm:$0xf]
        %v1407 = vld [vmem:[%s903 + $0x10] sm:$0xf]
        %v1408 = vld [vmem:[%s903 + $0x14] sm:$0xf]
        %v1409 = vld [vmem:[%s903 + $0x18] sm:$0xf]
        %v1410 = vld [vmem:[%s903 + $0x1c] sm:$0xf]
        %v1411 = vld [vmem:[%s903 + $0x20] sm:$0xf]
        %v1412 = vld [vmem:[%s903 + $0x24] sm:$0xf]
        %v1413 = vld [vmem:[%s903 + $0x28] sm:$0xf]
        %v1414 = vld [vmem:[%s903 + $0x2c] sm:$0xf]
        %v1415 = vld [vmem:[%s903 + $0x30] sm:$0xf]
        %v1416 = vld [vmem:[%s903 + $0x34] sm:$0xf]
        %v1417 = vld [vmem:[%s903 + $0x38] sm:$0xf]
        %v1418 = vld [vmem:[%s903 + $0x3c] sm:$0xf]
        %v1419 = vld [vmem:[%s763] sm:$0x1]
        %v1421 = vlaneseq
        %v1422 = vshrl.u32 %v1421, 7
        %v1423 = vsub.s32 0, %v1422
        %v1424 = vrot.slane %v1419, %v1423
        %v1434 = vunpack.c.l.b16 %v939
        %v1435 = vunpack.c.l.b16 %v940
        %v1436 = vunpack.c.l.b16 %v941
        %v1437 = vunpack.c.l.b16 %v942
        %v1438 = vunpack.c.l.b16 %v943
        %v1439 = vunpack.c.l.b16 %v944
        %v1440 = vunpack.c.l.b16 %v945
        %v1441 = vunpack.c.l.b16 %v946
        %v1442 = vpack.c.b16 %v1435, %v1434
        %v1443 = vpack.c.b16 %v1437, %v1436
        %v1444 = vpack.c.b16 %v1439, %v1438
        %v1445 = vpack.c.b16 %v1441, %v1440
        %v1466 = vunpack.c.l.b16 %v1403
        %v1467 = vunpack.c.l.b16 %v1404
        %v1468 = vunpack.c.l.b16 %v1405
        %v1469 = vunpack.c.l.b16 %v1406
        %v1470 = vunpack.c.l.b16 %v1407
        %v1471 = vunpack.c.l.b16 %v1408
        %v1472 = vunpack.c.l.b16 %v1409
        %v1473 = vunpack.c.l.b16 %v1410
        %v1474 = vunpack.c.l.b16 %v1411
        %v1475 = vunpack.c.l.b16 %v1412
        %v1476 = vunpack.c.l.b16 %v1413
        %v1477 = vunpack.c.l.b16 %v1414
        %v1478 = vunpack.c.l.b16 %v1415
        %v1479 = vunpack.c.l.b16 %v1416
        %v1480 = vunpack.c.l.b16 %v1417
        %v1481 = vunpack.c.l.b16 %v1418
        %v1482 = vpack.c.b16 %v1467, %v1466
        %v1483 = vpack.c.b16 %v1469, %v1468
        %v1484 = vpack.c.b16 %v1471, %v1470
        %v1485 = vpack.c.b16 %v1473, %v1472
        %v1486 = vpack.c.b16 %v1475, %v1474
        %v1487 = vpack.c.b16 %v1477, %v1476
        %v1488 = vpack.c.b16 %v1479, %v1478
        %v1489 = vpack.c.b16 %v1481, %v1480
        %1498 = vmatprep.subr.bf16.mxu0 0
        %1499 = vmatpush1.bf16.msra.mxu0 %v1482
        %1500 = vmatprep.subr.bf16.mxu0 0
        %1501 = vmatpush1.bf16.msra.mxu0 %v1483
        %1502 = vmatprep.subr.bf16.mxu0 0
        %1503 = vmatpush1.bf16.msra.mxu0 %v1484
        %1504 = vmatprep.subr.bf16.mxu0 0
        %1505 = vmatpush1.bf16.msra.mxu0 %v1485
        %1506 = vmatprep.subr.bf16.mxu0 0
        %1507 = vmatpush1.bf16.msra.mxu0 %v1486
        %1508 = vmatprep.subr.bf16.mxu0 0
        %1509 = vmatpush1.bf16.msra.mxu0 %v1487
        %1510 = vmatprep.subr.bf16.mxu0 0
        %1511 = vmatpush1.bf16.msra.mxu0 %v1488
        %1512 = vmatprep.subr.bf16.mxu0 0
        %1513 = vmatpush1.bf16.msra.mxu0 %v1489
        %1514 = vmatprep.subr.bf16.mxu0 0
        %1515 = vmatpush1.bf16.msra.mxu0 0
        %1516 = vmatprep.subr.bf16.mxu0 0
        %1517 = vmatpush1.bf16.msra.mxu0 0
        %1518 = vmatprep.subr.bf16.mxu0 0
        %1519 = vmatpush1.bf16.msra.mxu0 0
        %1520 = vmatprep.subr.bf16.mxu0 0
        %1521 = vmatpush1.bf16.msra.mxu0 0
        %1522 = vmatprep.subr.bf16.mxu0 0
        %1523 = vmatpush1.bf16.msra.mxu0 0
        %1524 = vmatprep.subr.bf16.mxu0 0
        %1525 = vmatpush1.bf16.msra.mxu0 0
        %1526 = vmatprep.subr.bf16.mxu0 0
        %1527 = vmatpush1.bf16.msra.mxu0 0
        %1528 = vmatprep.subr.bf16.mxu0 0
        %1529 = vmatpush1.bf16.msra.mxu0 0
        %1530 = vmatprep.mubr.bf16.mxu0 0
        %1531 = vmatmul.mubr.bf16.gmra.mrb[0].mxu0 %v1442
        %v1532 = vpop.f32.mrb[0].mxu0
        %v1533 = vadd.f32 %v1424, %v1532
        %v1534 = vpop.f32.mrb[0].mxu0
        %v1535 = vpop.f32.mrb[0].mxu0
        %v1536 = vadd.f32 %v1424, %v1535
        %v1537 = vpop.f32.mrb[0].mxu0
        %1538 = vmatprep.mubr.bf16.mxu0 0
        %1539 = vmatmul.mubr.bf16.gmra.mrb[0].mxu0 %v1443
        %v1540 = vpop.f32.mrb[0].mxu0
        %v1541 = vadd.f32 %v1424, %v1540
        %v1542 = vpop.f32.mrb[0].mxu0
        %v1543 = vpop.f32.mrb[0].mxu0
        %v1544 = vadd.f32 %v1424, %v1543
        %v1545 = vpop.f32.mrb[0].mxu0
        %1546 = vmatprep.mubr.bf16.mxu0 0
        %1547 = vmatmul.mubr.bf16.gmra.mrb[0].mxu0 %v1444
        %v1548 = vpop.f32.mrb[0].mxu0
        %v1549 = vadd.f32 %v1424, %v1548
        %v1550 = vpop.f32.mrb[0].mxu0
        %v1551 = vpop.f32.mrb[0].mxu0
        %v1552 = vadd.f32 %v1424, %v1551
        %v1553 = vpop.f32.mrb[0].mxu0
        %1554 = vmatprep.mubr.bf16.mxu0 0
        %1555 = vmatmul.mubr.bf16.gmra.mrb[0].mxu0 %v1445
        %v1556 = vpop.f32.mrb[0].mxu0
        %v1557 = vadd.f32 %v1424, %v1556
        %v1558 = vpop.f32.mrb[0].mxu0
        %v1559 = vpop.f32.mrb[0].mxu0
        %v1560 = vadd.f32 %v1424, %v1559
        %v1561 = vpop.f32.mrb[0].mxu0
        %1562 = vdwg.mxu0
        %v1563 = vpack.c.bf16 %v1080, %v1077
        %v1564 = vpack.c.bf16 %v1088, %v1085
        %v1565 = vpack.c.bf16 %v1096, %v1093
        %v1566 = vpack.c.bf16 %v1104, %v1101
        %v1567 = vpack.c.bf16 %v1376, %v1373
        %v1568 = vpack.c.bf16 %v1384, %v1381
        %v1569 = vpack.c.bf16 %v1392, %v1389
        %v1570 = vpack.c.bf16 %v1400, %v1397
        %v1571 = vpack.c.bf16 %v1536, %v1533
        %v1572 = vpack.c.bf16 %v1544, %v1541
        %v1573 = vpack.c.bf16 %v1552, %v1549
        %v1574 = vpack.c.bf16 %v1560, %v1557
        %v1575 = vld [vmem:[%s739] sm:$0xf]
        %v1576 = vld [vmem:[%s739 + $0x4] sm:$0xf]
        %v1577 = vld [vmem:[%s739 + $0x8] sm:$0xf]
        %v1578 = vld [vmem:[%s739 + $0xc] sm:$0xf]
        %v1579 = vld [vmem:[%s739 + $0x10] sm:$0xf]
        %v1580 = vld [vmem:[%s739 + $0x14] sm:$0xf]
        %v1581 = vld [vmem:[%s739 + $0x18] sm:$0xf]
        %v1582 = vld [vmem:[%s739 + $0x1c] sm:$0xf]
        %v1583 = vld [vmem:[%s739 + $0x20] sm:$0xf]
        %v1584 = vld [vmem:[%s739 + $0x24] sm:$0xf]
        %v1585 = vld [vmem:[%s739 + $0x28] sm:$0xf]
        %v1586 = vld [vmem:[%s739 + $0x2c] sm:$0xf]
        %v1587 = vld [vmem:[%s739 + $0x30] sm:$0xf]
        %v1588 = vld [vmem:[%s739 + $0x34] sm:$0xf]
        %v1589 = vld [vmem:[%s739 + $0x38] sm:$0xf]
        %v1590 = vld [vmem:[%s739 + $0x3c] sm:$0xf]
        %v1591 = vld [vmem:[%s739 + $0x40] sm:$0xf]
        %v1592 = vld [vmem:[%s739 + $0x44] sm:$0xf]
        %v1593 = vld [vmem:[%s739 + $0x48] sm:$0xf]
        %v1594 = vld [vmem:[%s739 + $0x4c] sm:$0xf]
        %v1595 = vld [vmem:[%s739 + $0x50] sm:$0xf]
        %v1596 = vld [vmem:[%s739 + $0x54] sm:$0xf]
        %v1597 = vld [vmem:[%s739 + $0x58] sm:$0xf]
        %v1598 = vld [vmem:[%s739 + $0x5c] sm:$0xf]
        %v1599 = vld [vmem:[%s739 + $0x60] sm:$0xf]
        %v1600 = vld [vmem:[%s739 + $0x64] sm:$0xf]
        %v1601 = vld [vmem:[%s739 + $0x68] sm:$0xf]
        %v1602 = vld [vmem:[%s739 + $0x6c] sm:$0xf]
        %v1603 = vld [vmem:[%s739 + $0x70] sm:$0xf]
        %v1604 = vld [vmem:[%s739 + $0x74] sm:$0xf]
        %v1605 = vld [vmem:[%s739 + $0x78] sm:$0xf]
        %v1606 = vld [vmem:[%s739 + $0x7c] sm:$0xf]
        %v1607 = vld [vmem:[%s739 + $0x80] sm:$0xf]
        %v1608 = vld [vmem:[%s739 + $0x84] sm:$0xf]
        %v1609 = vld [vmem:[%s739 + $0x88] sm:$0xf]
        %v1610 = vld [vmem:[%s739 + $0x8c] sm:$0xf]
        %v1611 = vld [vmem:[%s739 + $0x90] sm:$0xf]
        %v1612 = vld [vmem:[%s739 + $0x94] sm:$0xf]
        %v1613 = vld [vmem:[%s739 + $0x98] sm:$0xf]
        %v1614 = vld [vmem:[%s739 + $0x9c] sm:$0xf]
        %v1615 = vld [vmem:[%s739 + $0xa0] sm:$0xf]
        %v1616 = vld [vmem:[%s739 + $0xa4] sm:$0xf]
        %v1617 = vld [vmem:[%s739 + $0xa8] sm:$0xf]
        %v1618 = vld [vmem:[%s739 + $0xac] sm:$0xf]
        %v1619 = vld [vmem:[%s739 + $0xb0] sm:$0xf]
        %v1620 = vld [vmem:[%s739 + $0xb4] sm:$0xf]
        %v1621 = vld [vmem:[%s739 + $0xb8] sm:$0xf]
        %v1622 = vld [vmem:[%s739 + $0xbc] sm:$0xf]
        %v1623 = vld [vmem:[%s739 + $0xc0] sm:$0xf]
        %v1624 = vld [vmem:[%s739 + $0xc4] sm:$0xf]
        %v1625 = vld [vmem:[%s739 + $0xc8] sm:$0xf]
        %v1626 = vld [vmem:[%s739 + $0xcc] sm:$0xf]
        %v1627 = vld [vmem:[%s739 + $0xd0] sm:$0xf]
        %v1628 = vld [vmem:[%s739 + $0xd4] sm:$0xf]
        %v1629 = vld [vmem:[%s739 + $0xd8] sm:$0xf]
        %v1630 = vld [vmem:[%s739 + $0xdc] sm:$0xf]
        %v1631 = vld [vmem:[%s739 + $0xe0] sm:$0xf]
        %v1632 = vld [vmem:[%s739 + $0xe4] sm:$0xf]
        %v1633 = vld [vmem:[%s739 + $0xe8] sm:$0xf]
        %v1634 = vld [vmem:[%s739 + $0xec] sm:$0xf]
        %v1635 = vld [vmem:[%s739 + $0xf0] sm:$0xf]
        %v1636 = vld [vmem:[%s739 + $0xf4] sm:$0xf]
        %v1637 = vld [vmem:[%s739 + $0xf8] sm:$0xf]
        %v1638 = vld [vmem:[%s739 + $0xfc] sm:$0xf]
        %v1639 = vld [vmem:[%s739 + $0x100] sm:$0xf]
        %v1640 = vld [vmem:[%s739 + $0x104] sm:$0xf]
        %v1641 = vld [vmem:[%s739 + $0x108] sm:$0xf]
        %v1642 = vld [vmem:[%s739 + $0x10c] sm:$0xf]
        %v1643 = vld [vmem:[%s739 + $0x110] sm:$0xf]
        %v1644 = vld [vmem:[%s739 + $0x114] sm:$0xf]
        %v1645 = vld [vmem:[%s739 + $0x118] sm:$0xf]
        %v1646 = vld [vmem:[%s739 + $0x11c] sm:$0xf]
        %v1647 = vld [vmem:[%s739 + $0x120] sm:$0xf]
        %v1648 = vld [vmem:[%s739 + $0x124] sm:$0xf]
        %v1649 = vld [vmem:[%s739 + $0x128] sm:$0xf]
        %v1650 = vld [vmem:[%s739 + $0x12c] sm:$0xf]
        %v1651 = vld [vmem:[%s739 + $0x130] sm:$0xf]
        %v1652 = vld [vmem:[%s739 + $0x134] sm:$0xf]
        %v1653 = vld [vmem:[%s739 + $0x138] sm:$0xf]
        %v1654 = vld [vmem:[%s739 + $0x13c] sm:$0xf]
        %v1655 = vld [vmem:[%s739 + $0x140] sm:$0xf]
        %v1656 = vld [vmem:[%s739 + $0x144] sm:$0xf]
        %v1657 = vld [vmem:[%s739 + $0x148] sm:$0xf]
        %v1658 = vld [vmem:[%s739 + $0x14c] sm:$0xf]
        %v1659 = vld [vmem:[%s739 + $0x150] sm:$0xf]
        %v1660 = vld [vmem:[%s739 + $0x154] sm:$0xf]
        %v1661 = vld [vmem:[%s739 + $0x158] sm:$0xf]
        %v1662 = vld [vmem:[%s739 + $0x15c] sm:$0xf]
        %v1663 = vld [vmem:[%s739 + $0x160] sm:$0xf]
        %v1664 = vld [vmem:[%s739 + $0x164] sm:$0xf]
        %v1665 = vld [vmem:[%s739 + $0x168] sm:$0xf]
        %v1666 = vld [vmem:[%s739 + $0x16c] sm:$0xf]
        %v1667 = vld [vmem:[%s739 + $0x170] sm:$0xf]
        %v1668 = vld [vmem:[%s739 + $0x174] sm:$0xf]
        %v1669 = vld [vmem:[%s739 + $0x178] sm:$0xf]
        %v1670 = vld [vmem:[%s739 + $0x17c] sm:$0xf]
        %v1671 = vld [vmem:[%s739 + $0x180] sm:$0xf]
        %v1672 = vld [vmem:[%s739 + $0x184] sm:$0xf]
        %v1673 = vld [vmem:[%s739 + $0x188] sm:$0xf]
        %v1674 = vld [vmem:[%s739 + $0x18c] sm:$0xf]
        %v1675 = vld [vmem:[%s739 + $0x190] sm:$0xf]
        %v1676 = vld [vmem:[%s739 + $0x194] sm:$0xf]
        %v1677 = vld [vmem:[%s739 + $0x198] sm:$0xf]
        %v1678 = vld [vmem:[%s739 + $0x19c] sm:$0xf]
        %v1679 = vld [vmem:[%s739 + $0x1a0] sm:$0xf]
        %v1680 = vld [vmem:[%s739 + $0x1a4] sm:$0xf]
        %v1681 = vld [vmem:[%s739 + $0x1a8] sm:$0xf]
        %v1682 = vld [vmem:[%s739 + $0x1ac] sm:$0xf]
        %v1683 = vld [vmem:[%s739 + $0x1b0] sm:$0xf]
        %v1684 = vld [vmem:[%s739 + $0x1b4] sm:$0xf]
        %v1685 = vld [vmem:[%s739 + $0x1b8] sm:$0xf]
        %v1686 = vld [vmem:[%s739 + $0x1bc] sm:$0xf]
        %v1687 = vld [vmem:[%s739 + $0x1c0] sm:$0xf]
        %v1688 = vld [vmem:[%s739 + $0x1c4] sm:$0xf]
        %v1689 = vld [vmem:[%s739 + $0x1c8] sm:$0xf]
        %v1690 = vld [vmem:[%s739 + $0x1cc] sm:$0xf]
        %v1691 = vld [vmem:[%s739 + $0x1d0] sm:$0xf]
        %v1692 = vld [vmem:[%s739 + $0x1d4] sm:$0xf]
        %v1693 = vld [vmem:[%s739 + $0x1d8] sm:$0xf]
        %v1694 = vld [vmem:[%s739 + $0x1dc] sm:$0xf]
        %v1695 = vld [vmem:[%s739 + $0x1e0] sm:$0xf]
        %v1696 = vld [vmem:[%s739 + $0x1e4] sm:$0xf]
        %v1697 = vld [vmem:[%s739 + $0x1e8] sm:$0xf]
        %v1698 = vld [vmem:[%s739 + $0x1ec] sm:$0xf]
        %v1699 = vld [vmem:[%s739 + $0x1f0] sm:$0xf]
        %v1700 = vld [vmem:[%s739 + $0x1f4] sm:$0xf]
        %v1701 = vld [vmem:[%s739 + $0x1f8] sm:$0xf]
        %v1702 = vld [vmem:[%s739 + $0x1fc] sm:$0xf]
        %v1703 = vunpack.c.l.bf16 %v1575
        %v1704 = vunpack.c.l.bf16 %v1576
        %v1705 = vunpack.c.l.bf16 %v1577
        %v1706 = vunpack.c.l.bf16 %v1578
        %v1707 = vunpack.c.l.bf16 %v1579
        %v1708 = vunpack.c.l.bf16 %v1580
        %v1709 = vunpack.c.l.bf16 %v1581
        %v1710 = vunpack.c.l.bf16 %v1582
        %v1711 = vunpack.c.l.bf16 %v1583
        %v1712 = vunpack.c.l.bf16 %v1584
        %v1713 = vunpack.c.l.bf16 %v1585
        %v1714 = vunpack.c.l.bf16 %v1586
        %v1715 = vunpack.c.l.bf16 %v1587
        %v1716 = vunpack.c.l.bf16 %v1588
        %v1717 = vunpack.c.l.bf16 %v1589
        %v1718 = vunpack.c.l.bf16 %v1590
        %v1719 = vunpack.c.l.bf16 %v1591
        %v1720 = vunpack.c.l.bf16 %v1592
        %v1721 = vunpack.c.l.bf16 %v1593
        %v1722 = vunpack.c.l.bf16 %v1594
        %v1723 = vunpack.c.l.bf16 %v1595
        %v1724 = vunpack.c.l.bf16 %v1596
        %v1725 = vunpack.c.l.bf16 %v1597
        %v1726 = vunpack.c.l.bf16 %v1598
        %v1727 = vunpack.c.l.bf16 %v1599
        %v1728 = vunpack.c.l.bf16 %v1600
        %v1729 = vunpack.c.l.bf16 %v1601
        %v1730 = vunpack.c.l.bf16 %v1602
        %v1731 = vunpack.c.l.bf16 %v1603
        %v1732 = vunpack.c.l.bf16 %v1604
        %v1733 = vunpack.c.l.bf16 %v1605
        %v1734 = vunpack.c.l.bf16 %v1606
        %v1735 = vunpack.c.l.bf16 %v1607
        %v1736 = vunpack.c.l.bf16 %v1608
        %v1737 = vunpack.c.l.bf16 %v1609
        %v1738 = vunpack.c.l.bf16 %v1610
        %v1739 = vunpack.c.l.bf16 %v1611
        %v1740 = vunpack.c.l.bf16 %v1612
        %v1741 = vunpack.c.l.bf16 %v1613
        %v1742 = vunpack.c.l.bf16 %v1614
        %v1743 = vunpack.c.l.bf16 %v1615
        %v1744 = vunpack.c.l.bf16 %v1616
        %v1745 = vunpack.c.l.bf16 %v1617
        %v1746 = vunpack.c.l.bf16 %v1618
        %v1747 = vunpack.c.l.bf16 %v1619
        %v1748 = vunpack.c.l.bf16 %v1620
        %v1749 = vunpack.c.l.bf16 %v1621
        %v1750 = vunpack.c.l.bf16 %v1622
        %v1751 = vunpack.c.l.bf16 %v1623
        %v1752 = vunpack.c.l.bf16 %v1624
        %v1753 = vunpack.c.l.bf16 %v1625
        %v1754 = vunpack.c.l.bf16 %v1626
        %v1755 = vunpack.c.l.bf16 %v1627
        %v1756 = vunpack.c.l.bf16 %v1628
        %v1757 = vunpack.c.l.bf16 %v1629
        %v1758 = vunpack.c.l.bf16 %v1630
        %v1759 = vunpack.c.l.bf16 %v1631
        %v1760 = vunpack.c.l.bf16 %v1632
        %v1761 = vunpack.c.l.bf16 %v1633
        %v1762 = vunpack.c.l.bf16 %v1634
        %v1763 = vunpack.c.l.bf16 %v1635
        %v1764 = vunpack.c.l.bf16 %v1636
        %v1765 = vunpack.c.l.bf16 %v1637
        %v1766 = vunpack.c.l.bf16 %v1638
        %v1767 = vunpack.c.l.bf16 %v1639
        %v1768 = vunpack.c.l.bf16 %v1640
        %v1769 = vunpack.c.l.bf16 %v1641
        %v1770 = vunpack.c.l.bf16 %v1642
        %v1771 = vunpack.c.l.bf16 %v1643
        %v1772 = vunpack.c.l.bf16 %v1644
        %v1773 = vunpack.c.l.bf16 %v1645
        %v1774 = vunpack.c.l.bf16 %v1646
        %v1775 = vunpack.c.l.bf16 %v1647
        %v1776 = vunpack.c.l.bf16 %v1648
        %v1777 = vunpack.c.l.bf16 %v1649
        %v1778 = vunpack.c.l.bf16 %v1650
        %v1779 = vunpack.c.l.bf16 %v1651
        %v1780 = vunpack.c.l.bf16 %v1652
        %v1781 = vunpack.c.l.bf16 %v1653
        %v1782 = vunpack.c.l.bf16 %v1654
        %v1783 = vunpack.c.l.bf16 %v1655
        %v1784 = vunpack.c.l.bf16 %v1656
        %v1785 = vunpack.c.l.bf16 %v1657
        %v1786 = vunpack.c.l.bf16 %v1658
        %v1787 = vunpack.c.l.bf16 %v1659
        %v1788 = vunpack.c.l.bf16 %v1660
        %v1789 = vunpack.c.l.bf16 %v1661
        %v1790 = vunpack.c.l.bf16 %v1662
        %v1791 = vunpack.c.l.bf16 %v1663
        %v1792 = vunpack.c.l.bf16 %v1664
        %v1793 = vunpack.c.l.bf16 %v1665
        %v1794 = vunpack.c.l.bf16 %v1666
        %v1795 = vunpack.c.l.bf16 %v1667
        %v1796 = vunpack.c.l.bf16 %v1668
        %v1797 = vunpack.c.l.bf16 %v1669
        %v1798 = vunpack.c.l.bf16 %v1670
        %v1799 = vunpack.c.l.bf16 %v1671
        %v1800 = vunpack.c.l.bf16 %v1672
        %v1801 = vunpack.c.l.bf16 %v1673
        %v1802 = vunpack.c.l.bf16 %v1674
        %v1803 = vunpack.c.l.bf16 %v1675
        %v1804 = vunpack.c.l.bf16 %v1676
        %v1805 = vunpack.c.l.bf16 %v1677
        %v1806 = vunpack.c.l.bf16 %v1678
        %v1807 = vunpack.c.l.bf16 %v1679
        %v1808 = vunpack.c.l.bf16 %v1680
        %v1809 = vunpack.c.l.bf16 %v1681
        %v1810 = vunpack.c.l.bf16 %v1682
        %v1811 = vunpack.c.l.bf16 %v1683
        %v1812 = vunpack.c.l.bf16 %v1684
        %v1813 = vunpack.c.l.bf16 %v1685
        %v1814 = vunpack.c.l.bf16 %v1686
        %v1815 = vunpack.c.l.bf16 %v1687
        %v1816 = vunpack.c.l.bf16 %v1688
        %v1817 = vunpack.c.l.bf16 %v1689
        %v1818 = vunpack.c.l.bf16 %v1690
        %v1819 = vunpack.c.l.bf16 %v1691
        %v1820 = vunpack.c.l.bf16 %v1692
        %v1821 = vunpack.c.l.bf16 %v1693
        %v1822 = vunpack.c.l.bf16 %v1694
        %v1823 = vunpack.c.l.bf16 %v1695
        %v1824 = vunpack.c.l.bf16 %v1696
        %v1825 = vunpack.c.l.bf16 %v1697
        %v1826 = vunpack.c.l.bf16 %v1698
        %v1827 = vunpack.c.l.bf16 %v1699
        %v1828 = vunpack.c.l.bf16 %v1700
        %v1829 = vunpack.c.l.bf16 %v1701
        %v1830 = vunpack.c.l.bf16 %v1702
        %v1839 = vcombine.high %v1213, %v1213
        %v1841 = vunpack.c.l.s4 1966171168
        %v1842 = vunpack.c.0.s8 %v1841
        %v1843 = vlaneseq
        %v1844 = vshrl.u32 %v1843, 7
        %v1845 = vsub.s32 %v1842, %v1844
        %v1846 = vrot.slane %v1213, %v1845
        %v1848 = vunpack.c.l.s4 1966171168
        %v1849 = vunpack.c.0.s8 %v1848
        %v1850 = vlaneseq
        %v1851 = vshrl.u32 %v1850, 7
        %v1852 = vsub.s32 %v1849, %v1851
        %v1853 = vrot.slane %v1839, %v1852
        %v1854 = vcombine.high %v1846, %v1846
        %v1855 = vcombine.high %v1853, %v1853
        %v1857 = vunpack.c.l.s4 1966171168
        %v1858 = vunpack.c.0.s8 %v1857
        %v1859 = vlaneseq
        %v1860 = vshrl.u32 %v1859, 7
        %v1861 = vsub.s32 %v1858, %v1860
        %v1862 = vrot.slane %v1846, %v1861
        %v1864 = vunpack.c.l.s4 1966171168
        %v1865 = vunpack.c.0.s8 %v1864
        %v1866 = vlaneseq
        %v1867 = vshrl.u32 %v1866, 7
        %v1868 = vsub.s32 %v1865, %v1867
        %v1869 = vrot.slane %v1853, %v1868
        %v1871 = vunpack.c.l.s4 1966171168
        %v1872 = vunpack.c.0.s8 %v1871
        %v1873 = vlaneseq
        %v1874 = vshrl.u32 %v1873, 7
        %v1875 = vsub.s32 %v1872, %v1874
        %v1876 = vrot.slane %v1854, %v1875
        %v1878 = vunpack.c.l.s4 1966171168
        %v1879 = vunpack.c.0.s8 %v1878
        %v1880 = vlaneseq
        %v1881 = vshrl.u32 %v1880, 7
        %v1882 = vsub.s32 %v1879, %v1881
        %v1883 = vrot.slane %v1855, %v1882
        %v1884 = vcombine.high %v1862, %v1862
        %v1885 = vcombine.high %v1869, %v1869
        %v1886 = vcombine.high %v1876, %v1876
        %v1887 = vcombine.high %v1883, %v1883
        %v1888 = vcombine.high %v1216, %v1216
        %v1890 = vunpack.c.l.s4 1966171168
        %v1891 = vunpack.c.0.s8 %v1890
        %v1892 = vlaneseq
        %v1893 = vshrl.u32 %v1892, 7
        %v1894 = vsub.s32 %v1891, %v1893
        %v1895 = vrot.slane %v1216, %v1894
        %v1897 = vunpack.c.l.s4 1966171168
        %v1898 = vunpack.c.0.s8 %v1897
        %v1899 = vlaneseq
        %v1900 = vshrl.u32 %v1899, 7
        %v1901 = vsub.s32 %v1898, %v1900
        %v1902 = vrot.slane %v1888, %v1901
        %v1903 = vcombine.high %v1895, %v1895
        %v1904 = vcombine.high %v1902, %v1902
        %v1906 = vunpack.c.l.s4 1966171168
        %v1907 = vunpack.c.0.s8 %v1906
        %v1908 = vlaneseq
        %v1909 = vshrl.u32 %v1908, 7
        %v1910 = vsub.s32 %v1907, %v1909
        %v1911 = vrot.slane %v1895, %v1910
        %v1913 = vunpack.c.l.s4 1966171168
        %v1914 = vunpack.c.0.s8 %v1913
        %v1915 = vlaneseq
        %v1916 = vshrl.u32 %v1915, 7
        %v1917 = vsub.s32 %v1914, %v1916
        %v1918 = vrot.slane %v1902, %v1917
        %v1920 = vunpack.c.l.s4 1966171168
        %v1921 = vunpack.c.0.s8 %v1920
        %v1922 = vlaneseq
        %v1923 = vshrl.u32 %v1922, 7
        %v1924 = vsub.s32 %v1921, %v1923
        %v1925 = vrot.slane %v1903, %v1924
        %v1927 = vunpack.c.l.s4 1966171168
        %v1928 = vunpack.c.0.s8 %v1927
        %v1929 = vlaneseq
        %v1930 = vshrl.u32 %v1929, 7
        %v1931 = vsub.s32 %v1928, %v1930
        %v1932 = vrot.slane %v1904, %v1931
        %v1933 = vcombine.high %v1911, %v1911
        %v1934 = vcombine.high %v1918, %v1918
        %v1935 = vcombine.high %v1925, %v1925
        %v1936 = vcombine.high %v1932, %v1932
        %v1937 = vcombine.high %v1221, %v1221
        %v1939 = vunpack.c.l.s4 1966171168
        %v1940 = vunpack.c.0.s8 %v1939
        %v1941 = vlaneseq
        %v1942 = vshrl.u32 %v1941, 7
        %v1943 = vsub.s32 %v1940, %v1942
        %v1944 = vrot.slane %v1221, %v1943
        %v1946 = vunpack.c.l.s4 1966171168
        %v1947 = vunpack.c.0.s8 %v1946
        %v1948 = vlaneseq
        %v1949 = vshrl.u32 %v1948, 7
        %v1950 = vsub.s32 %v1947, %v1949
        %v1951 = vrot.slane %v1937, %v1950
        %v1952 = vcombine.high %v1944, %v1944
        %v1953 = vcombine.high %v1951, %v1951
        %v1955 = vunpack.c.l.s4 1966171168
        %v1956 = vunpack.c.0.s8 %v1955
        %v1957 = vlaneseq
        %v1958 = vshrl.u32 %v1957, 7
        %v1959 = vsub.s32 %v1956, %v1958
        %v1960 = vrot.slane %v1944, %v1959
        %v1962 = vunpack.c.l.s4 1966171168
        %v1963 = vunpack.c.0.s8 %v1962
        %v1964 = vlaneseq
        %v1965 = vshrl.u32 %v1964, 7
        %v1966 = vsub.s32 %v1963, %v1965
        %v1967 = vrot.slane %v1951, %v1966
        %v1969 = vunpack.c.l.s4 1966171168
        %v1970 = vunpack.c.0.s8 %v1969
        %v1971 = vlaneseq
        %v1972 = vshrl.u32 %v1971, 7
        %v1973 = vsub.s32 %v1970, %v1972
        %v1974 = vrot.slane %v1952, %v1973
        %v1976 = vunpack.c.l.s4 1966171168
        %v1977 = vunpack.c.0.s8 %v1976
        %v1978 = vlaneseq
        %v1979 = vshrl.u32 %v1978, 7
        %v1980 = vsub.s32 %v1977, %v1979
        %v1981 = vrot.slane %v1953, %v1980
        %v1982 = vcombine.high %v1960, %v1960
        %v1983 = vcombine.high %v1967, %v1967
        %v1984 = vcombine.high %v1974, %v1974
        %v1985 = vcombine.high %v1981, %v1981
        %v1986 = vcombine.high %v1224, %v1224
        %v1988 = vunpack.c.l.s4 1966171168
        %v1989 = vunpack.c.0.s8 %v1988
        %v1990 = vlaneseq
        %v1991 = vshrl.u32 %v1990, 7
        %v1992 = vsub.s32 %v1989, %v1991
        %v1993 = vrot.slane %v1224, %v1992
        %v1995 = vunpack.c.l.s4 1966171168
        %v1996 = vunpack.c.0.s8 %v1995
        %v1997 = vlaneseq
        %v1998 = vshrl.u32 %v1997, 7
        %v1999 = vsub.s32 %v1996, %v1998
        %v2000 = vrot.slane %v1986, %v1999
        %v2001 = vcombine.high %v1993, %v1993
        %v2002 = vcombine.high %v2000, %v2000
        %v2004 = vunpack.c.l.s4 1966171168
        %v2005 = vunpack.c.0.s8 %v2004
        %v2006 = vlaneseq
        %v2007 = vshrl.u32 %v2006, 7
        %v2008 = vsub.s32 %v2005, %v2007
        %v2009 = vrot.slane %v1993, %v2008
        %v2011 = vunpack.c.l.s4 1966171168
        %v2012 = vunpack.c.0.s8 %v2011
        %v2013 = vlaneseq
        %v2014 = vshrl.u32 %v2013, 7
        %v2015 = vsub.s32 %v2012, %v2014
        %v2016 = vrot.slane %v2000, %v2015
        %v2018 = vunpack.c.l.s4 1966171168
        %v2019 = vunpack.c.0.s8 %v2018
        %v2020 = vlaneseq
        %v2021 = vshrl.u32 %v2020, 7
        %v2022 = vsub.s32 %v2019, %v2021
        %v2023 = vrot.slane %v2001, %v2022
        %v2025 = vunpack.c.l.s4 1966171168
        %v2026 = vunpack.c.0.s8 %v2025
        %v2027 = vlaneseq
        %v2028 = vshrl.u32 %v2027, 7
        %v2029 = vsub.s32 %v2026, %v2028
        %v2030 = vrot.slane %v2002, %v2029
        %v2031 = vcombine.high %v2009, %v2009
        %v2032 = vcombine.high %v2016, %v2016
        %v2033 = vcombine.high %v2023, %v2023
        %v2034 = vcombine.high %v2030, %v2030
        %v2035 = vcombine.high %v1229, %v1229
        %v2037 = vunpack.c.l.s4 1966171168
        %v2038 = vunpack.c.0.s8 %v2037
        %v2039 = vlaneseq
        %v2040 = vshrl.u32 %v2039, 7
        %v2041 = vsub.s32 %v2038, %v2040
        %v2042 = vrot.slane %v1229, %v2041
        %v2044 = vunpack.c.l.s4 1966171168
        %v2045 = vunpack.c.0.s8 %v2044
        %v2046 = vlaneseq
        %v2047 = vshrl.u32 %v2046, 7
        %v2048 = vsub.s32 %v2045, %v2047
        %v2049 = vrot.slane %v2035, %v2048
        %v2050 = vcombine.high %v2042, %v2042
        %v2051 = vcombine.high %v2049, %v2049
        %v2053 = vunpack.c.l.s4 1966171168
        %v2054 = vunpack.c.0.s8 %v2053
        %v2055 = vlaneseq
        %v2056 = vshrl.u32 %v2055, 7
        %v2057 = vsub.s32 %v2054, %v2056
        %v2058 = vrot.slane %v2042, %v2057
        %v2060 = vunpack.c.l.s4 1966171168
        %v2061 = vunpack.c.0.s8 %v2060
        %v2062 = vlaneseq
        %v2063 = vshrl.u32 %v2062, 7
        %v2064 = vsub.s32 %v2061, %v2063
        %v2065 = vrot.slane %v2049, %v2064
        %v2067 = vunpack.c.l.s4 1966171168
        %v2068 = vunpack.c.0.s8 %v2067
        %v2069 = vlaneseq
        %v2070 = vshrl.u32 %v2069, 7
        %v2071 = vsub.s32 %v2068, %v2070
        %v2072 = vrot.slane %v2050, %v2071
        %v2074 = vunpack.c.l.s4 1966171168
        %v2075 = vunpack.c.0.s8 %v2074
        %v2076 = vlaneseq
        %v2077 = vshrl.u32 %v2076, 7
        %v2078 = vsub.s32 %v2075, %v2077
        %v2079 = vrot.slane %v2051, %v2078
        %v2080 = vcombine.high %v2058, %v2058
        %v2081 = vcombine.high %v2065, %v2065
        %v2082 = vcombine.high %v2072, %v2072
        %v2083 = vcombine.high %v2079, %v2079
        %v2084 = vcombine.high %v1232, %v1232
        %v2086 = vunpack.c.l.s4 1966171168
        %v2087 = vunpack.c.0.s8 %v2086
        %v2088 = vlaneseq
        %v2089 = vshrl.u32 %v2088, 7
        %v2090 = vsub.s32 %v2087, %v2089
        %v2091 = vrot.slane %v1232, %v2090
        %v2093 = vunpack.c.l.s4 1966171168
        %v2094 = vunpack.c.0.s8 %v2093
        %v2095 = vlaneseq
        %v2096 = vshrl.u32 %v2095, 7
        %v2097 = vsub.s32 %v2094, %v2096
        %v2098 = vrot.slane %v2084, %v2097
        %v2099 = vcombine.high %v2091, %v2091
        %v2100 = vcombine.high %v2098, %v2098
        %v2102 = vunpack.c.l.s4 1966171168
        %v2103 = vunpack.c.0.s8 %v2102
        %v2104 = vlaneseq
        %v2105 = vshrl.u32 %v2104, 7
        %v2106 = vsub.s32 %v2103, %v2105
        %v2107 = vrot.slane %v2091, %v2106
        %v2109 = vunpack.c.l.s4 1966171168
        %v2110 = vunpack.c.0.s8 %v2109
        %v2111 = vlaneseq
        %v2112 = vshrl.u32 %v2111, 7
        %v2113 = vsub.s32 %v2110, %v2112
        %v2114 = vrot.slane %v2098, %v2113
        %v2116 = vunpack.c.l.s4 1966171168
        %v2117 = vunpack.c.0.s8 %v2116
        %v2118 = vlaneseq
        %v2119 = vshrl.u32 %v2118, 7
        %v2120 = vsub.s32 %v2117, %v2119
        %v2121 = vrot.slane %v2099, %v2120
        %v2123 = vunpack.c.l.s4 1966171168
        %v2124 = vunpack.c.0.s8 %v2123
        %v2125 = vlaneseq
        %v2126 = vshrl.u32 %v2125, 7
        %v2127 = vsub.s32 %v2124, %v2126
        %v2128 = vrot.slane %v2100, %v2127
        %v2129 = vcombine.high %v2107, %v2107
        %v2130 = vcombine.high %v2114, %v2114
        %v2131 = vcombine.high %v2121, %v2121
        %v2132 = vcombine.high %v2128, %v2128
        %v2133 = vcombine.high %v1237, %v1237
        %v2135 = vunpack.c.l.s4 1966171168
        %v2136 = vunpack.c.0.s8 %v2135
        %v2137 = vlaneseq
        %v2138 = vshrl.u32 %v2137, 7
        %v2139 = vsub.s32 %v2136, %v2138
        %v2140 = vrot.slane %v1237, %v2139
        %v2142 = vunpack.c.l.s4 1966171168
        %v2143 = vunpack.c.0.s8 %v2142
        %v2144 = vlaneseq
        %v2145 = vshrl.u32 %v2144, 7
        %v2146 = vsub.s32 %v2143, %v2145
        %v2147 = vrot.slane %v2133, %v2146
        %v2148 = vcombine.high %v2140, %v2140
        %v2149 = vcombine.high %v2147, %v2147
        %v2151 = vunpack.c.l.s4 1966171168
        %v2152 = vunpack.c.0.s8 %v2151
        %v2153 = vlaneseq
        %v2154 = vshrl.u32 %v2153, 7
        %v2155 = vsub.s32 %v2152, %v2154
        %v2156 = vrot.slane %v2140, %v2155
        %v2158 = vunpack.c.l.s4 1966171168
        %v2159 = vunpack.c.0.s8 %v2158
        %v2160 = vlaneseq
        %v2161 = vshrl.u32 %v2160, 7
        %v2162 = vsub.s32 %v2159, %v2161
        %v2163 = vrot.slane %v2147, %v2162
        %v2165 = vunpack.c.l.s4 1966171168
        %v2166 = vunpack.c.0.s8 %v2165
        %v2167 = vlaneseq
        %v2168 = vshrl.u32 %v2167, 7
        %v2169 = vsub.s32 %v2166, %v2168
        %v2170 = vrot.slane %v2148, %v2169
        %v2172 = vunpack.c.l.s4 1966171168
        %v2173 = vunpack.c.0.s8 %v2172
        %v2174 = vlaneseq
        %v2175 = vshrl.u32 %v2174, 7
        %v2176 = vsub.s32 %v2173, %v2175
        %v2177 = vrot.slane %v2149, %v2176
        %v2178 = vcombine.high %v2156, %v2156
        %v2179 = vcombine.high %v2163, %v2163
        %v2180 = vcombine.high %v2170, %v2170
        %v2181 = vcombine.high %v2177, %v2177
        %v2182 = vcombine.high %v1240, %v1240
        %v2184 = vunpack.c.l.s4 1966171168
        %v2185 = vunpack.c.0.s8 %v2184
        %v2186 = vlaneseq
        %v2187 = vshrl.u32 %v2186, 7
        %v2188 = vsub.s32 %v2185, %v2187
        %v2189 = vrot.slane %v1240, %v2188
        %v2191 = vunpack.c.l.s4 1966171168
        %v2192 = vunpack.c.0.s8 %v2191
        %v2193 = vlaneseq
        %v2194 = vshrl.u32 %v2193, 7
        %v2195 = vsub.s32 %v2192, %v2194
        %v2196 = vrot.slane %v2182, %v2195
        %v2197 = vcombine.high %v2189, %v2189
        %v2198 = vcombine.high %v2196, %v2196
        %v2200 = vunpack.c.l.s4 1966171168
        %v2201 = vunpack.c.0.s8 %v2200
        %v2202 = vlaneseq
        %v2203 = vshrl.u32 %v2202, 7
        %v2204 = vsub.s32 %v2201, %v2203
        %v2205 = vrot.slane %v2189, %v2204
        %v2207 = vunpack.c.l.s4 1966171168
        %v2208 = vunpack.c.0.s8 %v2207
        %v2209 = vlaneseq
        %v2210 = vshrl.u32 %v2209, 7
        %v2211 = vsub.s32 %v2208, %v2210
        %v2212 = vrot.slane %v2196, %v2211
        %v2214 = vunpack.c.l.s4 1966171168
        %v2215 = vunpack.c.0.s8 %v2214
        %v2216 = vlaneseq
        %v2217 = vshrl.u32 %v2216, 7
        %v2218 = vsub.s32 %v2215, %v2217
        %v2219 = vrot.slane %v2197, %v2218
        %v2221 = vunpack.c.l.s4 1966171168
        %v2222 = vunpack.c.0.s8 %v2221
        %v2223 = vlaneseq
        %v2224 = vshrl.u32 %v2223, 7
        %v2225 = vsub.s32 %v2222, %v2224
        %v2226 = vrot.slane %v2198, %v2225
        %v2227 = vcombine.high %v2205, %v2205
        %v2228 = vcombine.high %v2212, %v2212
        %v2229 = vcombine.high %v2219, %v2219
        %v2230 = vcombine.high %v2226, %v2226
        %v2231 = vlaneseq
        %v2232 = vshrl.u32 %v2231, 7
        %v2233 = vsub.s32 0, %v2232
        %v2234 = vrot.slane %v1862, %v2233
        %v2235 = vlaneseq
        %v2236 = vshrl.u32 %v2235, 7
        %v2237 = vsub.s32 0, %v2236
        %v2238 = vrot.slane %v1876, %v2237
        %v2239 = vlaneseq
        %v2240 = vshrl.u32 %v2239, 7
        %v2241 = vsub.s32 0, %v2240
        %v2242 = vrot.slane %v1884, %v2241
        %v2243 = vlaneseq
        %v2244 = vshrl.u32 %v2243, 7
        %v2245 = vsub.s32 0, %v2244
        %v2246 = vrot.slane %v1886, %v2245
        %v2247 = vlaneseq
        %v2248 = vshrl.u32 %v2247, 7
        %v2249 = vsub.s32 0, %v2248
        %v2250 = vrot.slane %v1869, %v2249
        %v2251 = vlaneseq
        %v2252 = vshrl.u32 %v2251, 7
        %v2253 = vsub.s32 0, %v2252
        %v2254 = vrot.slane %v1883, %v2253
        %v2255 = vlaneseq
        %v2256 = vshrl.u32 %v2255, 7
        %v2257 = vsub.s32 0, %v2256
        %v2258 = vrot.slane %v1885, %v2257
        %v2259 = vlaneseq
        %v2260 = vshrl.u32 %v2259, 7
        %v2261 = vsub.s32 0, %v2260
        %v2262 = vrot.slane %v1887, %v2261
        %v2263 = vlaneseq
        %v2264 = vshrl.u32 %v2263, 7
        %v2265 = vsub.s32 0, %v2264
        %v2266 = vrot.slane %v1911, %v2265
        %v2267 = vlaneseq
        %v2268 = vshrl.u32 %v2267, 7
        %v2269 = vsub.s32 0, %v2268
        %v2270 = vrot.slane %v1925, %v2269
        %v2271 = vlaneseq
        %v2272 = vshrl.u32 %v2271, 7
        %v2273 = vsub.s32 0, %v2272
        %v2274 = vrot.slane %v1933, %v2273
        %v2275 = vlaneseq
        %v2276 = vshrl.u32 %v2275, 7
        %v2277 = vsub.s32 0, %v2276
        %v2278 = vrot.slane %v1935, %v2277
        %v2279 = vlaneseq
        %v2280 = vshrl.u32 %v2279, 7
        %v2281 = vsub.s32 0, %v2280
        %v2282 = vrot.slane %v1918, %v2281
        %v2283 = vlaneseq
        %v2284 = vshrl.u32 %v2283, 7
        %v2285 = vsub.s32 0, %v2284
        %v2286 = vrot.slane %v1932, %v2285
        %v2287 = vlaneseq
        %v2288 = vshrl.u32 %v2287, 7
        %v2289 = vsub.s32 0, %v2288
        %v2290 = vrot.slane %v1934, %v2289
        %v2291 = vlaneseq
        %v2292 = vshrl.u32 %v2291, 7
        %v2293 = vsub.s32 0, %v2292
        %v2294 = vrot.slane %v1936, %v2293
        %v2295 = vlaneseq
        %v2296 = vshrl.u32 %v2295, 7
        %v2297 = vsub.s32 0, %v2296
        %v2298 = vrot.slane %v1960, %v2297
        %v2299 = vlaneseq
        %v2300 = vshrl.u32 %v2299, 7
        %v2301 = vsub.s32 0, %v2300
        %v2302 = vrot.slane %v1974, %v2301
        %v2303 = vlaneseq
        %v2304 = vshrl.u32 %v2303, 7
        %v2305 = vsub.s32 0, %v2304
        %v2306 = vrot.slane %v1982, %v2305
        %v2307 = vlaneseq
        %v2308 = vshrl.u32 %v2307, 7
        %v2309 = vsub.s32 0, %v2308
        %v2310 = vrot.slane %v1984, %v2309
        %v2311 = vlaneseq
        %v2312 = vshrl.u32 %v2311, 7
        %v2313 = vsub.s32 0, %v2312
        %v2314 = vrot.slane %v1967, %v2313
        %v2315 = vlaneseq
        %v2316 = vshrl.u32 %v2315, 7
        %v2317 = vsub.s32 0, %v2316
        %v2318 = vrot.slane %v1981, %v2317
        %v2319 = vlaneseq
        %v2320 = vshrl.u32 %v2319, 7
        %v2321 = vsub.s32 0, %v2320
        %v2322 = vrot.slane %v1983, %v2321
        %v2323 = vlaneseq
        %v2324 = vshrl.u32 %v2323, 7
        %v2325 = vsub.s32 0, %v2324
        %v2326 = vrot.slane %v1985, %v2325
        %v2327 = vlaneseq
        %v2328 = vshrl.u32 %v2327, 7
        %v2329 = vsub.s32 0, %v2328
        %v2330 = vrot.slane %v2009, %v2329
        %v2331 = vlaneseq
        %v2332 = vshrl.u32 %v2331, 7
        %v2333 = vsub.s32 0, %v2332
        %v2334 = vrot.slane %v2023, %v2333
        %v2335 = vlaneseq
        %v2336 = vshrl.u32 %v2335, 7
        %v2337 = vsub.s32 0, %v2336
        %v2338 = vrot.slane %v2031, %v2337
        %v2339 = vlaneseq
        %v2340 = vshrl.u32 %v2339, 7
        %v2341 = vsub.s32 0, %v2340
        %v2342 = vrot.slane %v2033, %v2341
        %v2343 = vlaneseq
        %v2344 = vshrl.u32 %v2343, 7
        %v2345 = vsub.s32 0, %v2344
        %v2346 = vrot.slane %v2016, %v2345
        %v2347 = vlaneseq
        %v2348 = vshrl.u32 %v2347, 7
        %v2349 = vsub.s32 0, %v2348
        %v2350 = vrot.slane %v2030, %v2349
        %v2351 = vlaneseq
        %v2352 = vshrl.u32 %v2351, 7
        %v2353 = vsub.s32 0, %v2352
        %v2354 = vrot.slane %v2032, %v2353
        %v2355 = vlaneseq
        %v2356 = vshrl.u32 %v2355, 7
        %v2357 = vsub.s32 0, %v2356
        %v2358 = vrot.slane %v2034, %v2357
        %v2359 = vlaneseq
        %v2360 = vshrl.u32 %v2359, 7
        %v2361 = vsub.s32 0, %v2360
        %v2362 = vrot.slane %v2058, %v2361
        %v2363 = vlaneseq
        %v2364 = vshrl.u32 %v2363, 7
        %v2365 = vsub.s32 0, %v2364
        %v2366 = vrot.slane %v2072, %v2365
        %v2367 = vlaneseq
        %v2368 = vshrl.u32 %v2367, 7
        %v2369 = vsub.s32 0, %v2368
        %v2370 = vrot.slane %v2080, %v2369
        %v2371 = vlaneseq
        %v2372 = vshrl.u32 %v2371, 7
        %v2373 = vsub.s32 0, %v2372
        %v2374 = vrot.slane %v2082, %v2373
        %v2375 = vlaneseq
        %v2376 = vshrl.u32 %v2375, 7
        %v2377 = vsub.s32 0, %v2376
        %v2378 = vrot.slane %v2065, %v2377
        %v2379 = vlaneseq
        %v2380 = vshrl.u32 %v2379, 7
        %v2381 = vsub.s32 0, %v2380
        %v2382 = vrot.slane %v2079, %v2381
        %v2383 = vlaneseq
        %v2384 = vshrl.u32 %v2383, 7
        %v2385 = vsub.s32 0, %v2384
        %v2386 = vrot.slane %v2081, %v2385
        %v2387 = vlaneseq
        %v2388 = vshrl.u32 %v2387, 7
        %v2389 = vsub.s32 0, %v2388
        %v2390 = vrot.slane %v2083, %v2389
        %v2391 = vlaneseq
        %v2392 = vshrl.u32 %v2391, 7
        %v2393 = vsub.s32 0, %v2392
        %v2394 = vrot.slane %v2107, %v2393
        %v2395 = vlaneseq
        %v2396 = vshrl.u32 %v2395, 7
        %v2397 = vsub.s32 0, %v2396
        %v2398 = vrot.slane %v2121, %v2397
        %v2399 = vlaneseq
        %v2400 = vshrl.u32 %v2399, 7
        %v2401 = vsub.s32 0, %v2400
        %v2402 = vrot.slane %v2129, %v2401
        %v2403 = vlaneseq
        %v2404 = vshrl.u32 %v2403, 7
        %v2405 = vsub.s32 0, %v2404
        %v2406 = vrot.slane %v2131, %v2405
        %v2407 = vlaneseq
        %v2408 = vshrl.u32 %v2407, 7
        %v2409 = vsub.s32 0, %v2408
        %v2410 = vrot.slane %v2114, %v2409
        %v2411 = vlaneseq
        %v2412 = vshrl.u32 %v2411, 7
        %v2413 = vsub.s32 0, %v2412
        %v2414 = vrot.slane %v2128, %v2413
        %v2415 = vlaneseq
        %v2416 = vshrl.u32 %v2415, 7
        %v2417 = vsub.s32 0, %v2416
        %v2418 = vrot.slane %v2130, %v2417
        %v2419 = vlaneseq
        %v2420 = vshrl.u32 %v2419, 7
        %v2421 = vsub.s32 0, %v2420
        %v2422 = vrot.slane %v2132, %v2421
        %v2423 = vlaneseq
        %v2424 = vshrl.u32 %v2423, 7
        %v2425 = vsub.s32 0, %v2424
        %v2426 = vrot.slane %v2156, %v2425
        %v2427 = vlaneseq
        %v2428 = vshrl.u32 %v2427, 7
        %v2429 = vsub.s32 0, %v2428
        %v2430 = vrot.slane %v2170, %v2429
        %v2431 = vlaneseq
        %v2432 = vshrl.u32 %v2431, 7
        %v2433 = vsub.s32 0, %v2432
        %v2434 = vrot.slane %v2178, %v2433
        %v2435 = vlaneseq
        %v2436 = vshrl.u32 %v2435, 7
        %v2437 = vsub.s32 0, %v2436
        %v2438 = vrot.slane %v2180, %v2437
        %v2439 = vlaneseq
        %v2440 = vshrl.u32 %v2439, 7
        %v2441 = vsub.s32 0, %v2440
        %v2442 = vrot.slane %v2163, %v2441
        %v2443 = vlaneseq
        %v2444 = vshrl.u32 %v2443, 7
        %v2445 = vsub.s32 0, %v2444
        %v2446 = vrot.slane %v2177, %v2445
        %v2447 = vlaneseq
        %v2448 = vshrl.u32 %v2447, 7
        %v2449 = vsub.s32 0, %v2448
        %v2450 = vrot.slane %v2179, %v2449
        %v2451 = vlaneseq
        %v2452 = vshrl.u32 %v2451, 7
        %v2453 = vsub.s32 0, %v2452
        %v2454 = vrot.slane %v2181, %v2453
        %v2455 = vlaneseq
        %v2456 = vshrl.u32 %v2455, 7
        %v2457 = vsub.s32 0, %v2456
        %v2458 = vrot.slane %v2205, %v2457
        %v2459 = vlaneseq
        %v2460 = vshrl.u32 %v2459, 7
        %v2461 = vsub.s32 0, %v2460
        %v2462 = vrot.slane %v2219, %v2461
        %v2463 = vlaneseq
        %v2464 = vshrl.u32 %v2463, 7
        %v2465 = vsub.s32 0, %v2464
        %v2466 = vrot.slane %v2227, %v2465
        %v2467 = vlaneseq
        %v2468 = vshrl.u32 %v2467, 7
        %v2469 = vsub.s32 0, %v2468
        %v2470 = vrot.slane %v2229, %v2469
        %v2471 = vlaneseq
        %v2472 = vshrl.u32 %v2471, 7
        %v2473 = vsub.s32 0, %v2472
        %v2474 = vrot.slane %v2212, %v2473
        %v2475 = vlaneseq
        %v2476 = vshrl.u32 %v2475, 7
        %v2477 = vsub.s32 0, %v2476
        %v2478 = vrot.slane %v2226, %v2477
        %v2479 = vlaneseq
        %v2480 = vshrl.u32 %v2479, 7
        %v2481 = vsub.s32 0, %v2480
        %v2482 = vrot.slane %v2228, %v2481
        %v2483 = vlaneseq
        %v2484 = vshrl.u32 %v2483, 7
        %v2485 = vsub.s32 0, %v2484
        %v2486 = vrot.slane %v2230, %v2485
        %v2551 = vmul.f32 %v1703, %v2234
        %v2552 = vmul.f32 %v1704, %v2234
        %v2553 = vmul.f32 %v1705, %v2238
        %v2554 = vmul.f32 %v1706, %v2238
        %v2555 = vmul.f32 %v1707, %v2242
        %v2556 = vmul.f32 %v1708, %v2242
        %v2557 = vmul.f32 %v1709, %v2246
        %v2558 = vmul.f32 %v1710, %v2246
        %v2559 = vmul.f32 %v1711, %v2250
        %v2560 = vmul.f32 %v1712, %v2250
        %v2561 = vmul.f32 %v1713, %v2254
        %v2562 = vmul.f32 %v1714, %v2254
        %v2563 = vmul.f32 %v1715, %v2258
        %v2564 = vmul.f32 %v1716, %v2258
        %v2565 = vmul.f32 %v1717, %v2262
        %v2566 = vmul.f32 %v1718, %v2262
        %v2567 = vmul.f32 %v1719, %v2266
        %v2568 = vmul.f32 %v1720, %v2266
        %v2569 = vmul.f32 %v1721, %v2270
        %v2570 = vmul.f32 %v1722, %v2270
        %v2571 = vmul.f32 %v1723, %v2274
        %v2572 = vmul.f32 %v1724, %v2274
        %v2573 = vmul.f32 %v1725, %v2278
        %v2574 = vmul.f32 %v1726, %v2278
        %v2575 = vmul.f32 %v1727, %v2282
        %v2576 = vmul.f32 %v1728, %v2282
        %v2577 = vmul.f32 %v1729, %v2286
        %v2578 = vmul.f32 %v1730, %v2286
        %v2579 = vmul.f32 %v1731, %v2290
        %v2580 = vmul.f32 %v1732, %v2290
        %v2581 = vmul.f32 %v1733, %v2294
        %v2582 = vmul.f32 %v1734, %v2294
        %v2583 = vmul.f32 %v1735, %v2298
        %v2584 = vmul.f32 %v1736, %v2298
        %v2585 = vmul.f32 %v1737, %v2302
        %v2586 = vmul.f32 %v1738, %v2302
        %v2587 = vmul.f32 %v1739, %v2306
        %v2588 = vmul.f32 %v1740, %v2306
        %v2589 = vmul.f32 %v1741, %v2310
        %v2590 = vmul.f32 %v1742, %v2310
        %v2591 = vmul.f32 %v1743, %v2314
        %v2592 = vmul.f32 %v1744, %v2314
        %v2593 = vmul.f32 %v1745, %v2318
        %v2594 = vmul.f32 %v1746, %v2318
        %v2595 = vmul.f32 %v1747, %v2322
        %v2596 = vmul.f32 %v1748, %v2322
        %v2597 = vmul.f32 %v1749, %v2326
        %v2598 = vmul.f32 %v1750, %v2326
        %v2599 = vmul.f32 %v1751, %v2330
        %v2600 = vmul.f32 %v1752, %v2330
        %v2601 = vmul.f32 %v1753, %v2334
        %v2602 = vmul.f32 %v1754, %v2334
        %v2603 = vmul.f32 %v1755, %v2338
        %v2604 = vmul.f32 %v1756, %v2338
        %v2605 = vmul.f32 %v1757, %v2342
        %v2606 = vmul.f32 %v1758, %v2342
        %v2607 = vmul.f32 %v1759, %v2346
        %v2608 = vmul.f32 %v1760, %v2346
        %v2609 = vmul.f32 %v1761, %v2350
        %v2610 = vmul.f32 %v1762, %v2350
        %v2611 = vmul.f32 %v1763, %v2354
        %v2612 = vmul.f32 %v1764, %v2354
        %v2613 = vmul.f32 %v1765, %v2358
        %v2614 = vmul.f32 %v1766, %v2358
        %v2615 = vmul.f32 %v1767, %v2362
        %v2616 = vmul.f32 %v1768, %v2362
        %v2617 = vmul.f32 %v1769, %v2366
        %v2618 = vmul.f32 %v1770, %v2366
        %v2619 = vmul.f32 %v1771, %v2370
        %v2620 = vmul.f32 %v1772, %v2370
        %v2621 = vmul.f32 %v1773, %v2374
        %v2622 = vmul.f32 %v1774, %v2374
        %v2623 = vmul.f32 %v1775, %v2378
        %v2624 = vmul.f32 %v1776, %v2378
        %v2625 = vmul.f32 %v1777, %v2382
        %v2626 = vmul.f32 %v1778, %v2382
        %v2627 = vmul.f32 %v1779, %v2386
        %v2628 = vmul.f32 %v1780, %v2386
        %v2629 = vmul.f32 %v1781, %v2390
        %v2630 = vmul.f32 %v1782, %v2390
        %v2631 = vmul.f32 %v1783, %v2394
        %v2632 = vmul.f32 %v1784, %v2394
        %v2633 = vmul.f32 %v1785, %v2398
        %v2634 = vmul.f32 %v1786, %v2398
        %v2635 = vmul.f32 %v1787, %v2402
        %v2636 = vmul.f32 %v1788, %v2402
        %v2637 = vmul.f32 %v1789, %v2406
        %v2638 = vmul.f32 %v1790, %v2406
        %v2639 = vmul.f32 %v1791, %v2410
        %v2640 = vmul.f32 %v1792, %v2410
        %v2641 = vmul.f32 %v1793, %v2414
        %v2642 = vmul.f32 %v1794, %v2414
        %v2643 = vmul.f32 %v1795, %v2418
        %v2644 = vmul.f32 %v1796, %v2418
        %v2645 = vmul.f32 %v1797, %v2422
        %v2646 = vmul.f32 %v1798, %v2422
        %v2647 = vmul.f32 %v1799, %v2426
        %v2648 = vmul.f32 %v1800, %v2426
        %v2649 = vmul.f32 %v1801, %v2430
        %v2650 = vmul.f32 %v1802, %v2430
        %v2651 = vmul.f32 %v1803, %v2434
        %v2652 = vmul.f32 %v1804, %v2434
        %v2653 = vmul.f32 %v1805, %v2438
        %v2654 = vmul.f32 %v1806, %v2438
        %v2655 = vmul.f32 %v1807, %v2442
        %v2656 = vmul.f32 %v1808, %v2442
        %v2657 = vmul.f32 %v1809, %v2446
        %v2658 = vmul.f32 %v1810, %v2446
        %v2659 = vmul.f32 %v1811, %v2450
        %v2660 = vmul.f32 %v1812, %v2450
        %v2661 = vmul.f32 %v1813, %v2454
        %v2662 = vmul.f32 %v1814, %v2454
        %v2663 = vmul.f32 %v1815, %v2458
        %v2664 = vmul.f32 %v1816, %v2458
        %v2665 = vmul.f32 %v1817, %v2462
        %v2666 = vmul.f32 %v1818, %v2462
        %v2667 = vmul.f32 %v1819, %v2466
        %v2668 = vmul.f32 %v1820, %v2466
        %v2669 = vmul.f32 %v1821, %v2470
        %v2670 = vmul.f32 %v1822, %v2470
        %v2671 = vmul.f32 %v1823, %v2474
        %v2672 = vmul.f32 %v1824, %v2474
        %v2673 = vmul.f32 %v1825, %v2478
        %v2674 = vmul.f32 %v1826, %v2478
        %v2675 = vmul.f32 %v1827, %v2482
        %v2676 = vmul.f32 %v1828, %v2482
        %v2677 = vmul.f32 %v1829, %v2486
        %v2678 = vmul.f32 %v1830, %v2486
        %vm2679 = vcmask 261120
        %v2680 = vsel %vm2679, %v2551, 0.0
        %2681 = vadd.xlane.f32.xlu0 %v2680
        %v2682 = vpop.xlane.xlu0 %2681
        %v2683 = vsel %vm2679, %v2552, 0.0
        %2684 = vadd.xlane.f32.xlu0 %v2683
        %v2685 = vpop.xlane.xlu0 %2684
        %v2686 = vsel %vm2679, %v2553, 0.0
        %2687 = vadd.xlane.f32.xlu0 %v2686
        %v2688 = vpop.xlane.xlu0 %2687
        %v2689 = vsel %vm2679, %v2554, 0.0
        %2690 = vadd.xlane.f32.xlu0 %v2689
        %v2691 = vpop.xlane.xlu0 %2690
        %v2692 = vsel %vm2679, %v2555, 0.0
        %2693 = vadd.xlane.f32.xlu0 %v2692
        %v2694 = vpop.xlane.xlu0 %2693
        %v2695 = vsel %vm2679, %v2556, 0.0
        %2696 = vadd.xlane.f32.xlu0 %v2695
        %v2697 = vpop.xlane.xlu0 %2696
        %v2698 = vsel %vm2679, %v2557, 0.0
        %2699 = vadd.xlane.f32.xlu0 %v2698
        %v2700 = vpop.xlane.xlu0 %2699
        %v2701 = vsel %vm2679, %v2558, 0.0
        %2702 = vadd.xlane.f32.xlu0 %v2701
        %v2703 = vpop.xlane.xlu0 %2702
        %v2704 = vsel %vm2679, %v2559, 0.0
        %2705 = vadd.xlane.f32.xlu0 %v2704
        %v2706 = vpop.xlane.xlu0 %2705
        %v2707 = vsel %vm2679, %v2560, 0.0
        %2708 = vadd.xlane.f32.xlu0 %v2707
        %v2709 = vpop.xlane.xlu0 %2708
        %v2710 = vsel %vm2679, %v2561, 0.0
        %2711 = vadd.xlane.f32.xlu0 %v2710
        %v2712 = vpop.xlane.xlu0 %2711
        %v2713 = vsel %vm2679, %v2562, 0.0
        %2714 = vadd.xlane.f32.xlu0 %v2713
        %v2715 = vpop.xlane.xlu0 %2714
        %v2716 = vsel %vm2679, %v2563, 0.0
        %2717 = vadd.xlane.f32.xlu0 %v2716
        %v2718 = vpop.xlane.xlu0 %2717
        %v2719 = vsel %vm2679, %v2564, 0.0
        %2720 = vadd.xlane.f32.xlu0 %v2719
        %v2721 = vpop.xlane.xlu0 %2720
        %v2722 = vsel %vm2679, %v2565, 0.0
        %2723 = vadd.xlane.f32.xlu0 %v2722
        %v2724 = vpop.xlane.xlu0 %2723
        %v2725 = vsel %vm2679, %v2566, 0.0
        %2726 = vadd.xlane.f32.xlu0 %v2725
        %v2727 = vpop.xlane.xlu0 %2726
        %v2728 = vsel %vm2679, %v2567, 0.0
        %2729 = vadd.xlane.f32.xlu0 %v2728
        %v2730 = vpop.xlane.xlu0 %2729
        %v2731 = vsel %vm2679, %v2568, 0.0
        %2732 = vadd.xlane.f32.xlu0 %v2731
        %v2733 = vpop.xlane.xlu0 %2732
        %v2734 = vsel %vm2679, %v2569, 0.0
        %2735 = vadd.xlane.f32.xlu0 %v2734
        %v2736 = vpop.xlane.xlu0 %2735
        %v2737 = vsel %vm2679, %v2570, 0.0
        %2738 = vadd.xlane.f32.xlu0 %v2737
        %v2739 = vpop.xlane.xlu0 %2738
        %v2740 = vsel %vm2679, %v2571, 0.0
        %2741 = vadd.xlane.f32.xlu0 %v2740
        %v2742 = vpop.xlane.xlu0 %2741
        %v2743 = vsel %vm2679, %v2572, 0.0
        %2744 = vadd.xlane.f32.xlu0 %v2743
        %v2745 = vpop.xlane.xlu0 %2744
        %v2746 = vsel %vm2679, %v2573, 0.0
        %2747 = vadd.xlane.f32.xlu0 %v2746
        %v2748 = vpop.xlane.xlu0 %2747
        %v2749 = vsel %vm2679, %v2574, 0.0
        %2750 = vadd.xlane.f32.xlu0 %v2749
        %v2751 = vpop.xlane.xlu0 %2750
        %v2752 = vsel %vm2679, %v2575, 0.0
        %2753 = vadd.xlane.f32.xlu0 %v2752
        %v2754 = vpop.xlane.xlu0 %2753
        %v2755 = vsel %vm2679, %v2576, 0.0
        %2756 = vadd.xlane.f32.xlu0 %v2755
        %v2757 = vpop.xlane.xlu0 %2756
        %v2758 = vsel %vm2679, %v2577, 0.0
        %2759 = vadd.xlane.f32.xlu0 %v2758
        %v2760 = vpop.xlane.xlu0 %2759
        %v2761 = vsel %vm2679, %v2578, 0.0
        %2762 = vadd.xlane.f32.xlu0 %v2761
        %v2763 = vpop.xlane.xlu0 %2762
        %v2764 = vsel %vm2679, %v2579, 0.0
        %2765 = vadd.xlane.f32.xlu0 %v2764
        %v2766 = vpop.xlane.xlu0 %2765
        %v2767 = vsel %vm2679, %v2580, 0.0
        %2768 = vadd.xlane.f32.xlu0 %v2767
        %v2769 = vpop.xlane.xlu0 %2768
        %v2770 = vsel %vm2679, %v2581, 0.0
        %2771 = vadd.xlane.f32.xlu0 %v2770
        %v2772 = vpop.xlane.xlu0 %2771
        %v2773 = vsel %vm2679, %v2582, 0.0
        %2774 = vadd.xlane.f32.xlu0 %v2773
        %v2775 = vpop.xlane.xlu0 %2774
        %v2776 = vsel %vm2679, %v2583, 0.0
        %2777 = vadd.xlane.f32.xlu0 %v2776
        %v2778 = vpop.xlane.xlu0 %2777
        %v2779 = vsel %vm2679, %v2584, 0.0
        %2780 = vadd.xlane.f32.xlu0 %v2779
        %v2781 = vpop.xlane.xlu0 %2780
        %v2782 = vsel %vm2679, %v2585, 0.0
        %2783 = vadd.xlane.f32.xlu0 %v2782
        %v2784 = vpop.xlane.xlu0 %2783
        %v2785 = vsel %vm2679, %v2586, 0.0
        %2786 = vadd.xlane.f32.xlu0 %v2785
        %v2787 = vpop.xlane.xlu0 %2786
        %v2788 = vsel %vm2679, %v2587, 0.0
        %2789 = vadd.xlane.f32.xlu0 %v2788
        %v2790 = vpop.xlane.xlu0 %2789
        %v2791 = vsel %vm2679, %v2588, 0.0
        %2792 = vadd.xlane.f32.xlu0 %v2791
        %v2793 = vpop.xlane.xlu0 %2792
        %v2794 = vsel %vm2679, %v2589, 0.0
        %2795 = vadd.xlane.f32.xlu0 %v2794
        %v2796 = vpop.xlane.xlu0 %2795
        %v2797 = vsel %vm2679, %v2590, 0.0
        %2798 = vadd.xlane.f32.xlu0 %v2797
        %v2799 = vpop.xlane.xlu0 %2798
        %v2800 = vsel %vm2679, %v2591, 0.0
        %2801 = vadd.xlane.f32.xlu0 %v2800
        %v2802 = vpop.xlane.xlu0 %2801
        %v2803 = vsel %vm2679, %v2592, 0.0
        %2804 = vadd.xlane.f32.xlu0 %v2803
        %v2805 = vpop.xlane.xlu0 %2804
        %v2806 = vsel %vm2679, %v2593, 0.0
        %2807 = vadd.xlane.f32.xlu0 %v2806
        %v2808 = vpop.xlane.xlu0 %2807
        %v2809 = vsel %vm2679, %v2594, 0.0
        %2810 = vadd.xlane.f32.xlu0 %v2809
        %v2811 = vpop.xlane.xlu0 %2810
        %v2812 = vsel %vm2679, %v2595, 0.0
        %2813 = vadd.xlane.f32.xlu0 %v2812
        %v2814 = vpop.xlane.xlu0 %2813
        %v2815 = vsel %vm2679, %v2596, 0.0
        %2816 = vadd.xlane.f32.xlu0 %v2815
        %v2817 = vpop.xlane.xlu0 %2816
        %v2818 = vsel %vm2679, %v2597, 0.0
        %2819 = vadd.xlane.f32.xlu0 %v2818
        %v2820 = vpop.xlane.xlu0 %2819
        %v2821 = vsel %vm2679, %v2598, 0.0
        %2822 = vadd.xlane.f32.xlu0 %v2821
        %v2823 = vpop.xlane.xlu0 %2822
        %v2824 = vsel %vm2679, %v2599, 0.0
        %2825 = vadd.xlane.f32.xlu0 %v2824
        %v2826 = vpop.xlane.xlu0 %2825
        %v2827 = vsel %vm2679, %v2600, 0.0
        %2828 = vadd.xlane.f32.xlu0 %v2827
        %v2829 = vpop.xlane.xlu0 %2828
        %v2830 = vsel %vm2679, %v2601, 0.0
        %2831 = vadd.xlane.f32.xlu0 %v2830
        %v2832 = vpop.xlane.xlu0 %2831
        %v2833 = vsel %vm2679, %v2602, 0.0
        %2834 = vadd.xlane.f32.xlu0 %v2833
        %v2835 = vpop.xlane.xlu0 %2834
        %v2836 = vsel %vm2679, %v2603, 0.0
        %2837 = vadd.xlane.f32.xlu0 %v2836
        %v2838 = vpop.xlane.xlu0 %2837
        %v2839 = vsel %vm2679, %v2604, 0.0
        %2840 = vadd.xlane.f32.xlu0 %v2839
        %v2841 = vpop.xlane.xlu0 %2840
        %v2842 = vsel %vm2679, %v2605, 0.0
        %2843 = vadd.xlane.f32.xlu0 %v2842
        %v2844 = vpop.xlane.xlu0 %2843
        %v2845 = vsel %vm2679, %v2606, 0.0
        %2846 = vadd.xlane.f32.xlu0 %v2845
        %v2847 = vpop.xlane.xlu0 %2846
        %v2848 = vsel %vm2679, %v2607, 0.0
        %2849 = vadd.xlane.f32.xlu0 %v2848
        %v2850 = vpop.xlane.xlu0 %2849
        %v2851 = vsel %vm2679, %v2608, 0.0
        %2852 = vadd.xlane.f32.xlu0 %v2851
        %v2853 = vpop.xlane.xlu0 %2852
        %v2854 = vsel %vm2679, %v2609, 0.0
        %2855 = vadd.xlane.f32.xlu0 %v2854
        %v2856 = vpop.xlane.xlu0 %2855
        %v2857 = vsel %vm2679, %v2610, 0.0
        %2858 = vadd.xlane.f32.xlu0 %v2857
        %v2859 = vpop.xlane.xlu0 %2858
        %v2860 = vsel %vm2679, %v2611, 0.0
        %2861 = vadd.xlane.f32.xlu0 %v2860
        %v2862 = vpop.xlane.xlu0 %2861
        %v2863 = vsel %vm2679, %v2612, 0.0
        %2864 = vadd.xlane.f32.xlu0 %v2863
        %v2865 = vpop.xlane.xlu0 %2864
        %v2866 = vsel %vm2679, %v2613, 0.0
        %2867 = vadd.xlane.f32.xlu0 %v2866
        %v2868 = vpop.xlane.xlu0 %2867
        %v2869 = vsel %vm2679, %v2614, 0.0
        %2870 = vadd.xlane.f32.xlu0 %v2869
        %v2871 = vpop.xlane.xlu0 %2870
        %v2872 = vsel %vm2679, %v2615, 0.0
        %2873 = vadd.xlane.f32.xlu0 %v2872
        %v2874 = vpop.xlane.xlu0 %2873
        %v2875 = vsel %vm2679, %v2616, 0.0
        %2876 = vadd.xlane.f32.xlu0 %v2875
        %v2877 = vpop.xlane.xlu0 %2876
        %v2878 = vsel %vm2679, %v2617, 0.0
        %2879 = vadd.xlane.f32.xlu0 %v2878
        %v2880 = vpop.xlane.xlu0 %2879
        %v2881 = vsel %vm2679, %v2618, 0.0
        %2882 = vadd.xlane.f32.xlu0 %v2881
        %v2883 = vpop.xlane.xlu0 %2882
        %v2884 = vsel %vm2679, %v2619, 0.0
        %2885 = vadd.xlane.f32.xlu0 %v2884
        %v2886 = vpop.xlane.xlu0 %2885
        %v2887 = vsel %vm2679, %v2620, 0.0
        %2888 = vadd.xlane.f32.xlu0 %v2887
        %v2889 = vpop.xlane.xlu0 %2888
        %v2890 = vsel %vm2679, %v2621, 0.0
        %2891 = vadd.xlane.f32.xlu0 %v2890
        %v2892 = vpop.xlane.xlu0 %2891
        %v2893 = vsel %vm2679, %v2622, 0.0
        %2894 = vadd.xlane.f32.xlu0 %v2893
        %v2895 = vpop.xlane.xlu0 %2894
        %v2896 = vsel %vm2679, %v2623, 0.0
        %2897 = vadd.xlane.f32.xlu0 %v2896
        %v2898 = vpop.xlane.xlu0 %2897
        %v2899 = vsel %vm2679, %v2624, 0.0
        %2900 = vadd.xlane.f32.xlu0 %v2899
        %v2901 = vpop.xlane.xlu0 %2900
        %v2902 = vsel %vm2679, %v2625, 0.0
        %2903 = vadd.xlane.f32.xlu0 %v2902
        %v2904 = vpop.xlane.xlu0 %2903
        %v2905 = vsel %vm2679, %v2626, 0.0
        %2906 = vadd.xlane.f32.xlu0 %v2905
        %v2907 = vpop.xlane.xlu0 %2906
        %v2908 = vsel %vm2679, %v2627, 0.0
        %2909 = vadd.xlane.f32.xlu0 %v2908
        %v2910 = vpop.xlane.xlu0 %2909
        %v2911 = vsel %vm2679, %v2628, 0.0
        %2912 = vadd.xlane.f32.xlu0 %v2911
        %v2913 = vpop.xlane.xlu0 %2912
        %v2914 = vsel %vm2679, %v2629, 0.0
        %2915 = vadd.xlane.f32.xlu0 %v2914
        %v2916 = vpop.xlane.xlu0 %2915
        %v2917 = vsel %vm2679, %v2630, 0.0
        %2918 = vadd.xlane.f32.xlu0 %v2917
        %v2919 = vpop.xlane.xlu0 %2918
        %v2920 = vsel %vm2679, %v2631, 0.0
        %2921 = vadd.xlane.f32.xlu0 %v2920
        %v2922 = vpop.xlane.xlu0 %2921
        %v2923 = vsel %vm2679, %v2632, 0.0
        %2924 = vadd.xlane.f32.xlu0 %v2923
        %v2925 = vpop.xlane.xlu0 %2924
        %v2926 = vsel %vm2679, %v2633, 0.0
        %2927 = vadd.xlane.f32.xlu0 %v2926
        %v2928 = vpop.xlane.xlu0 %2927
        %v2929 = vsel %vm2679, %v2634, 0.0
        %2930 = vadd.xlane.f32.xlu0 %v2929
        %v2931 = vpop.xlane.xlu0 %2930
        %v2932 = vsel %vm2679, %v2635, 0.0
        %2933 = vadd.xlane.f32.xlu0 %v2932
        %v2934 = vpop.xlane.xlu0 %2933
        %v2935 = vsel %vm2679, %v2636, 0.0
        %2936 = vadd.xlane.f32.xlu0 %v2935
        %v2937 = vpop.xlane.xlu0 %2936
        %v2938 = vsel %vm2679, %v2637, 0.0
        %2939 = vadd.xlane.f32.xlu0 %v2938
        %v2940 = vpop.xlane.xlu0 %2939
        %v2941 = vsel %vm2679, %v2638, 0.0
        %2942 = vadd.xlane.f32.xlu0 %v2941
        %v2943 = vpop.xlane.xlu0 %2942
        %v2944 = vsel %vm2679, %v2639, 0.0
        %2945 = vadd.xlane.f32.xlu0 %v2944
        %v2946 = vpop.xlane.xlu0 %2945
        %v2947 = vsel %vm2679, %v2640, 0.0
        %2948 = vadd.xlane.f32.xlu0 %v2947
        %v2949 = vpop.xlane.xlu0 %2948
        %v2950 = vsel %vm2679, %v2641, 0.0
        %2951 = vadd.xlane.f32.xlu0 %v2950
        %v2952 = vpop.xlane.xlu0 %2951
        %v2953 = vsel %vm2679, %v2642, 0.0
        %2954 = vadd.xlane.f32.xlu0 %v2953
        %v2955 = vpop.xlane.xlu0 %2954
        %v2956 = vsel %vm2679, %v2643, 0.0
        %2957 = vadd.xlane.f32.xlu0 %v2956
        %v2958 = vpop.xlane.xlu0 %2957
        %v2959 = vsel %vm2679, %v2644, 0.0
        %2960 = vadd.xlane.f32.xlu0 %v2959
        %v2961 = vpop.xlane.xlu0 %2960
        %v2962 = vsel %vm2679, %v2645, 0.0
        %2963 = vadd.xlane.f32.xlu0 %v2962
        %v2964 = vpop.xlane.xlu0 %2963
        %v2965 = vsel %vm2679, %v2646, 0.0
        %2966 = vadd.xlane.f32.xlu0 %v2965
        %v2967 = vpop.xlane.xlu0 %2966
        %v2968 = vsel %vm2679, %v2647, 0.0
        %2969 = vadd.xlane.f32.xlu0 %v2968
        %v2970 = vpop.xlane.xlu0 %2969
        %v2971 = vsel %vm2679, %v2648, 0.0
        %2972 = vadd.xlane.f32.xlu0 %v2971
        %v2973 = vpop.xlane.xlu0 %2972
        %v2974 = vsel %vm2679, %v2649, 0.0
        %2975 = vadd.xlane.f32.xlu0 %v2974
        %v2976 = vpop.xlane.xlu0 %2975
        %v2977 = vsel %vm2679, %v2650, 0.0
        %2978 = vadd.xlane.f32.xlu0 %v2977
        %v2979 = vpop.xlane.xlu0 %2978
        %v2980 = vsel %vm2679, %v2651, 0.0
        %2981 = vadd.xlane.f32.xlu0 %v2980
        %v2982 = vpop.xlane.xlu0 %2981
        %v2983 = vsel %vm2679, %v2652, 0.0
        %2984 = vadd.xlane.f32.xlu0 %v2983
        %v2985 = vpop.xlane.xlu0 %2984
        %v2986 = vsel %vm2679, %v2653, 0.0
        %2987 = vadd.xlane.f32.xlu0 %v2986
        %v2988 = vpop.xlane.xlu0 %2987
        %v2989 = vsel %vm2679, %v2654, 0.0
        %2990 = vadd.xlane.f32.xlu0 %v2989
        %v2991 = vpop.xlane.xlu0 %2990
        %v2992 = vsel %vm2679, %v2655, 0.0
        %2993 = vadd.xlane.f32.xlu0 %v2992
        %v2994 = vpop.xlane.xlu0 %2993
        %v2995 = vsel %vm2679, %v2656, 0.0
        %2996 = vadd.xlane.f32.xlu0 %v2995
        %v2997 = vpop.xlane.xlu0 %2996
        %v2998 = vsel %vm2679, %v2657, 0.0
        %2999 = vadd.xlane.f32.xlu0 %v2998
        %v3000 = vpop.xlane.xlu0 %2999
        %v3001 = vsel %vm2679, %v2658, 0.0
        %3002 = vadd.xlane.f32.xlu0 %v3001
        %v3003 = vpop.xlane.xlu0 %3002
        %v3004 = vsel %vm2679, %v2659, 0.0
        %3005 = vadd.xlane.f32.xlu0 %v3004
        %v3006 = vpop.xlane.xlu0 %3005
        %v3007 = vsel %vm2679, %v2660, 0.0
        %3008 = vadd.xlane.f32.xlu0 %v3007
        %v3009 = vpop.xlane.xlu0 %3008
        %v3010 = vsel %vm2679, %v2661, 0.0
        %3011 = vadd.xlane.f32.xlu0 %v3010
        %v3012 = vpop.xlane.xlu0 %3011
        %v3013 = vsel %vm2679, %v2662, 0.0
        %3014 = vadd.xlane.f32.xlu0 %v3013
        %v3015 = vpop.xlane.xlu0 %3014
        %v3016 = vsel %vm2679, %v2663, 0.0
        %3017 = vadd.xlane.f32.xlu0 %v3016
        %v3018 = vpop.xlane.xlu0 %3017
        %v3019 = vsel %vm2679, %v2664, 0.0
        %3020 = vadd.xlane.f32.xlu0 %v3019
        %v3021 = vpop.xlane.xlu0 %3020
        %v3022 = vsel %vm2679, %v2665, 0.0
        %3023 = vadd.xlane.f32.xlu0 %v3022
        %v3024 = vpop.xlane.xlu0 %3023
        %v3025 = vsel %vm2679, %v2666, 0.0
        %3026 = vadd.xlane.f32.xlu0 %v3025
        %v3027 = vpop.xlane.xlu0 %3026
        %v3028 = vsel %vm2679, %v2667, 0.0
        %3029 = vadd.xlane.f32.xlu0 %v3028
        %v3030 = vpop.xlane.xlu0 %3029
        %v3031 = vsel %vm2679, %v2668, 0.0
        %3032 = vadd.xlane.f32.xlu0 %v3031
        %v3033 = vpop.xlane.xlu0 %3032
        %v3034 = vsel %vm2679, %v2669, 0.0
        %3035 = vadd.xlane.f32.xlu0 %v3034
        %v3036 = vpop.xlane.xlu0 %3035
        %v3037 = vsel %vm2679, %v2670, 0.0
        %3038 = vadd.xlane.f32.xlu0 %v3037
        %v3039 = vpop.xlane.xlu0 %3038
        %v3040 = vsel %vm2679, %v2671, 0.0
        %3041 = vadd.xlane.f32.xlu0 %v3040
        %v3042 = vpop.xlane.xlu0 %3041
        %v3043 = vsel %vm2679, %v2672, 0.0
        %3044 = vadd.xlane.f32.xlu0 %v3043
        %v3045 = vpop.xlane.xlu0 %3044
        %v3046 = vsel %vm2679, %v2673, 0.0
        %3047 = vadd.xlane.f32.xlu0 %v3046
        %v3048 = vpop.xlane.xlu0 %3047
        %v3049 = vsel %vm2679, %v2674, 0.0
        %3050 = vadd.xlane.f32.xlu0 %v3049
        %v3051 = vpop.xlane.xlu0 %3050
        %v3052 = vsel %vm2679, %v2675, 0.0
        %3053 = vadd.xlane.f32.xlu0 %v3052
        %v3054 = vpop.xlane.xlu0 %3053
        %v3055 = vsel %vm2679, %v2676, 0.0
        %3056 = vadd.xlane.f32.xlu0 %v3055
        %v3057 = vpop.xlane.xlu0 %3056
        %v3058 = vsel %vm2679, %v2677, 0.0
        %3059 = vadd.xlane.f32.xlu0 %v3058
        %v3060 = vpop.xlane.xlu0 %3059
        %v3061 = vsel %vm2679, %v2678, 0.0
        %3062 = vadd.xlane.f32.xlu0 %v3061
        %v3063 = vpop.xlane.xlu0 %3062
        %v3096 = vlaneseq
        %v3097 = vand.u32 %v3096, 127
        %v3098 = vlaneseq
        %v3099 = vshrl.u32 %v3098, 7
        %v3100 = vsub.s32 %v3097, %v3099
        %v3101 = vrot.slane %v2682, %v3100
        %v3102 = vadd.s32 %v3097, 4294967288
        %v3103 = vlaneseq
        %v3104 = vshrl.u32 %v3103, 7
        %v3105 = vsub.s32 %v3102, %v3104
        %v3106 = vrot.slane %v2685, %v3105
        %vm3107 = vcmask 130112
        %v3108 = vsel %vm3107, %v3106, %v3101
        %v3109 = vlaneseq
        %v3110 = vshrl.u32 %v3109, 7
        %v3111 = vsub.s32 %v3097, %v3110
        %v3112 = vrot.slane %v2688, %v3111
        %v3113 = vlaneseq
        %v3114 = vshrl.u32 %v3113, 7
        %v3115 = vsub.s32 %v3102, %v3114
        %v3116 = vrot.slane %v2691, %v3115
        %v3117 = vsel %vm3107, %v3116, %v3112
        %v3118 = vlaneseq
        %v3119 = vshrl.u32 %v3118, 7
        %v3120 = vsub.s32 %v3097, %v3119
        %v3121 = vrot.slane %v2694, %v3120
        %v3122 = vlaneseq
        %v3123 = vshrl.u32 %v3122, 7
        %v3124 = vsub.s32 %v3102, %v3123
        %v3125 = vrot.slane %v2697, %v3124
        %v3126 = vsel %vm3107, %v3125, %v3121
        %v3127 = vlaneseq
        %v3128 = vshrl.u32 %v3127, 7
        %v3129 = vsub.s32 %v3097, %v3128
        %v3130 = vrot.slane %v2700, %v3129
        %v3131 = vlaneseq
        %v3132 = vshrl.u32 %v3131, 7
        %v3133 = vsub.s32 %v3102, %v3132
        %v3134 = vrot.slane %v2703, %v3133
        %v3135 = vsel %vm3107, %v3134, %v3130
        %v3136 = vlaneseq
        %v3137 = vshrl.u32 %v3136, 7
        %v3138 = vsub.s32 %v3097, %v3137
        %v3139 = vrot.slane %v2706, %v3138
        %v3140 = vlaneseq
        %v3141 = vshrl.u32 %v3140, 7
        %v3142 = vsub.s32 %v3102, %v3141
        %v3143 = vrot.slane %v2709, %v3142
        %v3144 = vsel %vm3107, %v3143, %v3139
        %v3145 = vlaneseq
        %v3146 = vshrl.u32 %v3145, 7
        %v3147 = vsub.s32 %v3097, %v3146
        %v3148 = vrot.slane %v2712, %v3147
        %v3149 = vlaneseq
        %v3150 = vshrl.u32 %v3149, 7
        %v3151 = vsub.s32 %v3102, %v3150
        %v3152 = vrot.slane %v2715, %v3151
        %v3153 = vsel %vm3107, %v3152, %v3148
        %v3154 = vlaneseq
        %v3155 = vshrl.u32 %v3154, 7
        %v3156 = vsub.s32 %v3097, %v3155
        %v3157 = vrot.slane %v2718, %v3156
        %v3158 = vlaneseq
        %v3159 = vshrl.u32 %v3158, 7
        %v3160 = vsub.s32 %v3102, %v3159
        %v3161 = vrot.slane %v2721, %v3160
        %v3162 = vsel %vm3107, %v3161, %v3157
        %v3163 = vlaneseq
        %v3164 = vshrl.u32 %v3163, 7
        %v3165 = vsub.s32 %v3097, %v3164
        %v3166 = vrot.slane %v2724, %v3165
        %v3167 = vlaneseq
        %v3168 = vshrl.u32 %v3167, 7
        %v3169 = vsub.s32 %v3102, %v3168
        %v3170 = vrot.slane %v2727, %v3169
        %v3171 = vsel %vm3107, %v3170, %v3166
        %v3172 = vlaneseq
        %v3173 = vshrl.u32 %v3172, 7
        %v3174 = vsub.s32 %v3097, %v3173
        %v3175 = vrot.slane %v2730, %v3174
        %v3176 = vlaneseq
        %v3177 = vshrl.u32 %v3176, 7
        %v3178 = vsub.s32 %v3102, %v3177
        %v3179 = vrot.slane %v2733, %v3178
        %v3180 = vsel %vm3107, %v3179, %v3175
        %v3181 = vlaneseq
        %v3182 = vshrl.u32 %v3181, 7
        %v3183 = vsub.s32 %v3097, %v3182
        %v3184 = vrot.slane %v2736, %v3183
        %v3185 = vlaneseq
        %v3186 = vshrl.u32 %v3185, 7
        %v3187 = vsub.s32 %v3102, %v3186
        %v3188 = vrot.slane %v2739, %v3187
        %v3189 = vsel %vm3107, %v3188, %v3184
        %v3190 = vlaneseq
        %v3191 = vshrl.u32 %v3190, 7
        %v3192 = vsub.s32 %v3097, %v3191
        %v3193 = vrot.slane %v2742, %v3192
        %v3194 = vlaneseq
        %v3195 = vshrl.u32 %v3194, 7
        %v3196 = vsub.s32 %v3102, %v3195
        %v3197 = vrot.slane %v2745, %v3196
        %v3198 = vsel %vm3107, %v3197, %v3193
        %v3199 = vlaneseq
        %v3200 = vshrl.u32 %v3199, 7
        %v3201 = vsub.s32 %v3097, %v3200
        %v3202 = vrot.slane %v2748, %v3201
        %v3203 = vlaneseq
        %v3204 = vshrl.u32 %v3203, 7
        %v3205 = vsub.s32 %v3102, %v3204
        %v3206 = vrot.slane %v2751, %v3205
        %v3207 = vsel %vm3107, %v3206, %v3202
        %v3208 = vlaneseq
        %v3209 = vshrl.u32 %v3208, 7
        %v3210 = vsub.s32 %v3097, %v3209
        %v3211 = vrot.slane %v2754, %v3210
        %v3212 = vlaneseq
        %v3213 = vshrl.u32 %v3212, 7
        %v3214 = vsub.s32 %v3102, %v3213
        %v3215 = vrot.slane %v2757, %v3214
        %v3216 = vsel %vm3107, %v3215, %v3211
        %v3217 = vlaneseq
        %v3218 = vshrl.u32 %v3217, 7
        %v3219 = vsub.s32 %v3097, %v3218
        %v3220 = vrot.slane %v2760, %v3219
        %v3221 = vlaneseq
        %v3222 = vshrl.u32 %v3221, 7
        %v3223 = vsub.s32 %v3102, %v3222
        %v3224 = vrot.slane %v2763, %v3223
        %v3225 = vsel %vm3107, %v3224, %v3220
        %v3226 = vlaneseq
        %v3227 = vshrl.u32 %v3226, 7
        %v3228 = vsub.s32 %v3097, %v3227
        %v3229 = vrot.slane %v2766, %v3228
        %v3230 = vlaneseq
        %v3231 = vshrl.u32 %v3230, 7
        %v3232 = vsub.s32 %v3102, %v3231
        %v3233 = vrot.slane %v2769, %v3232
        %v3234 = vsel %vm3107, %v3233, %v3229
        %v3235 = vlaneseq
        %v3236 = vshrl.u32 %v3235, 7
        %v3237 = vsub.s32 %v3097, %v3236
        %v3238 = vrot.slane %v2772, %v3237
        %v3239 = vlaneseq
        %v3240 = vshrl.u32 %v3239, 7
        %v3241 = vsub.s32 %v3102, %v3240
        %v3242 = vrot.slane %v2775, %v3241
        %v3243 = vsel %vm3107, %v3242, %v3238
        %vm3244 = vcmask 1041409
        %v3245 = vsel %vm3244, %v3117, %v3108
        %vm3246 = vcmask 1042434
        %v3247 = vsel %vm3246, %v3126, %v3245
        %vm3248 = vcmask 1043459
        %v3249 = vsel %vm3248, %v3135, %v3247
        %vm3250 = vcmask 1044484
        %v3251 = vsel %vm3250, %v3144, %v3249
        %vm3252 = vcmask 1045509
        %v3253 = vsel %vm3252, %v3153, %v3251
        %vm3254 = vcmask 1046534
        %v3255 = vsel %vm3254, %v3162, %v3253
        %vm3256 = vcmask 1047559
        %v3257 = vsel %vm3256, %v3171, %v3255
        %v3258 = vsel %vm3244, %v3189, %v3180
        %v3259 = vsel %vm3246, %v3198, %v3258
        %v3260 = vsel %vm3248, %v3207, %v3259
        %v3261 = vsel %vm3250, %v3216, %v3260
        %v3262 = vsel %vm3252, %v3225, %v3261
        %v3263 = vsel %vm3254, %v3234, %v3262
        %v3264 = vsel %vm3256, %v3243, %v3263
        %v3268 = vsel %vm2679, %v1563, 0
        %v3271 = vsel %vm2679, %v1567, 0
        %3273 = vmatprep.subr.bf16.mxu0 0
        %3274 = vmatpush1.bf16.xpose.msra.mxu0 %v3271
        %3275 = vmatprep.subr.bf16.mxu0 0
        %3276 = vmatpush1.bf16.xpose.msra.mxu0 0
        %3277 = vmatprep.subr.bf16.mxu0 0
        %3278 = vmatpush1.bf16.xpose.msra.mxu0 0
        %3279 = vmatprep.subr.bf16.mxu0 0
        %3280 = vmatpush1.bf16.xpose.msra.mxu0 0
        %3281 = vmatprep.subr.bf16.mxu0 0
        %3282 = vmatpush1.bf16.xpose.msra.mxu0 0
        %3283 = vmatprep.subr.bf16.mxu0 0
        %3284 = vmatpush1.bf16.xpose.msra.mxu0 0
        %3285 = vmatprep.subr.bf16.mxu0 0
        %3286 = vmatpush1.bf16.xpose.msra.mxu0 0
        %3287 = vmatprep.subr.bf16.mxu0 0
        %3288 = vmatpush1.bf16.xpose.msra.mxu0 0
        %3289 = vmatprep.subr.bf16.mxu0 0
        %3290 = vmatpush1.bf16.xpose.msra.mxu0 0
        %3291 = vmatprep.subr.bf16.mxu0 0
        %3292 = vmatpush1.bf16.xpose.msra.mxu0 0
        %3293 = vmatprep.subr.bf16.mxu0 0
        %3294 = vmatpush1.bf16.xpose.msra.mxu0 0
        %3295 = vmatprep.subr.bf16.mxu0 0
        %3296 = vmatpush1.bf16.xpose.msra.mxu0 0
        %3297 = vmatprep.subr.bf16.mxu0 0
        %3298 = vmatpush1.bf16.xpose.msra.mxu0 0
        %3299 = vmatprep.subr.bf16.mxu0 0
        %3300 = vmatpush1.bf16.xpose.msra.mxu0 0
        %3301 = vmatprep.subr.bf16.mxu0 0
        %3302 = vmatpush1.bf16.xpose.msra.mxu0 0
        %3303 = vmatprep.subr.bf16.mxu0 0
        %3304 = vmatpush1.bf16.xpose.msra.mxu0 0
        %3305 = vmatprep.mubr.bf16.mxu0 0
        %3306 = vmatmul.mubr.bf16.gmra.mrb[0].mxu0 %v3268
        %v3307 = vpop.f32.mrb[0].mxu0
        %v3308 = vadd.f32 %v3257, %v3307
        %v3309 = vpop.f32.mrb[0].mxu0
        %v3310 = vpop.f32.mrb[0].mxu0
        %v3311 = vadd.f32 %v3264, %v3310
        %v3312 = vpop.f32.mrb[0].mxu0
        %3313 = vdwg.mxu0
        %v3346 = vlaneseq
        %v3347 = vshrl.u32 %v3346, 7
        %v3348 = vsub.s32 %v3097, %v3347
        %v3349 = vrot.slane %v2778, %v3348
        %v3350 = vlaneseq
        %v3351 = vshrl.u32 %v3350, 7
        %v3352 = vsub.s32 %v3102, %v3351
        %v3353 = vrot.slane %v2781, %v3352
        %v3354 = vsel %vm3107, %v3353, %v3349
        %v3355 = vlaneseq
        %v3356 = vshrl.u32 %v3355, 7
        %v3357 = vsub.s32 %v3097, %v3356
        %v3358 = vrot.slane %v2784, %v3357
        %v3359 = vlaneseq
        %v3360 = vshrl.u32 %v3359, 7
        %v3361 = vsub.s32 %v3102, %v3360
        %v3362 = vrot.slane %v2787, %v3361
        %v3363 = vsel %vm3107, %v3362, %v3358
        %v3364 = vlaneseq
        %v3365 = vshrl.u32 %v3364, 7
        %v3366 = vsub.s32 %v3097, %v3365
        %v3367 = vrot.slane %v2790, %v3366
        %v3368 = vlaneseq
        %v3369 = vshrl.u32 %v3368, 7
        %v3370 = vsub.s32 %v3102, %v3369
        %v3371 = vrot.slane %v2793, %v3370
        %v3372 = vsel %vm3107, %v3371, %v3367
        %v3373 = vlaneseq
        %v3374 = vshrl.u32 %v3373, 7
        %v3375 = vsub.s32 %v3097, %v3374
        %v3376 = vrot.slane %v2796, %v3375
        %v3377 = vlaneseq
        %v3378 = vshrl.u32 %v3377, 7
        %v3379 = vsub.s32 %v3102, %v3378
        %v3380 = vrot.slane %v2799, %v3379
        %v3381 = vsel %vm3107, %v3380, %v3376
        %v3382 = vlaneseq
        %v3383 = vshrl.u32 %v3382, 7
        %v3384 = vsub.s32 %v3097, %v3383
        %v3385 = vrot.slane %v2802, %v3384
        %v3386 = vlaneseq
        %v3387 = vshrl.u32 %v3386, 7
        %v3388 = vsub.s32 %v3102, %v3387
        %v3389 = vrot.slane %v2805, %v3388
        %v3390 = vsel %vm3107, %v3389, %v3385
        %v3391 = vlaneseq
        %v3392 = vshrl.u32 %v3391, 7
        %v3393 = vsub.s32 %v3097, %v3392
        %v3394 = vrot.slane %v2808, %v3393
        %v3395 = vlaneseq
        %v3396 = vshrl.u32 %v3395, 7
        %v3397 = vsub.s32 %v3102, %v3396
        %v3398 = vrot.slane %v2811, %v3397
        %v3399 = vsel %vm3107, %v3398, %v3394
        %v3400 = vlaneseq
        %v3401 = vshrl.u32 %v3400, 7
        %v3402 = vsub.s32 %v3097, %v3401
        %v3403 = vrot.slane %v2814, %v3402
        %v3404 = vlaneseq
        %v3405 = vshrl.u32 %v3404, 7
        %v3406 = vsub.s32 %v3102, %v3405
        %v3407 = vrot.slane %v2817, %v3406
        %v3408 = vsel %vm3107, %v3407, %v3403
        %v3409 = vlaneseq
        %v3410 = vshrl.u32 %v3409, 7
        %v3411 = vsub.s32 %v3097, %v3410
        %v3412 = vrot.slane %v2820, %v3411
        %v3413 = vlaneseq
        %v3414 = vshrl.u32 %v3413, 7
        %v3415 = vsub.s32 %v3102, %v3414
        %v3416 = vrot.slane %v2823, %v3415
        %v3417 = vsel %vm3107, %v3416, %v3412
        %v3418 = vlaneseq
        %v3419 = vshrl.u32 %v3418, 7
        %v3420 = vsub.s32 %v3097, %v3419
        %v3421 = vrot.slane %v2826, %v3420
        %v3422 = vlaneseq
        %v3423 = vshrl.u32 %v3422, 7
        %v3424 = vsub.s32 %v3102, %v3423
        %v3425 = vrot.slane %v2829, %v3424
        %v3426 = vsel %vm3107, %v3425, %v3421
        %v3427 = vlaneseq
        %v3428 = vshrl.u32 %v3427, 7
        %v3429 = vsub.s32 %v3097, %v3428
        %v3430 = vrot.slane %v2832, %v3429
        %v3431 = vlaneseq
        %v3432 = vshrl.u32 %v3431, 7
        %v3433 = vsub.s32 %v3102, %v3432
        %v3434 = vrot.slane %v2835, %v3433
        %v3435 = vsel %vm3107, %v3434, %v3430
        %v3436 = vlaneseq
        %v3437 = vshrl.u32 %v3436, 7
        %v3438 = vsub.s32 %v3097, %v3437
        %v3439 = vrot.slane %v2838, %v3438
        %v3440 = vlaneseq
        %v3441 = vshrl.u32 %v3440, 7
        %v3442 = vsub.s32 %v3102, %v3441
        %v3443 = vrot.slane %v2841, %v3442
        %v3444 = vsel %vm3107, %v3443, %v3439
        %v3445 = vlaneseq
        %v3446 = vshrl.u32 %v3445, 7
        %v3447 = vsub.s32 %v3097, %v3446
        %v3448 = vrot.slane %v2844, %v3447
        %v3449 = vlaneseq
        %v3450 = vshrl.u32 %v3449, 7
        %v3451 = vsub.s32 %v3102, %v3450
        %v3452 = vrot.slane %v2847, %v3451
        %v3453 = vsel %vm3107, %v3452, %v3448
        %v3454 = vlaneseq
        %v3455 = vshrl.u32 %v3454, 7
        %v3456 = vsub.s32 %v3097, %v3455
        %v3457 = vrot.slane %v2850, %v3456
        %v3458 = vlaneseq
        %v3459 = vshrl.u32 %v3458, 7
        %v3460 = vsub.s32 %v3102, %v3459
        %v3461 = vrot.slane %v2853, %v3460
        %v3462 = vsel %vm3107, %v3461, %v3457
        %v3463 = vlaneseq
        %v3464 = vshrl.u32 %v3463, 7
        %v3465 = vsub.s32 %v3097, %v3464
        %v3466 = vrot.slane %v2856, %v3465
        %v3467 = vlaneseq
        %v3468 = vshrl.u32 %v3467, 7
        %v3469 = vsub.s32 %v3102, %v3468
        %v3470 = vrot.slane %v2859, %v3469
        %v3471 = vsel %vm3107, %v3470, %v3466
        %v3472 = vlaneseq
        %v3473 = vshrl.u32 %v3472, 7
        %v3474 = vsub.s32 %v3097, %v3473
        %v3475 = vrot.slane %v2862, %v3474
        %v3476 = vlaneseq
        %v3477 = vshrl.u32 %v3476, 7
        %v3478 = vsub.s32 %v3102, %v3477
        %v3479 = vrot.slane %v2865, %v3478
        %v3480 = vsel %vm3107, %v3479, %v3475
        %v3481 = vlaneseq
        %v3482 = vshrl.u32 %v3481, 7
        %v3483 = vsub.s32 %v3097, %v3482
        %v3484 = vrot.slane %v2868, %v3483
        %v3485 = vlaneseq
        %v3486 = vshrl.u32 %v3485, 7
        %v3487 = vsub.s32 %v3102, %v3486
        %v3488 = vrot.slane %v2871, %v3487
        %v3489 = vsel %vm3107, %v3488, %v3484
        %v3490 = vsel %vm3244, %v3363, %v3354
        %v3491 = vsel %vm3246, %v3372, %v3490
        %v3492 = vsel %vm3248, %v3381, %v3491
        %v3493 = vsel %vm3250, %v3390, %v3492
        %v3494 = vsel %vm3252, %v3399, %v3493
        %v3495 = vsel %vm3254, %v3408, %v3494
        %v3496 = vsel %vm3256, %v3417, %v3495
        %v3497 = vsel %vm3244, %v3435, %v3426
        %v3498 = vsel %vm3246, %v3444, %v3497
        %v3499 = vsel %vm3248, %v3453, %v3498
        %v3500 = vsel %vm3250, %v3462, %v3499
        %v3501 = vsel %vm3252, %v3471, %v3500
        %v3502 = vsel %vm3254, %v3480, %v3501
        %v3503 = vsel %vm3256, %v3489, %v3502
        %v3507 = vsel %vm2679, %v1564, 0
        %v3510 = vsel %vm2679, %v1568, 0
        %3512 = vmatprep.subr.bf16.mxu0 0
        %3513 = vmatpush1.bf16.xpose.msra.mxu0 %v3510
        %3514 = vmatprep.subr.bf16.mxu0 0
        %3515 = vmatpush1.bf16.xpose.msra.mxu0 0
        %3516 = vmatprep.subr.bf16.mxu0 0
        %3517 = vmatpush1.bf16.xpose.msra.mxu0 0
        %3518 = vmatprep.subr.bf16.mxu0 0
        %3519 = vmatpush1.bf16.xpose.msra.mxu0 0
        %3520 = vmatprep.subr.bf16.mxu0 0
        %3521 = vmatpush1.bf16.xpose.msra.mxu0 0
        %3522 = vmatprep.subr.bf16.mxu0 0
        %3523 = vmatpush1.bf16.xpose.msra.mxu0 0
        %3524 = vmatprep.subr.bf16.mxu0 0
        %3525 = vmatpush1.bf16.xpose.msra.mxu0 0
        %3526 = vmatprep.subr.bf16.mxu0 0
        %3527 = vmatpush1.bf16.xpose.msra.mxu0 0
        %3528 = vmatprep.subr.bf16.mxu0 0
        %3529 = vmatpush1.bf16.xpose.msra.mxu0 0
        %3530 = vmatprep.subr.bf16.mxu0 0
        %3531 = vmatpush1.bf16.xpose.msra.mxu0 0
        %3532 = vmatprep.subr.bf16.mxu0 0
        %3533 = vmatpush1.bf16.xpose.msra.mxu0 0
        %3534 = vmatprep.subr.bf16.mxu0 0
        %3535 = vmatpush1.bf16.xpose.msra.mxu0 0
        %3536 = vmatprep.subr.bf16.mxu0 0
        %3537 = vmatpush1.bf16.xpose.msra.mxu0 0
        %3538 = vmatprep.subr.bf16.mxu0 0
        %3539 = vmatpush1.bf16.xpose.msra.mxu0 0
        %3540 = vmatprep.subr.bf16.mxu0 0
        %3541 = vmatpush1.bf16.xpose.msra.mxu0 0
        %3542 = vmatprep.subr.bf16.mxu0 0
        %3543 = vmatpush1.bf16.xpose.msra.mxu0 0
        %3544 = vmatprep.mubr.bf16.mxu0 0
        %3545 = vmatmul.mubr.bf16.gmra.mrb[0].mxu0 %v3507
        %v3546 = vpop.f32.mrb[0].mxu0
        %v3547 = vadd.f32 %v3496, %v3546
        %v3548 = vpop.f32.mrb[0].mxu0
        %v3549 = vpop.f32.mrb[0].mxu0
        %v3550 = vadd.f32 %v3503, %v3549
        %v3551 = vpop.f32.mrb[0].mxu0
        %3552 = vdwg.mxu0
        %v3585 = vlaneseq
        %v3586 = vshrl.u32 %v3585, 7
        %v3587 = vsub.s32 %v3097, %v3586
        %v3588 = vrot.slane %v2874, %v3587
        %v3589 = vlaneseq
        %v3590 = vshrl.u32 %v3589, 7
        %v3591 = vsub.s32 %v3102, %v3590
        %v3592 = vrot.slane %v2877, %v3591
        %v3593 = vsel %vm3107, %v3592, %v3588
        %v3594 = vlaneseq
        %v3595 = vshrl.u32 %v3594, 7
        %v3596 = vsub.s32 %v3097, %v3595
        %v3597 = vrot.slane %v2880, %v3596
        %v3598 = vlaneseq
        %v3599 = vshrl.u32 %v3598, 7
        %v3600 = vsub.s32 %v3102, %v3599
        %v3601 = vrot.slane %v2883, %v3600
        %v3602 = vsel %vm3107, %v3601, %v3597
        %v3603 = vlaneseq
        %v3604 = vshrl.u32 %v3603, 7
        %v3605 = vsub.s32 %v3097, %v3604
        %v3606 = vrot.slane %v2886, %v3605
        %v3607 = vlaneseq
        %v3608 = vshrl.u32 %v3607, 7
        %v3609 = vsub.s32 %v3102, %v3608
        %v3610 = vrot.slane %v2889, %v3609
        %v3611 = vsel %vm3107, %v3610, %v3606
        %v3612 = vlaneseq
        %v3613 = vshrl.u32 %v3612, 7
        %v3614 = vsub.s32 %v3097, %v3613
        %v3615 = vrot.slane %v2892, %v3614
        %v3616 = vlaneseq
        %v3617 = vshrl.u32 %v3616, 7
        %v3618 = vsub.s32 %v3102, %v3617
        %v3619 = vrot.slane %v2895, %v3618
        %v3620 = vsel %vm3107, %v3619, %v3615
        %v3621 = vlaneseq
        %v3622 = vshrl.u32 %v3621, 7
        %v3623 = vsub.s32 %v3097, %v3622
        %v3624 = vrot.slane %v2898, %v3623
        %v3625 = vlaneseq
        %v3626 = vshrl.u32 %v3625, 7
        %v3627 = vsub.s32 %v3102, %v3626
        %v3628 = vrot.slane %v2901, %v3627
        %v3629 = vsel %vm3107, %v3628, %v3624
        %v3630 = vlaneseq
        %v3631 = vshrl.u32 %v3630, 7
        %v3632 = vsub.s32 %v3097, %v3631
        %v3633 = vrot.slane %v2904, %v3632
        %v3634 = vlaneseq
        %v3635 = vshrl.u32 %v3634, 7
        %v3636 = vsub.s32 %v3102, %v3635
        %v3637 = vrot.slane %v2907, %v3636
        %v3638 = vsel %vm3107, %v3637, %v3633
        %v3639 = vlaneseq
        %v3640 = vshrl.u32 %v3639, 7
        %v3641 = vsub.s32 %v3097, %v3640
        %v3642 = vrot.slane %v2910, %v3641
        %v3643 = vlaneseq
        %v3644 = vshrl.u32 %v3643, 7
        %v3645 = vsub.s32 %v3102, %v3644
        %v3646 = vrot.slane %v2913, %v3645
        %v3647 = vsel %vm3107, %v3646, %v3642
        %v3648 = vlaneseq
        %v3649 = vshrl.u32 %v3648, 7
        %v3650 = vsub.s32 %v3097, %v3649
        %v3651 = vrot.slane %v2916, %v3650
        %v3652 = vlaneseq
        %v3653 = vshrl.u32 %v3652, 7
        %v3654 = vsub.s32 %v3102, %v3653
        %v3655 = vrot.slane %v2919, %v3654
        %v3656 = vsel %vm3107, %v3655, %v3651
        %v3657 = vlaneseq
        %v3658 = vshrl.u32 %v3657, 7
        %v3659 = vsub.s32 %v3097, %v3658
        %v3660 = vrot.slane %v2922, %v3659
        %v3661 = vlaneseq
        %v3662 = vshrl.u32 %v3661, 7
        %v3663 = vsub.s32 %v3102, %v3662
        %v3664 = vrot.slane %v2925, %v3663
        %v3665 = vsel %vm3107, %v3664, %v3660
        %v3666 = vlaneseq
        %v3667 = vshrl.u32 %v3666, 7
        %v3668 = vsub.s32 %v3097, %v3667
        %v3669 = vrot.slane %v2928, %v3668
        %v3670 = vlaneseq
        %v3671 = vshrl.u32 %v3670, 7
        %v3672 = vsub.s32 %v3102, %v3671
        %v3673 = vrot.slane %v2931, %v3672
        %v3674 = vsel %vm3107, %v3673, %v3669
        %v3675 = vlaneseq
        %v3676 = vshrl.u32 %v3675, 7
        %v3677 = vsub.s32 %v3097, %v3676
        %v3678 = vrot.slane %v2934, %v3677
        %v3679 = vlaneseq
        %v3680 = vshrl.u32 %v3679, 7
        %v3681 = vsub.s32 %v3102, %v3680
        %v3682 = vrot.slane %v2937, %v3681
        %v3683 = vsel %vm3107, %v3682, %v3678
        %v3684 = vlaneseq
        %v3685 = vshrl.u32 %v3684, 7
        %v3686 = vsub.s32 %v3097, %v3685
        %v3687 = vrot.slane %v2940, %v3686
        %v3688 = vlaneseq
        %v3689 = vshrl.u32 %v3688, 7
        %v3690 = vsub.s32 %v3102, %v3689
        %v3691 = vrot.slane %v2943, %v3690
        %v3692 = vsel %vm3107, %v3691, %v3687
        %v3693 = vlaneseq
        %v3694 = vshrl.u32 %v3693, 7
        %v3695 = vsub.s32 %v3097, %v3694
        %v3696 = vrot.slane %v2946, %v3695
        %v3697 = vlaneseq
        %v3698 = vshrl.u32 %v3697, 7
        %v3699 = vsub.s32 %v3102, %v3698
        %v3700 = vrot.slane %v2949, %v3699
        %v3701 = vsel %vm3107, %v3700, %v3696
        %v3702 = vlaneseq
        %v3703 = vshrl.u32 %v3702, 7
        %v3704 = vsub.s32 %v3097, %v3703
        %v3705 = vrot.slane %v2952, %v3704
        %v3706 = vlaneseq
        %v3707 = vshrl.u32 %v3706, 7
        %v3708 = vsub.s32 %v3102, %v3707
        %v3709 = vrot.slane %v2955, %v3708
        %v3710 = vsel %vm3107, %v3709, %v3705
        %v3711 = vlaneseq
        %v3712 = vshrl.u32 %v3711, 7
        %v3713 = vsub.s32 %v3097, %v3712
        %v3714 = vrot.slane %v2958, %v3713
        %v3715 = vlaneseq
        %v3716 = vshrl.u32 %v3715, 7
        %v3717 = vsub.s32 %v3102, %v3716
        %v3718 = vrot.slane %v2961, %v3717
        %v3719 = vsel %vm3107, %v3718, %v3714
        %v3720 = vlaneseq
        %v3721 = vshrl.u32 %v3720, 7
        %v3722 = vsub.s32 %v3097, %v3721
        %v3723 = vrot.slane %v2964, %v3722
        %v3724 = vlaneseq
        %v3725 = vshrl.u32 %v3724, 7
        %v3726 = vsub.s32 %v3102, %v3725
        %v3727 = vrot.slane %v2967, %v3726
        %v3728 = vsel %vm3107, %v3727, %v3723
        %v3729 = vsel %vm3244, %v3602, %v3593
        %v3730 = vsel %vm3246, %v3611, %v3729
        %v3731 = vsel %vm3248, %v3620, %v3730
        %v3732 = vsel %vm3250, %v3629, %v3731
        %v3733 = vsel %vm3252, %v3638, %v3732
        %v3734 = vsel %vm3254, %v3647, %v3733
        %v3735 = vsel %vm3256, %v3656, %v3734
        %v3736 = vsel %vm3244, %v3674, %v3665
        %v3737 = vsel %vm3246, %v3683, %v3736
        %v3738 = vsel %vm3248, %v3692, %v3737
        %v3739 = vsel %vm3250, %v3701, %v3738
        %v3740 = vsel %vm3252, %v3710, %v3739
        %v3741 = vsel %vm3254, %v3719, %v3740
        %v3742 = vsel %vm3256, %v3728, %v3741
        %v3746 = vsel %vm2679, %v1565, 0
        %v3749 = vsel %vm2679, %v1569, 0
        %3751 = vmatprep.subr.bf16.mxu0 0
        %3752 = vmatpush1.bf16.xpose.msra.mxu0 %v3749
        %3753 = vmatprep.subr.bf16.mxu0 0
        %3754 = vmatpush1.bf16.xpose.msra.mxu0 0
        %3755 = vmatprep.subr.bf16.mxu0 0
        %3756 = vmatpush1.bf16.xpose.msra.mxu0 0
        %3757 = vmatprep.subr.bf16.mxu0 0
        %3758 = vmatpush1.bf16.xpose.msra.mxu0 0
        %3759 = vmatprep.subr.bf16.mxu0 0
        %3760 = vmatpush1.bf16.xpose.msra.mxu0 0
        %3761 = vmatprep.subr.bf16.mxu0 0
        %3762 = vmatpush1.bf16.xpose.msra.mxu0 0
        %3763 = vmatprep.subr.bf16.mxu0 0
        %3764 = vmatpush1.bf16.xpose.msra.mxu0 0
        %3765 = vmatprep.subr.bf16.mxu0 0
        %3766 = vmatpush1.bf16.xpose.msra.mxu0 0
        %3767 = vmatprep.subr.bf16.mxu0 0
        %3768 = vmatpush1.bf16.xpose.msra.mxu0 0
        %3769 = vmatprep.subr.bf16.mxu0 0
        %3770 = vmatpush1.bf16.xpose.msra.mxu0 0
        %3771 = vmatprep.subr.bf16.mxu0 0
        %3772 = vmatpush1.bf16.xpose.msra.mxu0 0
        %3773 = vmatprep.subr.bf16.mxu0 0
        %3774 = vmatpush1.bf16.xpose.msra.mxu0 0
        %3775 = vmatprep.subr.bf16.mxu0 0
        %3776 = vmatpush1.bf16.xpose.msra.mxu0 0
        %3777 = vmatprep.subr.bf16.mxu0 0
        %3778 = vmatpush1.bf16.xpose.msra.mxu0 0
        %3779 = vmatprep.subr.bf16.mxu0 0
        %3780 = vmatpush1.bf16.xpose.msra.mxu0 0
        %3781 = vmatprep.subr.bf16.mxu0 0
        %3782 = vmatpush1.bf16.xpose.msra.mxu0 0
        %3783 = vmatprep.mubr.bf16.mxu0 0
        %3784 = vmatmul.mubr.bf16.gmra.mrb[0].mxu0 %v3746
        %v3785 = vpop.f32.mrb[0].mxu0
        %v3786 = vadd.f32 %v3735, %v3785
        %v3787 = vpop.f32.mrb[0].mxu0
        %v3788 = vpop.f32.mrb[0].mxu0
        %v3789 = vadd.f32 %v3742, %v3788
        %v3790 = vpop.f32.mrb[0].mxu0
        %3791 = vdwg.mxu0
        %v3824 = vlaneseq
        %v3825 = vshrl.u32 %v3824, 7
        %v3826 = vsub.s32 %v3097, %v3825
        %v3827 = vrot.slane %v2970, %v3826
        %v3828 = vlaneseq
        %v3829 = vshrl.u32 %v3828, 7
        %v3830 = vsub.s32 %v3102, %v3829
        %v3831 = vrot.slane %v2973, %v3830
        %v3832 = vsel %vm3107, %v3831, %v3827
        %v3833 = vlaneseq
        %v3834 = vshrl.u32 %v3833, 7
        %v3835 = vsub.s32 %v3097, %v3834
        %v3836 = vrot.slane %v2976, %v3835
        %v3837 = vlaneseq
        %v3838 = vshrl.u32 %v3837, 7
        %v3839 = vsub.s32 %v3102, %v3838
        %v3840 = vrot.slane %v2979, %v3839
        %v3841 = vsel %vm3107, %v3840, %v3836
        %v3842 = vlaneseq
        %v3843 = vshrl.u32 %v3842, 7
        %v3844 = vsub.s32 %v3097, %v3843
        %v3845 = vrot.slane %v2982, %v3844
        %v3846 = vlaneseq
        %v3847 = vshrl.u32 %v3846, 7
        %v3848 = vsub.s32 %v3102, %v3847
        %v3849 = vrot.slane %v2985, %v3848
        %v3850 = vsel %vm3107, %v3849, %v3845
        %v3851 = vlaneseq
        %v3852 = vshrl.u32 %v3851, 7
        %v3853 = vsub.s32 %v3097, %v3852
        %v3854 = vrot.slane %v2988, %v3853
        %v3855 = vlaneseq
        %v3856 = vshrl.u32 %v3855, 7
        %v3857 = vsub.s32 %v3102, %v3856
        %v3858 = vrot.slane %v2991, %v3857
        %v3859 = vsel %vm3107, %v3858, %v3854
        %v3860 = vlaneseq
        %v3861 = vshrl.u32 %v3860, 7
        %v3862 = vsub.s32 %v3097, %v3861
        %v3863 = vrot.slane %v2994, %v3862
        %v3864 = vlaneseq
        %v3865 = vshrl.u32 %v3864, 7
        %v3866 = vsub.s32 %v3102, %v3865
        %v3867 = vrot.slane %v2997, %v3866
        %v3868 = vsel %vm3107, %v3867, %v3863
        %v3869 = vlaneseq
        %v3870 = vshrl.u32 %v3869, 7
        %v3871 = vsub.s32 %v3097, %v3870
        %v3872 = vrot.slane %v3000, %v3871
        %v3873 = vlaneseq
        %v3874 = vshrl.u32 %v3873, 7
        %v3875 = vsub.s32 %v3102, %v3874
        %v3876 = vrot.slane %v3003, %v3875
        %v3877 = vsel %vm3107, %v3876, %v3872
        %v3878 = vlaneseq
        %v3879 = vshrl.u32 %v3878, 7
        %v3880 = vsub.s32 %v3097, %v3879
        %v3881 = vrot.slane %v3006, %v3880
        %v3882 = vlaneseq
        %v3883 = vshrl.u32 %v3882, 7
        %v3884 = vsub.s32 %v3102, %v3883
        %v3885 = vrot.slane %v3009, %v3884
        %v3886 = vsel %vm3107, %v3885, %v3881
        %v3887 = vlaneseq
        %v3888 = vshrl.u32 %v3887, 7
        %v3889 = vsub.s32 %v3097, %v3888
        %v3890 = vrot.slane %v3012, %v3889
        %v3891 = vlaneseq
        %v3892 = vshrl.u32 %v3891, 7
        %v3893 = vsub.s32 %v3102, %v3892
        %v3894 = vrot.slane %v3015, %v3893
        %v3895 = vsel %vm3107, %v3894, %v3890
        %v3896 = vlaneseq
        %v3897 = vshrl.u32 %v3896, 7
        %v3898 = vsub.s32 %v3097, %v3897
        %v3899 = vrot.slane %v3018, %v3898
        %v3900 = vlaneseq
        %v3901 = vshrl.u32 %v3900, 7
        %v3902 = vsub.s32 %v3102, %v3901
        %v3903 = vrot.slane %v3021, %v3902
        %v3904 = vsel %vm3107, %v3903, %v3899
        %v3905 = vlaneseq
        %v3906 = vshrl.u32 %v3905, 7
        %v3907 = vsub.s32 %v3097, %v3906
        %v3908 = vrot.slane %v3024, %v3907
        %v3909 = vlaneseq
        %v3910 = vshrl.u32 %v3909, 7
        %v3911 = vsub.s32 %v3102, %v3910
        %v3912 = vrot.slane %v3027, %v3911
        %v3913 = vsel %vm3107, %v3912, %v3908
        %v3914 = vlaneseq
        %v3915 = vshrl.u32 %v3914, 7
        %v3916 = vsub.s32 %v3097, %v3915
        %v3917 = vrot.slane %v3030, %v3916
        %v3918 = vlaneseq
        %v3919 = vshrl.u32 %v3918, 7
        %v3920 = vsub.s32 %v3102, %v3919
        %v3921 = vrot.slane %v3033, %v3920
        %v3922 = vsel %vm3107, %v3921, %v3917
        %v3923 = vlaneseq
        %v3924 = vshrl.u32 %v3923, 7
        %v3925 = vsub.s32 %v3097, %v3924
        %v3926 = vrot.slane %v3036, %v3925
        %v3927 = vlaneseq
        %v3928 = vshrl.u32 %v3927, 7
        %v3929 = vsub.s32 %v3102, %v3928
        %v3930 = vrot.slane %v3039, %v3929
        %v3931 = vsel %vm3107, %v3930, %v3926
        %v3932 = vlaneseq
        %v3933 = vshrl.u32 %v3932, 7
        %v3934 = vsub.s32 %v3097, %v3933
        %v3935 = vrot.slane %v3042, %v3934
        %v3936 = vlaneseq
        %v3937 = vshrl.u32 %v3936, 7
        %v3938 = vsub.s32 %v3102, %v3937
        %v3939 = vrot.slane %v3045, %v3938
        %v3940 = vsel %vm3107, %v3939, %v3935
        %v3941 = vlaneseq
        %v3942 = vshrl.u32 %v3941, 7
        %v3943 = vsub.s32 %v3097, %v3942
        %v3944 = vrot.slane %v3048, %v3943
        %v3945 = vlaneseq
        %v3946 = vshrl.u32 %v3945, 7
        %v3947 = vsub.s32 %v3102, %v3946
        %v3948 = vrot.slane %v3051, %v3947
        %v3949 = vsel %vm3107, %v3948, %v3944
        %v3950 = vlaneseq
        %v3951 = vshrl.u32 %v3950, 7
        %v3952 = vsub.s32 %v3097, %v3951
        %v3953 = vrot.slane %v3054, %v3952
        %v3954 = vlaneseq
        %v3955 = vshrl.u32 %v3954, 7
        %v3956 = vsub.s32 %v3102, %v3955
        %v3957 = vrot.slane %v3057, %v3956
        %v3958 = vsel %vm3107, %v3957, %v3953
        %v3959 = vlaneseq
        %v3960 = vshrl.u32 %v3959, 7
        %v3961 = vsub.s32 %v3097, %v3960
        %v3962 = vrot.slane %v3060, %v3961
        %v3963 = vlaneseq
        %v3964 = vshrl.u32 %v3963, 7
        %v3965 = vsub.s32 %v3102, %v3964
        %v3966 = vrot.slane %v3063, %v3965
        %v3967 = vsel %vm3107, %v3966, %v3962
        %v3968 = vsel %vm3244, %v3841, %v3832
        %v3969 = vsel %vm3246, %v3850, %v3968
        %v3970 = vsel %vm3248, %v3859, %v3969
        %v3971 = vsel %vm3250, %v3868, %v3970
        %v3972 = vsel %vm3252, %v3877, %v3971
        %v3973 = vsel %vm3254, %v3886, %v3972
        %v3974 = vsel %vm3256, %v3895, %v3973
        %v3975 = vsel %vm3244, %v3913, %v3904
        %v3976 = vsel %vm3246, %v3922, %v3975
        %v3977 = vsel %vm3248, %v3931, %v3976
        %v3978 = vsel %vm3250, %v3940, %v3977
        %v3979 = vsel %vm3252, %v3949, %v3978
        %v3980 = vsel %vm3254, %v3958, %v3979
        %v3981 = vsel %vm3256, %v3967, %v3980
        %v3985 = vsel %vm2679, %v1566, 0
        %v3988 = vsel %vm2679, %v1570, 0
        %3990 = vmatprep.subr.bf16.mxu0 0
        %3991 = vmatpush1.bf16.xpose.msra.mxu0 %v3988
        %3992 = vmatprep.subr.bf16.mxu0 0
        %3993 = vmatpush1.bf16.xpose.msra.mxu0 0
        %3994 = vmatprep.subr.bf16.mxu0 0
        %3995 = vmatpush1.bf16.xpose.msra.mxu0 0
        %3996 = vmatprep.subr.bf16.mxu0 0
        %3997 = vmatpush1.bf16.xpose.msra.mxu0 0
        %3998 = vmatprep.subr.bf16.mxu0 0
        %3999 = vmatpush1.bf16.xpose.msra.mxu0 0
        %4000 = vmatprep.subr.bf16.mxu0 0
        %4001 = vmatpush1.bf16.xpose.msra.mxu0 0
        %4002 = vmatprep.subr.bf16.mxu0 0
        %4003 = vmatpush1.bf16.xpose.msra.mxu0 0
        %4004 = vmatprep.subr.bf16.mxu0 0
        %4005 = vmatpush1.bf16.xpose.msra.mxu0 0
        %4006 = vmatprep.subr.bf16.mxu0 0
        %4007 = vmatpush1.bf16.xpose.msra.mxu0 0
        %4008 = vmatprep.subr.bf16.mxu0 0
        %4009 = vmatpush1.bf16.xpose.msra.mxu0 0
        %4010 = vmatprep.subr.bf16.mxu0 0
        %4011 = vmatpush1.bf16.xpose.msra.mxu0 0
        %4012 = vmatprep.subr.bf16.mxu0 0
        %4013 = vmatpush1.bf16.xpose.msra.mxu0 0
        %4014 = vmatprep.subr.bf16.mxu0 0
        %4015 = vmatpush1.bf16.xpose.msra.mxu0 0
        %4016 = vmatprep.subr.bf16.mxu0 0
        %4017 = vmatpush1.bf16.xpose.msra.mxu0 0
        %4018 = vmatprep.subr.bf16.mxu0 0
        %4019 = vmatpush1.bf16.xpose.msra.mxu0 0
        %4020 = vmatprep.subr.bf16.mxu0 0
        %4021 = vmatpush1.bf16.xpose.msra.mxu0 0
        %4022 = vmatprep.mubr.bf16.mxu0 0
        %4023 = vmatmul.mubr.bf16.gmra.mrb[0].mxu0 %v3985
        %v4024 = vpop.f32.mrb[0].mxu0
        %v4025 = vadd.f32 %v3974, %v4024
        %v4026 = vpop.f32.mrb[0].mxu0
        %v4027 = vpop.f32.mrb[0].mxu0
        %v4028 = vadd.f32 %v3981, %v4027
        %v4029 = vpop.f32.mrb[0].mxu0
        %4030 = vdwg.mxu0
        %vm4031 = vcmask 130048
        %v4032 = vsel %vm4031, %v3308, -inf
        %4033 = vmax.xlane.f32.xlu0 %v4032
        %v4034 = vpop.xlane.xlu0 %4033
        %v4035 = vsel %vm4031, %v3311, -inf
        %4036 = vmax.xlane.f32.xlu0 %v4035
        %v4037 = vpop.xlane.xlu0 %4036
        %v4038 = vsel %vm4031, %v3547, -inf
        %4039 = vmax.xlane.f32.xlu0 %v4038
        %v4040 = vpop.xlane.xlu0 %4039
        %v4041 = vsel %vm4031, %v3550, -inf
        %4042 = vmax.xlane.f32.xlu0 %v4041
        %v4043 = vpop.xlane.xlu0 %4042
        %v4044 = vsel %vm4031, %v3786, -inf
        %4045 = vmax.xlane.f32.xlu0 %v4044
        %v4046 = vpop.xlane.xlu0 %4045
        %v4047 = vsel %vm4031, %v3789, -inf
        %4048 = vmax.xlane.f32.xlu0 %v4047
        %v4049 = vpop.xlane.xlu0 %4048
        %v4050 = vsel %vm4031, %v4025, -inf
        %4051 = vmax.xlane.f32.xlu0 %v4050
        %v4052 = vpop.xlane.xlu0 %4051
        %v4053 = vsel %vm4031, %v4028, -inf
        %4054 = vmax.xlane.f32.xlu0 %v4053
        %v4055 = vpop.xlane.xlu0 %4054
        %v4056 = vsub.f32 %v3308, %v4034
        %v4057 = vsub.f32 %v3311, %v4037
        %v4058 = vsub.f32 %v3547, %v4040
        %v4059 = vsub.f32 %v3550, %v4043
        %v4060 = vsub.f32 %v3786, %v4046
        %v4061 = vsub.f32 %v3789, %v4049
        %v4062 = vsub.f32 %v4025, %v4052
        %v4063 = vsub.f32 %v4028, %v4055
        %v4064 = vmul.f32 %v4056, 1.442695
        %v4065 = vpow.pop %v4064
        %v4066 = vmul.f32 %v4057, 1.442695
        %v4067 = vpow.pop %v4066
        %v4068 = vmul.f32 %v4058, 1.442695
        %v4069 = vpow.pop %v4068
        %v4070 = vmul.f32 %v4059, 1.442695
        %v4071 = vpow.pop %v4070
        %v4072 = vmul.f32 %v4060, 1.442695
        %v4073 = vpow.pop %v4072
        %v4074 = vmul.f32 %v4061, 1.442695
        %v4075 = vpow.pop %v4074
        %v4076 = vmul.f32 %v4062, 1.442695
        %v4077 = vpow.pop %v4076
        %v4078 = vmul.f32 %v4063, 1.442695
        %v4079 = vpow.pop %v4078
        %v4080 = vsel %vm4031, %v4065, 0.0
        %4081 = vadd.xlane.f32.xlu0 %v4080
        %v4082 = vpop.xlane.xlu0 %4081
        %v4083 = vsel %vm4031, %v4067, 0.0
        %4084 = vadd.xlane.f32.xlu0 %v4083
        %v4085 = vpop.xlane.xlu0 %4084
        %v4086 = vsel %vm4031, %v4069, 0.0
        %4087 = vadd.xlane.f32.xlu0 %v4086
        %v4088 = vpop.xlane.xlu0 %4087
        %v4089 = vsel %vm4031, %v4071, 0.0
        %4090 = vadd.xlane.f32.xlu0 %v4089
        %v4091 = vpop.xlane.xlu0 %4090
        %v4092 = vsel %vm4031, %v4073, 0.0
        %4093 = vadd.xlane.f32.xlu0 %v4092
        %v4094 = vpop.xlane.xlu0 %4093
        %v4095 = vsel %vm4031, %v4075, 0.0
        %4096 = vadd.xlane.f32.xlu0 %v4095
        %v4097 = vpop.xlane.xlu0 %4096
        %v4098 = vsel %vm4031, %v4077, 0.0
        %4099 = vadd.xlane.f32.xlu0 %v4098
        %v4100 = vpop.xlane.xlu0 %4099
        %v4101 = vsel %vm4031, %v4079, 0.0
        %4102 = vadd.xlane.f32.xlu0 %v4101
        %v4103 = vpop.xlane.xlu0 %4102
        %v4104 = vrcp.pop %v4082
        %v4105 = vrcp.pop %v4085
        %v4106 = vrcp.pop %v4088
        %v4107 = vrcp.pop %v4091
        %v4108 = vrcp.pop %v4094
        %v4109 = vrcp.pop %v4097
        %v4110 = vrcp.pop %v4100
        %v4111 = vrcp.pop %v4103
        %v4112 = vmul.f32 %v4065, %v4104
        %v4113 = vmul.f32 %v4067, %v4105
        %v4114 = vmul.f32 %v4069, %v4106
        %v4115 = vmul.f32 %v4071, %v4107
        %v4116 = vmul.f32 %v4073, %v4108
        %v4117 = vmul.f32 %v4075, %v4109
        %v4118 = vmul.f32 %v4077, %v4110
        %v4119 = vmul.f32 %v4079, %v4111
        %v4120 = vpack.c.bf16 %v4113, %v4112
        %v4121 = vpack.c.bf16 %v4115, %v4114
        %v4122 = vpack.c.bf16 %v4117, %v4116
        %v4123 = vpack.c.bf16 %v4119, %v4118
        %v4125 = vsel %vm4031, %v4120, 0
        %4127 = vmatprep.subr.bf16.mxu0 0
        %4128 = vmatpush1.bf16.msra.mxu0 %v1571
        %4129 = vmatprep.subr.bf16.mxu0 0
        %4130 = vmatpush1.bf16.msra.mxu0 0
        %4131 = vmatprep.subr.bf16.mxu0 0
        %4132 = vmatpush1.bf16.msra.mxu0 0
        %4133 = vmatprep.subr.bf16.mxu0 0
        %4134 = vmatpush1.bf16.msra.mxu0 0
        %4135 = vmatprep.subr.bf16.mxu0 0
        %4136 = vmatpush1.bf16.msra.mxu0 0
        %4137 = vmatprep.subr.bf16.mxu0 0
        %4138 = vmatpush1.bf16.msra.mxu0 0
        %4139 = vmatprep.subr.bf16.mxu0 0
        %4140 = vmatpush1.bf16.msra.mxu0 0
        %4141 = vmatprep.subr.bf16.mxu0 0
        %4142 = vmatpush1.bf16.msra.mxu0 0
        %4143 = vmatprep.subr.bf16.mxu0 0
        %4144 = vmatpush1.bf16.msra.mxu0 0
        %4145 = vmatprep.subr.bf16.mxu0 0
        %4146 = vmatpush1.bf16.msra.mxu0 0
        %4147 = vmatprep.subr.bf16.mxu0 0
        %4148 = vmatpush1.bf16.msra.mxu0 0
        %4149 = vmatprep.subr.bf16.mxu0 0
        %4150 = vmatpush1.bf16.msra.mxu0 0
        %4151 = vmatprep.subr.bf16.mxu0 0
        %4152 = vmatpush1.bf16.msra.mxu0 0
        %4153 = vmatprep.subr.bf16.mxu0 0
        %4154 = vmatpush1.bf16.msra.mxu0 0
        %4155 = vmatprep.subr.bf16.mxu0 0
        %4156 = vmatpush1.bf16.msra.mxu0 0
        %4157 = vmatprep.subr.bf16.mxu0 0
        %4158 = vmatpush1.bf16.msra.mxu0 0
        %4159 = vmatprep.mubr.bf16.mxu0 0
        %4160 = vmatmul.mubr.bf16.gmra.mrb[0].mxu0 %v4125
        %v4161 = vpop.f32.mrb[0].mxu0
        %v4162 = vadd.f32 0.0, %v4161
        %v4163 = vpop.f32.mrb[0].mxu0
        %v4164 = vpop.f32.mrb[0].mxu0
        %v4165 = vadd.f32 0.0, %v4164
        %v4166 = vpop.f32.mrb[0].mxu0
        %4167 = vdwg.mxu0
        %v4169 = vsel %vm4031, %v4121, 0
        %4171 = vmatprep.subr.bf16.mxu0 0
        %4172 = vmatpush1.bf16.msra.mxu0 %v1572
        %4173 = vmatprep.subr.bf16.mxu0 0
        %4174 = vmatpush1.bf16.msra.mxu0 0
        %4175 = vmatprep.subr.bf16.mxu0 0
        %4176 = vmatpush1.bf16.msra.mxu0 0
        %4177 = vmatprep.subr.bf16.mxu0 0
        %4178 = vmatpush1.bf16.msra.mxu0 0
        %4179 = vmatprep.subr.bf16.mxu0 0
        %4180 = vmatpush1.bf16.msra.mxu0 0
        %4181 = vmatprep.subr.bf16.mxu0 0
        %4182 = vmatpush1.bf16.msra.mxu0 0
        %4183 = vmatprep.subr.bf16.mxu0 0
        %4184 = vmatpush1.bf16.msra.mxu0 0
        %4185 = vmatprep.subr.bf16.mxu0 0
        %4186 = vmatpush1.bf16.msra.mxu0 0
        %4187 = vmatprep.subr.bf16.mxu0 0
        %4188 = vmatpush1.bf16.msra.mxu0 0
        %4189 = vmatprep.subr.bf16.mxu0 0
        %4190 = vmatpush1.bf16.msra.mxu0 0
        %4191 = vmatprep.subr.bf16.mxu0 0
        %4192 = vmatpush1.bf16.msra.mxu0 0
        %4193 = vmatprep.subr.bf16.mxu0 0
        %4194 = vmatpush1.bf16.msra.mxu0 0
        %4195 = vmatprep.subr.bf16.mxu0 0
        %4196 = vmatpush1.bf16.msra.mxu0 0
        %4197 = vmatprep.subr.bf16.mxu0 0
        %4198 = vmatpush1.bf16.msra.mxu0 0
        %4199 = vmatprep.subr.bf16.mxu0 0
        %4200 = vmatpush1.bf16.msra.mxu0 0
        %4201 = vmatprep.subr.bf16.mxu0 0
        %4202 = vmatpush1.bf16.msra.mxu0 0
        %4203 = vmatprep.mubr.bf16.mxu0 0
        %4204 = vmatmul.mubr.bf16.gmra.mrb[0].mxu0 %v4169
        %v4205 = vpop.f32.mrb[0].mxu0
        %v4206 = vadd.f32 0.0, %v4205
        %v4207 = vpop.f32.mrb[0].mxu0
        %v4208 = vpop.f32.mrb[0].mxu0
        %v4209 = vadd.f32 0.0, %v4208
        %v4210 = vpop.f32.mrb[0].mxu0
        %4211 = vdwg.mxu0
        %v4213 = vsel %vm4031, %v4122, 0
        %4215 = vmatprep.subr.bf16.mxu0 0
        %4216 = vmatpush1.bf16.msra.mxu0 %v1573
        %4217 = vmatprep.subr.bf16.mxu0 0
        %4218 = vmatpush1.bf16.msra.mxu0 0
        %4219 = vmatprep.subr.bf16.mxu0 0
        %4220 = vmatpush1.bf16.msra.mxu0 0
        %4221 = vmatprep.subr.bf16.mxu0 0
        %4222 = vmatpush1.bf16.msra.mxu0 0
        %4223 = vmatprep.subr.bf16.mxu0 0
        %4224 = vmatpush1.bf16.msra.mxu0 0
        %4225 = vmatprep.subr.bf16.mxu0 0
        %4226 = vmatpush1.bf16.msra.mxu0 0
        %4227 = vmatprep.subr.bf16.mxu0 0
        %4228 = vmatpush1.bf16.msra.mxu0 0
        %4229 = vmatprep.subr.bf16.mxu0 0
        %4230 = vmatpush1.bf16.msra.mxu0 0
        %4231 = vmatprep.subr.bf16.mxu0 0
        %4232 = vmatpush1.bf16.msra.mxu0 0
        %4233 = vmatprep.subr.bf16.mxu0 0
        %4234 = vmatpush1.bf16.msra.mxu0 0
        %4235 = vmatprep.subr.bf16.mxu0 0
        %4236 = vmatpush1.bf16.msra.mxu0 0
        %4237 = vmatprep.subr.bf16.mxu0 0
        %4238 = vmatpush1.bf16.msra.mxu0 0
        %4239 = vmatprep.subr.bf16.mxu0 0
        %4240 = vmatpush1.bf16.msra.mxu0 0
        %4241 = vmatprep.subr.bf16.mxu0 0
        %4242 = vmatpush1.bf16.msra.mxu0 0
        %4243 = vmatprep.subr.bf16.mxu0 0
        %4244 = vmatpush1.bf16.msra.mxu0 0
        %4245 = vmatprep.subr.bf16.mxu0 0
        %4246 = vmatpush1.bf16.msra.mxu0 0
        %4247 = vmatprep.mubr.bf16.mxu0 0
        %4248 = vmatmul.mubr.bf16.gmra.mrb[0].mxu0 %v4213
        %v4249 = vpop.f32.mrb[0].mxu0
        %v4250 = vadd.f32 0.0, %v4249
        %v4251 = vpop.f32.mrb[0].mxu0
        %v4252 = vpop.f32.mrb[0].mxu0
        %v4253 = vadd.f32 0.0, %v4252
        %v4254 = vpop.f32.mrb[0].mxu0
        %4255 = vdwg.mxu0
        %v4257 = vsel %vm4031, %v4123, 0
        %4259 = vmatprep.subr.bf16.mxu0 0
        %4260 = vmatpush1.bf16.msra.mxu0 %v1574
        %4261 = vmatprep.subr.bf16.mxu0 0
        %4262 = vmatpush1.bf16.msra.mxu0 0
        %4263 = vmatprep.subr.bf16.mxu0 0
        %4264 = vmatpush1.bf16.msra.mxu0 0
        %4265 = vmatprep.subr.bf16.mxu0 0
        %4266 = vmatpush1.bf16.msra.mxu0 0
        %4267 = vmatprep.subr.bf16.mxu0 0
        %4268 = vmatpush1.bf16.msra.mxu0 0
        %4269 = vmatprep.subr.bf16.mxu0 0
        %4270 = vmatpush1.bf16.msra.mxu0 0
        %4271 = vmatprep.subr.bf16.mxu0 0
        %4272 = vmatpush1.bf16.msra.mxu0 0
        %4273 = vmatprep.subr.bf16.mxu0 0
        %4274 = vmatpush1.bf16.msra.mxu0 0
        %4275 = vmatprep.subr.bf16.mxu0 0
        %4276 = vmatpush1.bf16.msra.mxu0 0
        %4277 = vmatprep.subr.bf16.mxu0 0
        %4278 = vmatpush1.bf16.msra.mxu0 0
        %4279 = vmatprep.subr.bf16.mxu0 0
        %4280 = vmatpush1.bf16.msra.mxu0 0
        %4281 = vmatprep.subr.bf16.mxu0 0
        %4282 = vmatpush1.bf16.msra.mxu0 0
        %4283 = vmatprep.subr.bf16.mxu0 0
        %4284 = vmatpush1.bf16.msra.mxu0 0
        %4285 = vmatprep.subr.bf16.mxu0 0
        %4286 = vmatpush1.bf16.msra.mxu0 0
        %4287 = vmatprep.subr.bf16.mxu0 0
        %4288 = vmatpush1.bf16.msra.mxu0 0
        %4289 = vmatprep.subr.bf16.mxu0 0
        %4290 = vmatpush1.bf16.msra.mxu0 0
        %4291 = vmatprep.mubr.bf16.mxu0 0
        %4292 = vmatmul.mubr.bf16.gmra.mrb[0].mxu0 %v4257
        %v4293 = vpop.f32.mrb[0].mxu0
        %v4294 = vadd.f32 0.0, %v4293
        %v4295 = vpop.f32.mrb[0].mxu0
        %v4296 = vpop.f32.mrb[0].mxu0
        %v4297 = vadd.f32 0.0, %v4296
        %v4298 = vpop.f32.mrb[0].mxu0
        %4299 = vdwg.mxu0
        %v4300 = vld [vmem:[#allocation2] sm:$0xff]
        %v4301 = vld [vmem:[#allocation2 + $0x8] sm:$0xff]
        %v4302 = vld [vmem:[#allocation2 + $0x10] sm:$0xff]
        %v4303 = vld [vmem:[#allocation2 + $0x18] sm:$0xff]
        %v4304 = vld [vmem:[#allocation2 + $0x20] sm:$0xff]
        %v4305 = vld [vmem:[#allocation2 + $0x28] sm:$0xff]
        %v4306 = vld [vmem:[#allocation2 + $0x30] sm:$0xff]
        %v4307 = vld [vmem:[#allocation2 + $0x38] sm:$0xff]
        %v4308 = vpack.c.bf16 %v4165, %v4162
        %v4309 = vpack.c.bf16 %v4209, %v4206
        %v4310 = vpack.c.bf16 %v4253, %v4250
        %v4311 = vpack.c.bf16 %v4297, %v4294
        %v4312 = vld [vmem:[%s780] sm:$0xf]
        %v4313 = vld [vmem:[%s780 + $0x4] sm:$0xf]
        %v4314 = vld [vmem:[%s780 + $0x8] sm:$0xf]
        %v4315 = vld [vmem:[%s780 + $0xc] sm:$0xf]
        %v4320 = vunpack.c.l.b16 %v4312
        %v4321 = vunpack.c.l.b16 %v4313
        %v4322 = vunpack.c.l.b16 %v4314
        %v4323 = vunpack.c.l.b16 %v4315
        %v4324 = vpack.c.b16 %v4321, %v4320
        %v4325 = vpack.c.b16 %v4323, %v4322
        %v4329 = vsel %vm2679, %v4308, 0
        %v4332 = vsel %vm2679, %v4309, 0
        %v4335 = vsel %vm2679, %v4310, 0
        %v4338 = vsel %vm2679, %v4311, 0
        %4340 = vmatprep.subr.bf16.mxu0 0
        %4341 = vmatpush1.bf16.msra.mxu0 %v4324
        %4342 = vmatprep.subr.bf16.mxu0 0
        %4343 = vmatpush1.bf16.msra.mxu0 %v4325
        %4344 = vmatprep.subr.bf16.mxu0 0
        %4345 = vmatpush1.bf16.msra.mxu0 0
        %4346 = vmatprep.subr.bf16.mxu0 0
        %4347 = vmatpush1.bf16.msra.mxu0 0
        %4348 = vmatprep.subr.bf16.mxu0 0
        %4349 = vmatpush1.bf16.msra.mxu0 0
        %4350 = vmatprep.subr.bf16.mxu0 0
        %4351 = vmatpush1.bf16.msra.mxu0 0
        %4352 = vmatprep.subr.bf16.mxu0 0
        %4353 = vmatpush1.bf16.msra.mxu0 0
        %4354 = vmatprep.subr.bf16.mxu0 0
        %4355 = vmatpush1.bf16.msra.mxu0 0
        %4356 = vmatprep.subr.bf16.mxu0 0
        %4357 = vmatpush1.bf16.msra.mxu0 0
        %4358 = vmatprep.subr.bf16.mxu0 0
        %4359 = vmatpush1.bf16.msra.mxu0 0
        %4360 = vmatprep.subr.bf16.mxu0 0
        %4361 = vmatpush1.bf16.msra.mxu0 0
        %4362 = vmatprep.subr.bf16.mxu0 0
        %4363 = vmatpush1.bf16.msra.mxu0 0
        %4364 = vmatprep.subr.bf16.mxu0 0
        %4365 = vmatpush1.bf16.msra.mxu0 0
        %4366 = vmatprep.subr.bf16.mxu0 0
        %4367 = vmatpush1.bf16.msra.mxu0 0
        %4368 = vmatprep.subr.bf16.mxu0 0
        %4369 = vmatpush1.bf16.msra.mxu0 0
        %4370 = vmatprep.subr.bf16.mxu0 0
        %4371 = vmatpush1.bf16.msra.mxu0 0
        %4372 = vmatprep.mubr.bf16.mxu0 0
        %4373 = vmatmul.mubr.bf16.gmra.mrb[0].mxu0 %v4329
        %v4374 = vpop.f32.mrb[0].mxu0
        %v4375 = vadd.f32 0.0, %v4374
        %v4376 = vpop.f32.mrb[0].mxu0
        %v4377 = vpop.f32.mrb[0].mxu0
        %v4378 = vadd.f32 0.0, %v4377
        %v4379 = vpop.f32.mrb[0].mxu0
        %4380 = vmatprep.mubr.bf16.mxu0 0
        %4381 = vmatmul.mubr.bf16.gmra.mrb[0].mxu0 %v4332
        %v4382 = vpop.f32.mrb[0].mxu0
        %v4383 = vadd.f32 0.0, %v4382
        %v4384 = vpop.f32.mrb[0].mxu0
        %v4385 = vpop.f32.mrb[0].mxu0
        %v4386 = vadd.f32 0.0, %v4385
        %v4387 = vpop.f32.mrb[0].mxu0
        %4388 = vmatprep.mubr.bf16.mxu0 0
        %4389 = vmatmul.mubr.bf16.gmra.mrb[0].mxu0 %v4335
        %v4390 = vpop.f32.mrb[0].mxu0
        %v4391 = vadd.f32 0.0, %v4390
        %v4392 = vpop.f32.mrb[0].mxu0
        %v4393 = vpop.f32.mrb[0].mxu0
        %v4394 = vadd.f32 0.0, %v4393
        %v4395 = vpop.f32.mrb[0].mxu0
        %4396 = vmatprep.mubr.bf16.mxu0 0
        %4397 = vmatmul.mubr.bf16.gmra.mrb[0].mxu0 %v4338
        %v4398 = vpop.f32.mrb[0].mxu0
        %v4399 = vadd.f32 0.0, %v4398
        %v4400 = vpop.f32.mrb[0].mxu0
        %v4401 = vpop.f32.mrb[0].mxu0
        %v4402 = vadd.f32 0.0, %v4401
        %v4403 = vpop.f32.mrb[0].mxu0
        %4404 = vdwg.mxu0
        %v4405 = vadd.f32 %v4300, %v4375
        %v4406 = vadd.f32 %v4301, %v4378
        %v4407 = vadd.f32 %v4302, %v4383
        %v4408 = vadd.f32 %v4303, %v4386
        %v4409 = vadd.f32 %v4304, %v4391
        %v4410 = vadd.f32 %v4305, %v4394
        %v4411 = vadd.f32 %v4306, %v4399
        %v4412 = vadd.f32 %v4307, %v4402
        %4413 = vst [vmem:[#allocation2] sm:$0xff] %v4405
        %4414 = vst [vmem:[#allocation2 + $0x8] sm:$0xff] %v4406
        %4415 = vst [vmem:[#allocation2 + $0x10] sm:$0xff] %v4407
        %4416 = vst [vmem:[#allocation2 + $0x18] sm:$0xff] %v4408
        %4417 = vst [vmem:[#allocation2 + $0x20] sm:$0xff] %v4409
        %4418 = vst [vmem:[#allocation2 + $0x28] sm:$0xff] %v4410
        %4419 = vst [vmem:[#allocation2 + $0x30] sm:$0xff] %v4411
        %4420 = vst [vmem:[#allocation2 + $0x38] sm:$0xff] %v4412
        %p4421 = scmp.eq.s32.totalorder %s49, 3
        // Predicated region
        $region121: #{tpu_custom_call.1} parent=75 // pred_check
          %p4422 = pneg %p4421
        $region122: #{tpu_custom_call.1} parent=75 // pred_check_branch
          %4424 = sbr.rel (%p4422) target = $region124
        $region123: #{tpu_custom_call.1} parent=75 // pred_region
          %v4425 = vld [vmem:[#allocation2] sm:$0xff]
          %v4426 = vld [vmem:[#allocation2 + $0x8] sm:$0xff]
          %v4427 = vld [vmem:[#allocation2 + $0x10] sm:$0xff]
          %v4428 = vld [vmem:[#allocation2 + $0x18] sm:$0xff]
          %v4429 = vld [vmem:[#allocation2 + $0x20] sm:$0xff]
          %v4430 = vld [vmem:[#allocation2 + $0x28] sm:$0xff]
          %v4431 = vld [vmem:[#allocation2 + $0x30] sm:$0xff]
          %v4432 = vld [vmem:[#allocation2 + $0x38] sm:$0xff]
          %v4433 = vld [vmem:[#allocation18] sm:$0x1]
          %v4435 = vlaneseq
          %v4436 = vshrl.u32 %v4435, 7
          %v4437 = vsub.s32 0, %v4436
          %v4438 = vrot.slane %v4433, %v4437
          %v4440 = vadd.f32 %v4425, %v4438
          %v4441 = vadd.f32 %v4426, %v4438
          %v4442 = vadd.f32 %v4427, %v4438
          %v4443 = vadd.f32 %v4428, %v4438
          %v4444 = vadd.f32 %v4429, %v4438
          %v4445 = vadd.f32 %v4430, %v4438
          %v4446 = vadd.f32 %v4431, %v4438
          %v4447 = vadd.f32 %v4432, %v4438
          %4448 = vst [vmem:[%s884] sm:$0xff] %v4440
          %4449 = vst [vmem:[%s884 + $0x8] sm:$0xff] %v4441
          %4450 = vst [vmem:[%s884 + $0x10] sm:$0xff] %v4442
          %4451 = vst [vmem:[%s884 + $0x18] sm:$0xff] %v4443
          %4452 = vst [vmem:[%s884 + $0x20] sm:$0xff] %v4444
          %4453 = vst [vmem:[%s884 + $0x28] sm:$0xff] %v4445
          %4454 = vst [vmem:[%s884 + $0x30] sm:$0xff] %v4446
          %4455 = vst [vmem:[%s884 + $0x38] sm:$0xff] %v4447
        $region124: #{tpu_custom_call.1} parent=75 // pred_fallthru
          _
        %s4456 = sand.u32 %s425, 1
        %s4457 = scalar_lea.sflag [#allocation5], %s4456
        %s4458 = sand.u32 %s425, 1
        %s4459 = smul.addr %s4458, 64
        %s4460 = scalar_lea.vmem [#allocation20], %s4459
        // Predicated region
        $region125: #{tpu_custom_call.1} parent=75 // pred_check
          %p4461 = pneg %p435
        $region126: #{tpu_custom_call.1} parent=75 // pred_check_branch
          %4463 = sbr.rel (%p4461) target = $region128
        $region127: #{tpu_custom_call.1} parent=75 // pred_region
          %s4464 = smul.u32 8, %s48
          %s4466 = ssub.s32 1024, 1024
          %4467 = vsyncadd %s4457, %s4466
          %s4468 = smul.addr %s4464, 128
          %s4469 = scalar_lea.hbm %s14, %s4468
          %s4470 = sshll.u32 %s4460, 4
          %s4471 = int_to_ptr.vmem [resolvable:$true] %s4470
          %4476 = dma.vmem_to_hbm [thread:$0]  %s4471, 1024, %s4469, %s4457, 128, 128, 8
        $region128: #{tpu_custom_call.1} parent=75 // pred_fallthru
          _
      $region76: #{tpu_custom_call.1} parent=5 // pred_fallthru
        _
      %p4477 = scmp.le.s32.totalorder 2, %s39
      // Predicated region
      $region129: #{tpu_custom_call.1} parent=5 // pred_check
        %p4478 = pneg %p4477
      $region130: #{tpu_custom_call.1} parent=5 // pred_check_branch
        %4480 = sbr.rel (%p4478) target = $region132
      $region131: #{tpu_custom_call.1} parent=5 // pred_region
        %s4481 = ssub.s32 %s39, 2
        // Predicated region
        $region133: #{tpu_custom_call.1} parent=131 // pred_check
          %p4482 = pneg %p441
        $region134: #{tpu_custom_call.1} parent=131 // pred_check_branch
          %4484 = sbr.rel (%p4482) target = $region136
        $region135: #{tpu_custom_call.1} parent=131 // pred_region
          %s4485 = sand.u32 %s426, 1
          %s4486 = scalar_lea.sflag [#allocation5], %s4485
          %s4487 = sand.u32 %s426, 1
          %s4488 = smul.addr %s4487, 64
          %s4489 = scalar_lea.vmem [#allocation20], %s4488
          %4490 = dma.done %s4486, 1024
        $region136: #{tpu_custom_call.1} parent=131 // pred_fallthru
          _
      $region132: #{tpu_custom_call.1} parent=5 // pred_fallthru
        _
    $region6: #{tpu_custom_call.1} parent=1 // loop_footer
      %s43 = sadd.s32 1, %s39
    $region7: #{tpu_custom_call.1} parent=1 // loop_footer_branch
      %38 = sbr.rel target = $region3
    $region8: #{tpu_custom_call.1} parent=1 // loop_exit
      _
    %4491 = vsyncpa [#allocation4], 1
    %s4492 = scalar_lea.sflag [#allocation4], 1
    %4493 = vsyncpa %s4492, 1
    %4494 = vsyncpa [#allocation7], 1
    %s4495 = scalar_lea.sflag [#allocation7], 1
    %4496 = vsyncpa %s4495, 1
    %4497 = vsyncpa [#allocation10], 1
    %s4498 = scalar_lea.sflag [#allocation10], 1
    %4499 = vsyncpa %s4498, 1
    %4500 = vsyncpa [#allocation13], 1
    %s4501 = scalar_lea.sflag [#allocation13], 1
    %4502 = vsyncpa %s4501, 1
    %4503 = vsyncpa [#allocation16], 1
    %s4504 = scalar_lea.sflag [#allocation16], 1
    %4505 = vsyncpa %s4504, 1
    %4506 = vsyncpa [#allocation19], 1
    %4507 = vsyncpa [#allocation5], 1
    %s4508 = scalar_lea.sflag [#allocation5], 1
    %4509 = vsyncpa %s4508, 1

</llo_original>
